<compile_context>
chip_gen: v6e
topology: v6e:2x2x1
jax: 0.10.0
libtpu: 0.0.40
codegen_flags: <defaults>
</compile_context>

<pallas_src>
import jax
import jax.numpy as jnp
from jax.experimental import pallas as pl
from jax.experimental.pallas import tpu as pltpu

# ----------------------------- configuration --------------------------------
B = 2            # batch
C = 3            # image channels
IMG = 16         # image height/width
PATCH = 4        # patch size
EMBED = 32       # embed_dim
HEADS = 4        # attention heads
DEPTH = 2        # transformer depth
MLP_RATIO = 4.0
N_CLASSES = 8
NUM_CLS = 1
HEAD_DIM = EMBED // HEADS
HIDDEN = int(EMBED * MLP_RATIO)          # 128 -> lane-dense hidden matmuls
N_PATCH = (IMG // PATCH) ** 2
SEQ = N_PATCH + NUM_CLS                  # 17
S_PAD = ((SEQ + 7) // 8) * 8             # 24  (sublane-aligned)
CLS_PAD = 128                            # lane-dense classifier output
EPS = 1e-5
PIX = C * PATCH * PATCH                  # 48


# ------------------------------ kernel helpers -------------------------------
def _layernorm(x, g, b, eps=EPS):
    mu = jnp.mean(x, axis=-1, keepdims=True)
    var = jnp.mean(jnp.square(x - mu), axis=-1, keepdims=True)
    return (x - mu) * jax.lax.rsqrt(var + eps) * g + b


def _full_spec(arr):
    # full-array block, single grid step
    nd = arr.ndim
    return pl.BlockSpec(arr.shape, lambda i, _n=nd: (0,) * _n)


# ------------------------------ fused kernel ---------------------------------
def _fused_kernel(pix_ref, base_ref, bias_ref, hm_ref, pw_ref,
                  ln1g_ref, ln1b_ref, wq_ref, bq_ref, wk_ref, bk_ref,
                  wv_ref, bv_ref, wo_ref, bo_ref, ls1_ref,
                  ln2g_ref, ln2b_ref, w1_ref, b1_ref, w2_ref, b2_ref, ls2_ref,
                  ng_ref, nb_ref, hw1_ref, hb1_ref, hw2_ref, hb2_ref,
                  wc_ref, bc_ref, o_ref):
    f32 = jnp.float32
    bf16 = jnp.bfloat16
    sb = pix_ref.shape[0]                     # B * S_PAD rows in the slab
    hm = hm_ref[...]                          # (HEADS, D) per-head column masks
    bias_all = bias_ref[...]                  # (HEADS*sb, sb) additive attn bias

    # --- patch embedding; cls / pos / patch-bias are folded into base slab ---
    x = jnp.dot(pix_ref[...], pw_ref[...],
                preferred_element_type=f32) + base_ref[...]          # (sb, D)

    scale = f32(1.0 / (HEAD_DIM ** 0.5))

    # --- transformer blocks, unrolled (eval mode: no drop-path, no tome) ---
    for d in range(DEPTH):
        # ---------------- multi-head self-attention branch ----------------
        h = _layernorm(x, ln1g_ref[d], ln1b_ref[d])
        hb = h.astype(bf16)
        q = jnp.dot(hb, wq_ref[d], preferred_element_type=f32) + bq_ref[d]
        k = jnp.dot(hb, wk_ref[d], preferred_element_type=f32) + bk_ref[d]
        v = jnp.dot(hb, wv_ref[d], preferred_element_type=f32) + bv_ref[d]
        q = q * scale

        # column-masked queries stacked along sublanes -> one score matmul for
        # all heads.  (q*m_h has zeros outside head h's columns, so contracting
        # against un-masked k yields exactly head h's scores.)
        q_all = jnp.concatenate([q * hm[hh:hh + 1, :] for hh in range(HEADS)],
                                axis=0)                              # (H*sb, D)
        s_all = jax.lax.dot_general(q_all.astype(bf16), k.astype(bf16),
                                    (((1,), (1,)), ((), ())),
                                    preferred_element_type=f32)      # (H*sb, sb)
        s_all = s_all + bias_all                 # block-diag + key-pad masking

        # one batched softmax for all heads; reciprocal on the EUP
        s_max = jnp.max(s_all, axis=-1, keepdims=True)
        p = jnp.exp(s_all - s_max)
        p = p * pl.reciprocal(jnp.sum(p, axis=-1, keepdims=True), approx=True)

        # one PV matmul for all heads, then select each head's output columns
        o_all = jnp.dot(p.astype(bf16), v.astype(bf16),
                        preferred_element_type=f32)                  # (H*sb, D)
        attn = o_all[0:sb] * hm[0:1, :]
        for hh in range(1, HEADS):
            attn = attn + o_all[hh * sb:(hh + 1) * sb] * hm[hh:hh + 1, :]

        attn = jnp.dot(attn.astype(bf16), wo_ref[d],
                       preferred_element_type=f32) + bo_ref[d]
        x = x + ls1_ref[d] * attn                # layer-scale residual (ls1)

        # ---------------------------- MLP branch ----------------------------
        h2 = _layernorm(x, ln2g_ref[d], ln2b_ref[d])
        f = jnp.dot(h2.astype(bf16), w1_ref[d],
                    preferred_element_type=f32) + b1_ref[d]          # (sb, HIDDEN)
        f = jax.nn.gelu(f, approximate=True)
        f = jnp.dot(f.astype(bf16), w2_ref[d],
                    preferred_element_type=f32) + b2_ref[d]
        x = x + ls2_ref[d] * f                   # layer-scale residual (ls2)

    # --- final LayerNorm -> head MLP -> classifier (lane-padded to 128) ---
    h = _layernorm(x, ng_ref[...], nb_ref[...])
    f = jnp.dot(h.astype(bf16), hw1_ref[...],
                preferred_element_type=f32) + hb1_ref[...]
    f = jax.nn.gelu(f, approximate=True)
    f = jnp.dot(f.astype(bf16), hw2_ref[...],
                preferred_element_type=f32) + hb2_ref[...]
    logits = jnp.dot(f.astype(bf16), wc_ref[...],
                     preferred_element_type=f32) + bc_ref[...]       # (sb, 128)
    o_ref[...] = logits.astype(o_ref.dtype)


# ------------------------------ model forward --------------------------------
def dpx_dense_forward(img, params):
    Bn = img.shape[0]
    sb = Bn * S_PAD
    bw = lambda a: a.astype(jnp.bfloat16)

    # ------- layout plumbing in XLA (tiny, once per call); compute is in-kernel
    p = PATCH
    patches = img.reshape(Bn, C, IMG // p, p, IMG // p, p)
    patches = patches.transpose(0, 2, 4, 1, 3, 5).reshape(Bn, N_PATCH, PIX)
    # patch-pixel rows placed into the padded (B*S_PAD, PIX) slab (cls/pad rows = 0)
    pix = jnp.zeros((Bn, S_PAD, PIX), jnp.float32)
    pix = pix.at[:, NUM_CLS:NUM_CLS + N_PATCH, :].set(patches)
    pix_slab = bw(pix.reshape(sb, PIX))

    # additive base slab: cls token on cls rows, pos + patch bias on token rows
    base = jnp.zeros((S_PAD, EMBED), jnp.float32)
    base = base.at[:NUM_CLS].set(params["cls"])
    base = base.at[NUM_CLS:NUM_CLS + N_PATCH].set(
        params["pos"] + params["patch_b"][None, :])
    base_slab = jnp.tile(base, (Bn, 1))                              # (sb, D)

    # block-diagonal (per-image) + key-padding additive attention bias
    row = jnp.arange(sb)
    same_img = (row[:, None] // S_PAD) == (row[None, :] // S_PAD)
    valid_key = (row[None, :] % S_PAD) < SEQ
    bias = jnp.where(same_img & valid_key, 0.0, -1e30).astype(jnp.float32)
    bias_all = jnp.tile(bias, (HEADS, 1))                            # (H*sb, sb)

    # per-head column masks over the embed dim
    col = jnp.arange(EMBED) // HEAD_DIM
    hmask = (col[None, :] == jnp.arange(HEADS)[:, None]).astype(jnp.float32)

    # classifier padded to a lane-dense 128-wide output
    wc_pad = jnp.zeros((EMBED, CLS_PAD), jnp.float32).at[:, :N_CLASSES].set(params["wc"])
    bc_pad = jnp.zeros((1, CLS_PAD), jnp.float32).at[:, :N_CLASSES].set(params["bc"])

    blk = params["blocks"]
    args = (pix_slab, base_slab, bias_all, hmask,
            bw(params["patch_w"]),
            blk["ln1_g"], blk["ln1_b"],
            bw(blk["wq"]), blk["bq"], bw(blk["wk"]), blk["bk"],
            bw(blk["wv"]), blk["bv"], bw(blk["wo"]), blk["bo"], blk["ls1"],
            blk["ln2_g"], blk["ln2_b"],
            bw(blk["w1"]), blk["b1"], bw(blk["w2"]), blk["b2"], blk["ls2"],
            params["norm_g"], params["norm_b"],
            bw(params["hw1"]), params["hb1"], bw(params["hw2"]), params["hb2"],
            bw(wc_pad), bc_pad)

    out = pl.pallas_call(
        _fused_kernel,
        out_shape=jax.ShapeDtypeStruct((sb, CLS_PAD), jnp.float32),
        grid=(1,),
        in_specs=[_full_spec(a) for a in args],
        out_specs=pl.BlockSpec((sb, CLS_PAD), lambda i: (0, 0)),
        compiler_params=pltpu.CompilerParams(dimension_semantics=("arbitrary",)),
    )(*args)

    logits = out.reshape(Bn, S_PAD, CLS_PAD)[:, :SEQ, :N_CLASSES]
    # TODO(synk): seg semantics of the (missing) DPX tokenizer approximated as
    #             patch index, cls tokens = -1; amask all-valid at inference.
    seg = jnp.broadcast_to(jnp.arange(SEQ, dtype=jnp.int32)[None] - NUM_CLS,
                           (Bn, SEQ))
    amask = jnp.ones((Bn, SEQ), dtype=bool)
    return logits, seg, amask


# ------------------------------- parameters ----------------------------------
def init_params(key):
    keys = iter(jax.random.split(key, 64))

    def nrm(shape, scale=0.02):
        return (scale * jax.random.normal(next(keys), shape)).astype(jnp.float32)

    params = {
        "patch_w": nrm((PIX, EMBED)),
        "patch_b": jnp.zeros((EMBED,), jnp.float32),
        "pos": nrm((N_PATCH, EMBED)),
        "cls": nrm((NUM_CLS, EMBED)),
    }

    # per-block parameters stacked along a leading depth axis (one VMEM ref each)
    params["blocks"] = {
        "ln1_g": jnp.ones((DEPTH, 1, EMBED), jnp.float32),
        "ln1_b": jnp.zeros((DEPTH, 1, EMBED), jnp.float32),
        "wq": nrm((DEPTH, EMBED, EMBED)), "bq": jnp.zeros((DEPTH, 1, EMBED), jnp.float32),
        "wk": nrm((DEPTH, EMBED, EMBED)), "bk": jnp.zeros((DEPTH, 1, EMBED), jnp.float32),
        "wv": nrm((DEPTH, EMBED, EMBED)), "bv": jnp.zeros((DEPTH, 1, EMBED), jnp.float32),
        "wo": nrm((DEPTH, EMBED, EMBED)), "bo": jnp.zeros((DEPTH, 1, EMBED), jnp.float32),
        "ls1": jnp.full((DEPTH, 1, EMBED), 0.1, jnp.float32),   # init_scale = 0.1
        "ln2_g": jnp.ones((DEPTH, 1, EMBED), jnp.float32),
        "ln2_b": jnp.zeros((DEPTH, 1, EMBED), jnp.float32),
        "w1": nrm((DEPTH, EMBED, HIDDEN)), "b1": jnp.zeros((DEPTH, 1, HIDDEN), jnp.float32),
        "w2": nrm((DEPTH, HIDDEN, EMBED)), "b2": jnp.zeros((DEPTH, 1, EMBED), jnp.float32),
        "ls2": jnp.full((DEPTH, 1, EMBED), 0.1, jnp.float32),
    }

    # final norm + head (MLP(EMBED -> 4*EMBED -> EMBED) + Linear(EMBED -> N_CLASSES))
    params["norm_g"] = jnp.ones((1, EMBED), jnp.float32)
    params["norm_b"] = jnp.zeros((1, EMBED), jnp.float32)
    params["hw1"] = nrm((EMBED, HIDDEN))
    params["hb1"] = jnp.zeros((1, HIDDEN), jnp.float32)
    params["hw2"] = nrm((HIDDEN, EMBED))
    params["hb2"] = jnp.zeros((1, EMBED), jnp.float32)
    params["wc"] = nrm((EMBED, N_CLASSES))
    params["bc"] = jnp.zeros((1, N_CLASSES), jnp.float32)
    return params


# ---------------------------------- main --------------------------------------
if __name__ == "__main__":
    key = jax.random.PRNGKey(0)
    pkey, xkey = jax.random.split(key)
    params = init_params(pkey)
    img = jax.random.normal(xkey, (B, C, IMG, IMG), dtype=jnp.float32)

    logits, seg, amask = jax.jit(dpx_dense_forward)(img, params)
    jax.block_until_ready(logits)

    assert logits.shape == (B, SEQ, N_CLASSES)
    assert seg.shape == (B, SEQ) and amask.shape == (B, SEQ)
    assert bool(jnp.all(jnp.isfinite(logits)))
    print("KERNEL_OK")
</pallas_src>

<mosaic_0001>
module attributes {stable_mosaic.version = 11 : i64} {
  func.func @_fused_kernel(%arg0: i32, %arg1: memref<48x48xbf16, #tpu.memory_space<vmem>>, %arg2: memref<48x32xf32, #tpu.memory_space<vmem>>, %arg3: memref<192x48xf32, #tpu.memory_space<vmem>>, %arg4: memref<4x32xf32, #tpu.memory_space<vmem>>, %arg5: memref<48x32xbf16, #tpu.memory_space<vmem>>, %arg6: memref<2x1x32xf32, #tpu.memory_space<vmem>>, %arg7: memref<2x1x32xf32, #tpu.memory_space<vmem>>, %arg8: memref<2x32x32xbf16, #tpu.memory_space<vmem>>, %arg9: memref<2x1x32xf32, #tpu.memory_space<vmem>>, %arg10: memref<2x32x32xbf16, #tpu.memory_space<vmem>>, %arg11: memref<2x1x32xf32, #tpu.memory_space<vmem>>, %arg12: memref<2x32x32xbf16, #tpu.memory_space<vmem>>, %arg13: memref<2x1x32xf32, #tpu.memory_space<vmem>>, %arg14: memref<2x32x32xbf16, #tpu.memory_space<vmem>>, %arg15: memref<2x1x32xf32, #tpu.memory_space<vmem>>, %arg16: memref<2x1x32xf32, #tpu.memory_space<vmem>>, %arg17: memref<2x1x32xf32, #tpu.memory_space<vmem>>, %arg18: memref<2x1x32xf32, #tpu.memory_space<vmem>>, %arg19: memref<2x32x128xbf16, #tpu.memory_space<vmem>>, %arg20: memref<2x1x128xf32, #tpu.memory_space<vmem>>, %arg21: memref<2x128x32xbf16, #tpu.memory_space<vmem>>, %arg22: memref<2x1x32xf32, #tpu.memory_space<vmem>>, %arg23: memref<2x1x32xf32, #tpu.memory_space<vmem>>, %arg24: memref<1x32xf32, #tpu.memory_space<vmem>>, %arg25: memref<1x32xf32, #tpu.memory_space<vmem>>, %arg26: memref<32x128xbf16, #tpu.memory_space<vmem>>, %arg27: memref<1x128xf32, #tpu.memory_space<vmem>>, %arg28: memref<128x32xbf16, #tpu.memory_space<vmem>>, %arg29: memref<1x32xf32, #tpu.memory_space<vmem>>, %arg30: memref<32x128xbf16, #tpu.memory_space<vmem>>, %arg31: memref<1x128xf32, #tpu.memory_space<vmem>>, %arg32: memref<48x128xf32, #tpu.memory_space<vmem>>) attributes {dimension_semantics = [#tpu.dimension_semantics<arbitrary>], iteration_bounds = array<i64: 1>, scalar_prefetch = 0 : i64, scratch_operands = 0 : i64, tpu.core_type = #tpu.core_type<tc>, window_params = [{pipeline_mode = #tpu.pipeline_mode<synchronous>, transform_indices = @transform_0, window_bounds = array<i64: 48, 48>}, {pipeline_mode = #tpu.pipeline_mode<synchronous>, transform_indices = @transform_1, window_bounds = array<i64: 48, 32>}, {pipeline_mode = #tpu.pipeline_mode<synchronous>, transform_indices = @transform_2, window_bounds = array<i64: 192, 48>}, {pipeline_mode = #tpu.pipeline_mode<synchronous>, transform_indices = @transform_3, window_bounds = array<i64: 4, 32>}, {pipeline_mode = #tpu.pipeline_mode<synchronous>, transform_indices = @transform_4, window_bounds = array<i64: 48, 32>}, {pipeline_mode = #tpu.pipeline_mode<synchronous>, transform_indices = @transform_5, window_bounds = array<i64: 2, 1, 32>}, {pipeline_mode = #tpu.pipeline_mode<synchronous>, transform_indices = @transform_6, window_bounds = array<i64: 2, 1, 32>}, {pipeline_mode = #tpu.pipeline_mode<synchronous>, transform_indices = @transform_7, window_bounds = array<i64: 2, 32, 32>}, {pipeline_mode = #tpu.pipeline_mode<synchronous>, transform_indices = @transform_8, window_bounds = array<i64: 2, 1, 32>}, {pipeline_mode = #tpu.pipeline_mode<synchronous>, transform_indices = @transform_9, window_bounds = array<i64: 2, 32, 32>}, {pipeline_mode = #tpu.pipeline_mode<synchronous>, transform_indices = @transform_10, window_bounds = array<i64: 2, 1, 32>}, {pipeline_mode = #tpu.pipeline_mode<synchronous>, transform_indices = @transform_11, window_bounds = array<i64: 2, 32, 32>}, {pipeline_mode = #tpu.pipeline_mode<synchronous>, transform_indices = @transform_12, window_bounds = array<i64: 2, 1, 32>}, {pipeline_mode = #tpu.pipeline_mode<synchronous>, transform_indices = @transform_13, window_bounds = array<i64: 2, 32, 32>}, {pipeline_mode = #tpu.pipeline_mode<synchronous>, transform_indices = @transform_14, window_bounds = array<i64: 2, 1, 32>}, {pipeline_mode = #tpu.pipeline_mode<synchronous>, transform_indices = @transform_15, window_bounds = array<i64: 2, 1, 32>}, {pipeline_mode = #tpu.pipeline_mode<synchronous>, transform_indices = @transform_16, window_bounds = array<i64: 2, 1, 32>}, {pipeline_mode = #tpu.pipeline_mode<synchronous>, transform_indices = @transform_17, window_bounds = array<i64: 2, 1, 32>}, {pipeline_mode = #tpu.pipeline_mode<synchronous>, transform_indices = @transform_18, window_bounds = array<i64: 2, 32, 128>}, {pipeline_mode = #tpu.pipeline_mode<synchronous>, transform_indices = @transform_19, window_bounds = array<i64: 2, 1, 128>}, {pipeline_mode = #tpu.pipeline_mode<synchronous>, transform_indices = @transform_20, window_bounds = array<i64: 2, 128, 32>}, {pipeline_mode = #tpu.pipeline_mode<synchronous>, transform_indices = @transform_21, window_bounds = array<i64: 2, 1, 32>}, {pipeline_mode = #tpu.pipeline_mode<synchronous>, transform_indices = @transform_22, window_bounds = array<i64: 2, 1, 32>}, {pipeline_mode = #tpu.pipeline_mode<synchronous>, transform_indices = @transform_23, window_bounds = array<i64: 1, 32>}, {pipeline_mode = #tpu.pipeline_mode<synchronous>, transform_indices = @transform_24, window_bounds = array<i64: 1, 32>}, {pipeline_mode = #tpu.pipeline_mode<synchronous>, transform_indices = @transform_25, window_bounds = array<i64: 32, 128>}, {pipeline_mode = #tpu.pipeline_mode<synchronous>, transform_indices = @transform_26, window_bounds = array<i64: 1, 128>}, {pipeline_mode = #tpu.pipeline_mode<synchronous>, transform_indices = @transform_27, window_bounds = array<i64: 128, 32>}, {pipeline_mode = #tpu.pipeline_mode<synchronous>, transform_indices = @transform_28, window_bounds = array<i64: 1, 32>}, {pipeline_mode = #tpu.pipeline_mode<synchronous>, transform_indices = @transform_29, window_bounds = array<i64: 32, 128>}, {pipeline_mode = #tpu.pipeline_mode<synchronous>, transform_indices = @transform_30, window_bounds = array<i64: 1, 128>}, {pipeline_mode = #tpu.pipeline_mode<synchronous>, transform_indices = @transform_31, window_bounds = array<i64: 48, 128>}]} {
    %c0 = arith.constant 0 : index
    %c0_0 = arith.constant 0 : index
    %0 = vector.load %arg4[%c0, %c0_0] : memref<4x32xf32, #tpu.memory_space<vmem>>, vector<4x32xf32>
    %c0_1 = arith.constant 0 : index
    %c0_2 = arith.constant 0 : index
    %1 = vector.load %arg3[%c0_1, %c0_2] : memref<192x48xf32, #tpu.memory_space<vmem>>, vector<192x48xf32>
    %c0_3 = arith.constant 0 : index
    %c0_4 = arith.constant 0 : index
    %2 = vector.load %arg1[%c0_3, %c0_4] : memref<48x48xbf16, #tpu.memory_space<vmem>>, vector<48x48xbf16>
    %c0_5 = arith.constant 0 : index
    %c0_6 = arith.constant 0 : index
    %3 = vector.load %arg5[%c0_5, %c0_6] : memref<48x32xbf16, #tpu.memory_space<vmem>>, vector<48x32xbf16>
    %cst = arith.constant dense<0.000000e+00> : vector<48x32xf32>
    %4 = tpu.matmul %2, %3, %cst {dimension_numbers = #tpu.dot_dimension_numbers<[1], [0], [0], [1], [0, 0, 1, 1], [], []>} : vector<48x48xbf16>, vector<48x32xbf16>, vector<48x32xf32> -> vector<48x32xf32>
    %c0_7 = arith.constant 0 : index
    %c0_8 = arith.constant 0 : index
    %5 = vector.load %arg2[%c0_7, %c0_8] : memref<48x32xf32, #tpu.memory_space<vmem>>, vector<48x32xf32>
    %6 = arith.addf %4, %5 : vector<48x32xf32>
    %c0_9 = arith.constant 0 : index
    %c0_10 = arith.constant 0 : index
    %c0_11 = arith.constant 0 : index
    %7 = vector.load %arg6[%c0_9, %c0_10, %c0_11] : memref<2x1x32xf32, #tpu.memory_space<vmem>>, vector<1x1x32xf32>
    %8 = vector.shape_cast %7 : vector<1x1x32xf32> to vector<1x32xf32>
    %c0_12 = arith.constant 0 : index
    %c0_13 = arith.constant 0 : index
    %c0_14 = arith.constant 0 : index
    %9 = vector.load %arg7[%c0_12, %c0_13, %c0_14] : memref<2x1x32xf32, #tpu.memory_space<vmem>>, vector<1x1x32xf32>
    %10 = vector.shape_cast %9 : vector<1x1x32xf32> to vector<1x32xf32>
    %cst_15 = arith.constant dense<0.000000e+00> : vector<48xf32>
    %11 = vector.multi_reduction <add>, %6, %cst_15 [1] : vector<48x32xf32> to vector<48xf32>
    %12 = vector.shape_cast %11 : vector<48xf32> to vector<48x1xf32>
    %cst_16 = arith.constant 3.200000e+01 : f32
    %13 = vector.broadcast %cst_16 : f32 to vector<48x1xf32>
    %14 = arith.divf %12, %13 : vector<48x1xf32>
    %15 = vector.broadcast %14 : vector<48x1xf32> to vector<48x32xf32>
    %16 = arith.subf %6, %15 : vector<48x32xf32>
    %17 = arith.mulf %16, %16 : vector<48x32xf32>
    %cst_17 = arith.constant dense<0.000000e+00> : vector<48xf32>
    %18 = vector.multi_reduction <add>, %17, %cst_17 [1] : vector<48x32xf32> to vector<48xf32>
    %19 = vector.shape_cast %18 : vector<48xf32> to vector<48x1xf32>
    %cst_18 = arith.constant 3.200000e+01 : f32
    %20 = vector.broadcast %cst_18 : f32 to vector<48x1xf32>
    %21 = arith.divf %19, %20 : vector<48x1xf32>
    %22 = vector.broadcast %14 : vector<48x1xf32> to vector<48x32xf32>
    %23 = arith.subf %6, %22 : vector<48x32xf32>
    %cst_19 = arith.constant 9.99999974E-6 : f32
    %24 = vector.broadcast %cst_19 : f32 to vector<48x1xf32>
    %25 = arith.addf %21, %24 : vector<48x1xf32>
    %26 = math.rsqrt %25 : vector<48x1xf32>
    %27 = vector.broadcast %26 : vector<48x1xf32> to vector<48x32xf32>
    %28 = arith.mulf %23, %27 : vector<48x32xf32>
    %29 = vector.broadcast %8 : vector<1x32xf32> to vector<48x32xf32>
    %30 = arith.mulf %28, %29 : vector<48x32xf32>
    %31 = vector.broadcast %10 : vector<1x32xf32> to vector<48x32xf32>
    %32 = arith.addf %30, %31 : vector<48x32xf32>
    %33 = arith.truncf %32 : vector<48x32xf32> to vector<48x32xbf16>
    %c0_20 = arith.constant 0 : index
    %c0_21 = arith.constant 0 : index
    %c0_22 = arith.constant 0 : index
    %34 = vector.load %arg8[%c0_20, %c0_21, %c0_22] : memref<2x32x32xbf16, #tpu.memory_space<vmem>>, vector<1x32x32xbf16>
    %35 = vector.shape_cast %34 : vector<1x32x32xbf16> to vector<32x32xbf16>
    %cst_23 = arith.constant dense<0.000000e+00> : vector<48x32xf32>
    %36 = tpu.matmul %33, %35, %cst_23 {dimension_numbers = #tpu.dot_dimension_numbers<[1], [0], [0], [1], [0, 0, 1, 1], [], []>} : vector<48x32xbf16>, vector<32x32xbf16>, vector<48x32xf32> -> vector<48x32xf32>
    %c0_24 = arith.constant 0 : index
    %c0_25 = arith.constant 0 : index
    %c0_26 = arith.constant 0 : index
    %37 = vector.load %arg9[%c0_24, %c0_25, %c0_26] : memref<2x1x32xf32, #tpu.memory_space<vmem>>, vector<1x1x32xf32>
    %38 = vector.shape_cast %37 : vector<1x1x32xf32> to vector<1x32xf32>
    %39 = vector.broadcast %38 : vector<1x32xf32> to vector<48x32xf32>
    %40 = arith.addf %36, %39 : vector<48x32xf32>
    %c0_27 = arith.constant 0 : index
    %c0_28 = arith.constant 0 : index
    %c0_29 = arith.constant 0 : index
    %41 = vector.load %arg10[%c0_27, %c0_28, %c0_29] : memref<2x32x32xbf16, #tpu.memory_space<vmem>>, vector<1x32x32xbf16>
    %42 = vector.shape_cast %41 : vector<1x32x32xbf16> to vector<32x32xbf16>
    %cst_30 = arith.constant dense<0.000000e+00> : vector<48x32xf32>
    %43 = tpu.matmul %33, %42, %cst_30 {dimension_numbers = #tpu.dot_dimension_numbers<[1], [0], [0], [1], [0, 0, 1, 1], [], []>} : vector<48x32xbf16>, vector<32x32xbf16>, vector<48x32xf32> -> vector<48x32xf32>
    %c0_31 = arith.constant 0 : index
    %c0_32 = arith.constant 0 : index
    %c0_33 = arith.constant 0 : index
    %44 = vector.load %arg11[%c0_31, %c0_32, %c0_33] : memref<2x1x32xf32, #tpu.memory_space<vmem>>, vector<1x1x32xf32>
    %45 = vector.shape_cast %44 : vector<1x1x32xf32> to vector<1x32xf32>
    %46 = vector.broadcast %45 : vector<1x32xf32> to vector<48x32xf32>
    %47 = arith.addf %43, %46 : vector<48x32xf32>
    %c0_34 = arith.constant 0 : index
    %c0_35 = arith.constant 0 : index
    %c0_36 = arith.constant 0 : index
    %48 = vector.load %arg12[%c0_34, %c0_35, %c0_36] : memref<2x32x32xbf16, #tpu.memory_space<vmem>>, vector<1x32x32xbf16>
    %49 = vector.shape_cast %48 : vector<1x32x32xbf16> to vector<32x32xbf16>
    %cst_37 = arith.constant dense<0.000000e+00> : vector<48x32xf32>
    %50 = tpu.matmul %33, %49, %cst_37 {dimension_numbers = #tpu.dot_dimension_numbers<[1], [0], [0], [1], [0, 0, 1, 1], [], []>} : vector<48x32xbf16>, vector<32x32xbf16>, vector<48x32xf32> -> vector<48x32xf32>
    %c0_38 = arith.constant 0 : index
    %c0_39 = arith.constant 0 : index
    %c0_40 = arith.constant 0 : index
    %51 = vector.load %arg13[%c0_38, %c0_39, %c0_40] : memref<2x1x32xf32, #tpu.memory_space<vmem>>, vector<1x1x32xf32>
    %52 = vector.shape_cast %51 : vector<1x1x32xf32> to vector<1x32xf32>
    %53 = vector.broadcast %52 : vector<1x32xf32> to vector<48x32xf32>
    %54 = arith.addf %50, %53 : vector<48x32xf32>
    %cst_41 = arith.constant 0.353553385 : f32
    %55 = vector.broadcast %cst_41 : f32 to vector<48x32xf32>
    %56 = arith.mulf %40, %55 : vector<48x32xf32>
    %57 = vector.extract_strided_slice %0 {offsets = [0, 0], sizes = [1, 32], strides = [1, 1]} : vector<4x32xf32> to vector<1x32xf32>
    %58 = vector.broadcast %57 : vector<1x32xf32> to vector<48x32xf32>
    %59 = arith.mulf %56, %58 : vector<48x32xf32>
    %60 = vector.extract_strided_slice %0 {offsets = [1, 0], sizes = [1, 32], strides = [1, 1]} : vector<4x32xf32> to vector<1x32xf32>
    %61 = vector.broadcast %60 : vector<1x32xf32> to vector<48x32xf32>
    %62 = arith.mulf %56, %61 : vector<48x32xf32>
    %63 = vector.extract_strided_slice %0 {offsets = [2, 0], sizes = [1, 32], strides = [1, 1]} : vector<4x32xf32> to vector<1x32xf32>
    %64 = vector.broadcast %63 : vector<1x32xf32> to vector<48x32xf32>
    %65 = arith.mulf %56, %64 : vector<48x32xf32>
    %66 = vector.extract_strided_slice %0 {offsets = [3, 0], sizes = [1, 32], strides = [1, 1]} : vector<4x32xf32> to vector<1x32xf32>
    %67 = vector.broadcast %66 : vector<1x32xf32> to vector<48x32xf32>
    %68 = arith.mulf %56, %67 : vector<48x32xf32>
    %69 = tpu.concatenate %59, %62, %65, %68 in 0 : vector<48x32xf32>, vector<48x32xf32>, vector<48x32xf32>, vector<48x32xf32> -> vector<192x32xf32>
    %70 = arith.truncf %69 : vector<192x32xf32> to vector<192x32xbf16>
    %71 = arith.truncf %47 : vector<48x32xf32> to vector<48x32xbf16>
    %cst_42 = arith.constant dense<0.000000e+00> : vector<192x48xf32>
    %72 = tpu.matmul %70, %71, %cst_42 {dimension_numbers = #tpu.dot_dimension_numbers<[1], [1], [0], [0], [0, 0, 1, 0], [], []>} : vector<192x32xbf16>, vector<48x32xbf16>, vector<192x48xf32> -> vector<192x48xf32>
    %73 = arith.addf %72, %1 : vector<192x48xf32>
    %cst_43 = arith.constant dense<0xFF800000> : vector<192xf32>
    %74 = vector.multi_reduction <maximumf>, %73, %cst_43 [1] : vector<192x48xf32> to vector<192xf32>
    %75 = vector.shape_cast %74 : vector<192xf32> to vector<192x1xf32>
    %76 = vector.broadcast %75 : vector<192x1xf32> to vector<192x48xf32>
    %77 = arith.subf %73, %76 : vector<192x48xf32>
    %78 = math.exp %77 : vector<192x48xf32>
    %cst_44 = arith.constant dense<0.000000e+00> : vector<192xf32>
    %79 = vector.multi_reduction <add>, %78, %cst_44 [1] : vector<192x48xf32> to vector<192xf32>
    %80 = vector.shape_cast %79 : vector<192xf32> to vector<192x1xf32>
    %81 = tpu.reciprocal %80 {approx = true} : vector<192x1xf32> -> vector<192x1xf32>
    %82 = vector.broadcast %81 : vector<192x1xf32> to vector<192x48xf32>
    %83 = arith.mulf %78, %82 : vector<192x48xf32>
    %84 = arith.truncf %83 : vector<192x48xf32> to vector<192x48xbf16>
    %85 = arith.truncf %54 : vector<48x32xf32> to vector<48x32xbf16>
    %cst_45 = arith.constant dense<0.000000e+00> : vector<192x32xf32>
    %86 = tpu.matmul %84, %85, %cst_45 {dimension_numbers = #tpu.dot_dimension_numbers<[1], [0], [0], [1], [0, 0, 1, 1], [], []>} : vector<192x48xbf16>, vector<48x32xbf16>, vector<192x32xf32> -> vector<192x32xf32>
    %87 = vector.extract_strided_slice %86 {offsets = [0, 0], sizes = [48, 32], strides = [1, 1]} : vector<192x32xf32> to vector<48x32xf32>
    %88 = vector.extract_strided_slice %0 {offsets = [0, 0], sizes = [1, 32], strides = [1, 1]} : vector<4x32xf32> to vector<1x32xf32>
    %89 = vector.broadcast %88 : vector<1x32xf32> to vector<48x32xf32>
    %90 = arith.mulf %87, %89 : vector<48x32xf32>
    %91 = vector.extract_strided_slice %86 {offsets = [48, 0], sizes = [48, 32], strides = [1, 1]} : vector<192x32xf32> to vector<48x32xf32>
    %92 = vector.extract_strided_slice %0 {offsets = [1, 0], sizes = [1, 32], strides = [1, 1]} : vector<4x32xf32> to vector<1x32xf32>
    %93 = vector.broadcast %92 : vector<1x32xf32> to vector<48x32xf32>
    %94 = arith.mulf %91, %93 : vector<48x32xf32>
    %95 = arith.addf %90, %94 : vector<48x32xf32>
    %96 = vector.extract_strided_slice %86 {offsets = [96, 0], sizes = [48, 32], strides = [1, 1]} : vector<192x32xf32> to vector<48x32xf32>
    %97 = vector.extract_strided_slice %0 {offsets = [2, 0], sizes = [1, 32], strides = [1, 1]} : vector<4x32xf32> to vector<1x32xf32>
    %98 = vector.broadcast %97 : vector<1x32xf32> to vector<48x32xf32>
    %99 = arith.mulf %96, %98 : vector<48x32xf32>
    %100 = arith.addf %95, %99 : vector<48x32xf32>
    %101 = vector.extract_strided_slice %86 {offsets = [144, 0], sizes = [48, 32], strides = [1, 1]} : vector<192x32xf32> to vector<48x32xf32>
    %102 = vector.extract_strided_slice %0 {offsets = [3, 0], sizes = [1, 32], strides = [1, 1]} : vector<4x32xf32> to vector<1x32xf32>
    %103 = vector.broadcast %102 : vector<1x32xf32> to vector<48x32xf32>
    %104 = arith.mulf %101, %103 : vector<48x32xf32>
    %105 = arith.addf %100, %104 : vector<48x32xf32>
    %106 = arith.truncf %105 : vector<48x32xf32> to vector<48x32xbf16>
    %c0_46 = arith.constant 0 : index
    %c0_47 = arith.constant 0 : index
    %c0_48 = arith.constant 0 : index
    %107 = vector.load %arg14[%c0_46, %c0_47, %c0_48] : memref<2x32x32xbf16, #tpu.memory_space<vmem>>, vector<1x32x32xbf16>
    %108 = vector.shape_cast %107 : vector<1x32x32xbf16> to vector<32x32xbf16>
    %cst_49 = arith.constant dense<0.000000e+00> : vector<48x32xf32>
    %109 = tpu.matmul %106, %108, %cst_49 {dimension_numbers = #tpu.dot_dimension_numbers<[1], [0], [0], [1], [0, 0, 1, 1], [], []>} : vector<48x32xbf16>, vector<32x32xbf16>, vector<48x32xf32> -> vector<48x32xf32>
    %c0_50 = arith.constant 0 : index
    %c0_51 = arith.constant 0 : index
    %c0_52 = arith.constant 0 : index
    %110 = vector.load %arg15[%c0_50, %c0_51, %c0_52] : memref<2x1x32xf32, #tpu.memory_space<vmem>>, vector<1x1x32xf32>
    %111 = vector.shape_cast %110 : vector<1x1x32xf32> to vector<1x32xf32>
    %112 = vector.broadcast %111 : vector<1x32xf32> to vector<48x32xf32>
    %113 = arith.addf %109, %112 : vector<48x32xf32>
    %c0_53 = arith.constant 0 : index
    %c0_54 = arith.constant 0 : index
    %c0_55 = arith.constant 0 : index
    %114 = vector.load %arg16[%c0_53, %c0_54, %c0_55] : memref<2x1x32xf32, #tpu.memory_space<vmem>>, vector<1x1x32xf32>
    %115 = vector.shape_cast %114 : vector<1x1x32xf32> to vector<1x32xf32>
    %116 = vector.broadcast %115 : vector<1x32xf32> to vector<48x32xf32>
    %117 = arith.mulf %116, %113 : vector<48x32xf32>
    %118 = arith.addf %6, %117 : vector<48x32xf32>
    %c0_56 = arith.constant 0 : index
    %c0_57 = arith.constant 0 : index
    %c0_58 = arith.constant 0 : index
    %119 = vector.load %arg17[%c0_56, %c0_57, %c0_58] : memref<2x1x32xf32, #tpu.memory_space<vmem>>, vector<1x1x32xf32>
    %120 = vector.shape_cast %119 : vector<1x1x32xf32> to vector<1x32xf32>
    %c0_59 = arith.constant 0 : index
    %c0_60 = arith.constant 0 : index
    %c0_61 = arith.constant 0 : index
    %121 = vector.load %arg18[%c0_59, %c0_60, %c0_61] : memref<2x1x32xf32, #tpu.memory_space<vmem>>, vector<1x1x32xf32>
    %122 = vector.shape_cast %121 : vector<1x1x32xf32> to vector<1x32xf32>
    %cst_62 = arith.constant dense<0.000000e+00> : vector<48xf32>
    %123 = vector.multi_reduction <add>, %118, %cst_62 [1] : vector<48x32xf32> to vector<48xf32>
    %124 = vector.shape_cast %123 : vector<48xf32> to vector<48x1xf32>
    %cst_63 = arith.constant 3.200000e+01 : f32
    %125 = vector.broadcast %cst_63 : f32 to vector<48x1xf32>
    %126 = arith.divf %124, %125 : vector<48x1xf32>
    %127 = vector.broadcast %126 : vector<48x1xf32> to vector<48x32xf32>
    %128 = arith.subf %118, %127 : vector<48x32xf32>
    %129 = arith.mulf %128, %128 : vector<48x32xf32>
    %cst_64 = arith.constant dense<0.000000e+00> : vector<48xf32>
    %130 = vector.multi_reduction <add>, %129, %cst_64 [1] : vector<48x32xf32> to vector<48xf32>
    %131 = vector.shape_cast %130 : vector<48xf32> to vector<48x1xf32>
    %cst_65 = arith.constant 3.200000e+01 : f32
    %132 = vector.broadcast %cst_65 : f32 to vector<48x1xf32>
    %133 = arith.divf %131, %132 : vector<48x1xf32>
    %134 = vector.broadcast %126 : vector<48x1xf32> to vector<48x32xf32>
    %135 = arith.subf %118, %134 : vector<48x32xf32>
    %cst_66 = arith.constant 9.99999974E-6 : f32
    %136 = vector.broadcast %cst_66 : f32 to vector<48x1xf32>
    %137 = arith.addf %133, %136 : vector<48x1xf32>
    %138 = math.rsqrt %137 : vector<48x1xf32>
    %139 = vector.broadcast %138 : vector<48x1xf32> to vector<48x32xf32>
    %140 = arith.mulf %135, %139 : vector<48x32xf32>
    %141 = vector.broadcast %120 : vector<1x32xf32> to vector<48x32xf32>
    %142 = arith.mulf %140, %141 : vector<48x32xf32>
    %143 = vector.broadcast %122 : vector<1x32xf32> to vector<48x32xf32>
    %144 = arith.addf %142, %143 : vector<48x32xf32>
    %145 = arith.truncf %144 : vector<48x32xf32> to vector<48x32xbf16>
    %c0_67 = arith.constant 0 : index
    %c0_68 = arith.constant 0 : index
    %c0_69 = arith.constant 0 : index
    %146 = vector.load %arg19[%c0_67, %c0_68, %c0_69] : memref<2x32x128xbf16, #tpu.memory_space<vmem>>, vector<1x32x128xbf16>
    %147 = vector.shape_cast %146 : vector<1x32x128xbf16> to vector<32x128xbf16>
    %cst_70 = arith.constant dense<0.000000e+00> : vector<48x128xf32>
    %148 = tpu.matmul %145, %147, %cst_70 {dimension_numbers = #tpu.dot_dimension_numbers<[1], [0], [0], [1], [0, 0, 1, 1], [], []>} : vector<48x32xbf16>, vector<32x128xbf16>, vector<48x128xf32> -> vector<48x128xf32>
    %c0_71 = arith.constant 0 : index
    %c0_72 = arith.constant 0 : index
    %c0_73 = arith.constant 0 : index
    %149 = vector.load %arg20[%c0_71, %c0_72, %c0_73] : memref<2x1x128xf32, #tpu.memory_space<vmem>>, vector<1x1x128xf32>
    %150 = vector.shape_cast %149 : vector<1x1x128xf32> to vector<1x128xf32>
    %151 = vector.broadcast %150 : vector<1x128xf32> to vector<48x128xf32>
    %152 = arith.addf %148, %151 : vector<48x128xf32>
    %153 = arith.mulf %152, %152 : vector<48x128xf32>
    %154 = arith.mulf %152, %153 : vector<48x128xf32>
    %cst_74 = arith.constant 4.471500e-02 : f32
    %155 = vector.broadcast %cst_74 : f32 to vector<48x128xf32>
    %156 = arith.mulf %155, %154 : vector<48x128xf32>
    %157 = arith.addf %152, %156 : vector<48x128xf32>
    %cst_75 = arith.constant 0.797884583 : f32
    %158 = vector.broadcast %cst_75 : f32 to vector<48x128xf32>
    %159 = arith.mulf %158, %157 : vector<48x128xf32>
    %160 = math.tanh %159 : vector<48x128xf32>
    %cst_76 = arith.constant 1.000000e+00 : f32
    %161 = vector.broadcast %cst_76 : f32 to vector<48x128xf32>
    %162 = arith.addf %161, %160 : vector<48x128xf32>
    %cst_77 = arith.constant 5.000000e-01 : f32
    %163 = vector.broadcast %cst_77 : f32 to vector<48x128xf32>
    %164 = arith.mulf %163, %162 : vector<48x128xf32>
    %165 = arith.mulf %152, %164 : vector<48x128xf32>
    %166 = arith.truncf %165 : vector<48x128xf32> to vector<48x128xbf16>
    %c0_78 = arith.constant 0 : index
    %c0_79 = arith.constant 0 : index
    %c0_80 = arith.constant 0 : index
    %167 = vector.load %arg21[%c0_78, %c0_79, %c0_80] : memref<2x128x32xbf16, #tpu.memory_space<vmem>>, vector<1x128x32xbf16>
    %168 = vector.shape_cast %167 : vector<1x128x32xbf16> to vector<128x32xbf16>
    %cst_81 = arith.constant dense<0.000000e+00> : vector<48x32xf32>
    %169 = tpu.matmul %166, %168, %cst_81 {dimension_numbers = #tpu.dot_dimension_numbers<[1], [0], [0], [1], [0, 0, 1, 1], [], []>} : vector<48x128xbf16>, vector<128x32xbf16>, vector<48x32xf32> -> vector<48x32xf32>
    %c0_82 = arith.constant 0 : index
    %c0_83 = arith.constant 0 : index
    %c0_84 = arith.constant 0 : index
    %170 = vector.load %arg22[%c0_82, %c0_83, %c0_84] : memref<2x1x32xf32, #tpu.memory_space<vmem>>, vector<1x1x32xf32>
    %171 = vector.shape_cast %170 : vector<1x1x32xf32> to vector<1x32xf32>
    %172 = vector.broadcast %171 : vector<1x32xf32> to vector<48x32xf32>
    %173 = arith.addf %169, %172 : vector<48x32xf32>
    %c0_85 = arith.constant 0 : index
    %c0_86 = arith.constant 0 : index
    %c0_87 = arith.constant 0 : index
    %174 = vector.load %arg23[%c0_85, %c0_86, %c0_87] : memref<2x1x32xf32, #tpu.memory_space<vmem>>, vector<1x1x32xf32>
    %175 = vector.shape_cast %174 : vector<1x1x32xf32> to vector<1x32xf32>
    %176 = vector.broadcast %175 : vector<1x32xf32> to vector<48x32xf32>
    %177 = arith.mulf %176, %173 : vector<48x32xf32>
    %178 = arith.addf %118, %177 : vector<48x32xf32>
    %c1 = arith.constant 1 : index
    %c0_88 = arith.constant 0 : index
    %c0_89 = arith.constant 0 : index
    %179 = vector.load %arg6[%c1, %c0_88, %c0_89] : memref<2x1x32xf32, #tpu.memory_space<vmem>>, vector<1x1x32xf32>
    %180 = vector.shape_cast %179 : vector<1x1x32xf32> to vector<1x32xf32>
    %c1_90 = arith.constant 1 : index
    %c0_91 = arith.constant 0 : index
    %c0_92 = arith.constant 0 : index
    %181 = vector.load %arg7[%c1_90, %c0_91, %c0_92] : memref<2x1x32xf32, #tpu.memory_space<vmem>>, vector<1x1x32xf32>
    %182 = vector.shape_cast %181 : vector<1x1x32xf32> to vector<1x32xf32>
    %cst_93 = arith.constant dense<0.000000e+00> : vector<48xf32>
    %183 = vector.multi_reduction <add>, %178, %cst_93 [1] : vector<48x32xf32> to vector<48xf32>
    %184 = vector.shape_cast %183 : vector<48xf32> to vector<48x1xf32>
    %cst_94 = arith.constant 3.200000e+01 : f32
    %185 = vector.broadcast %cst_94 : f32 to vector<48x1xf32>
    %186 = arith.divf %184, %185 : vector<48x1xf32>
    %187 = vector.broadcast %186 : vector<48x1xf32> to vector<48x32xf32>
    %188 = arith.subf %178, %187 : vector<48x32xf32>
    %189 = arith.mulf %188, %188 : vector<48x32xf32>
    %cst_95 = arith.constant dense<0.000000e+00> : vector<48xf32>
    %190 = vector.multi_reduction <add>, %189, %cst_95 [1] : vector<48x32xf32> to vector<48xf32>
    %191 = vector.shape_cast %190 : vector<48xf32> to vector<48x1xf32>
    %cst_96 = arith.constant 3.200000e+01 : f32
    %192 = vector.broadcast %cst_96 : f32 to vector<48x1xf32>
    %193 = arith.divf %191, %192 : vector<48x1xf32>
    %194 = vector.broadcast %186 : vector<48x1xf32> to vector<48x32xf32>
    %195 = arith.subf %178, %194 : vector<48x32xf32>
    %cst_97 = arith.constant 9.99999974E-6 : f32
    %196 = vector.broadcast %cst_97 : f32 to vector<48x1xf32>
    %197 = arith.addf %193, %196 : vector<48x1xf32>
    %198 = math.rsqrt %197 : vector<48x1xf32>
    %199 = vector.broadcast %198 : vector<48x1xf32> to vector<48x32xf32>
    %200 = arith.mulf %195, %199 : vector<48x32xf32>
    %201 = vector.broadcast %180 : vector<1x32xf32> to vector<48x32xf32>
    %202 = arith.mulf %200, %201 : vector<48x32xf32>
    %203 = vector.broadcast %182 : vector<1x32xf32> to vector<48x32xf32>
    %204 = arith.addf %202, %203 : vector<48x32xf32>
    %205 = arith.truncf %204 : vector<48x32xf32> to vector<48x32xbf16>
    %c1_98 = arith.constant 1 : index
    %c0_99 = arith.constant 0 : index
    %c0_100 = arith.constant 0 : index
    %206 = vector.load %arg8[%c1_98, %c0_99, %c0_100] : memref<2x32x32xbf16, #tpu.memory_space<vmem>>, vector<1x32x32xbf16>
    %207 = vector.shape_cast %206 : vector<1x32x32xbf16> to vector<32x32xbf16>
    %cst_101 = arith.constant dense<0.000000e+00> : vector<48x32xf32>
    %208 = tpu.matmul %205, %207, %cst_101 {dimension_numbers = #tpu.dot_dimension_numbers<[1], [0], [0], [1], [0, 0, 1, 1], [], []>} : vector<48x32xbf16>, vector<32x32xbf16>, vector<48x32xf32> -> vector<48x32xf32>
    %c1_102 = arith.constant 1 : index
    %c0_103 = arith.constant 0 : index
    %c0_104 = arith.constant 0 : index
    %209 = vector.load %arg9[%c1_102, %c0_103, %c0_104] : memref<2x1x32xf32, #tpu.memory_space<vmem>>, vector<1x1x32xf32>
    %210 = vector.shape_cast %209 : vector<1x1x32xf32> to vector<1x32xf32>
    %211 = vector.broadcast %210 : vector<1x32xf32> to vector<48x32xf32>
    %212 = arith.addf %208, %211 : vector<48x32xf32>
    %c1_105 = arith.constant 1 : index
    %c0_106 = arith.constant 0 : index
    %c0_107 = arith.constant 0 : index
    %213 = vector.load %arg10[%c1_105, %c0_106, %c0_107] : memref<2x32x32xbf16, #tpu.memory_space<vmem>>, vector<1x32x32xbf16>
    %214 = vector.shape_cast %213 : vector<1x32x32xbf16> to vector<32x32xbf16>
    %cst_108 = arith.constant dense<0.000000e+00> : vector<48x32xf32>
    %215 = tpu.matmul %205, %214, %cst_108 {dimension_numbers = #tpu.dot_dimension_numbers<[1], [0], [0], [1], [0, 0, 1, 1], [], []>} : vector<48x32xbf16>, vector<32x32xbf16>, vector<48x32xf32> -> vector<48x32xf32>
    %c1_109 = arith.constant 1 : index
    %c0_110 = arith.constant 0 : index
    %c0_111 = arith.constant 0 : index
    %216 = vector.load %arg11[%c1_109, %c0_110, %c0_111] : memref<2x1x32xf32, #tpu.memory_space<vmem>>, vector<1x1x32xf32>
    %217 = vector.shape_cast %216 : vector<1x1x32xf32> to vector<1x32xf32>
    %218 = vector.broadcast %217 : vector<1x32xf32> to vector<48x32xf32>
    %219 = arith.addf %215, %218 : vector<48x32xf32>
    %c1_112 = arith.constant 1 : index
    %c0_113 = arith.constant 0 : index
    %c0_114 = arith.constant 0 : index
    %220 = vector.load %arg12[%c1_112, %c0_113, %c0_114] : memref<2x32x32xbf16, #tpu.memory_space<vmem>>, vector<1x32x32xbf16>
    %221 = vector.shape_cast %220 : vector<1x32x32xbf16> to vector<32x32xbf16>
    %cst_115 = arith.constant dense<0.000000e+00> : vector<48x32xf32>
    %222 = tpu.matmul %205, %221, %cst_115 {dimension_numbers = #tpu.dot_dimension_numbers<[1], [0], [0], [1], [0, 0, 1, 1], [], []>} : vector<48x32xbf16>, vector<32x32xbf16>, vector<48x32xf32> -> vector<48x32xf32>
    %c1_116 = arith.constant 1 : index
    %c0_117 = arith.constant 0 : index
    %c0_118 = arith.constant 0 : index
    %223 = vector.load %arg13[%c1_116, %c0_117, %c0_118] : memref<2x1x32xf32, #tpu.memory_space<vmem>>, vector<1x1x32xf32>
    %224 = vector.shape_cast %223 : vector<1x1x32xf32> to vector<1x32xf32>
    %225 = vector.broadcast %224 : vector<1x32xf32> to vector<48x32xf32>
    %226 = arith.addf %222, %225 : vector<48x32xf32>
    %cst_119 = arith.constant 0.353553385 : f32
    %227 = vector.broadcast %cst_119 : f32 to vector<48x32xf32>
    %228 = arith.mulf %212, %227 : vector<48x32xf32>
    %229 = vector.extract_strided_slice %0 {offsets = [0, 0], sizes = [1, 32], strides = [1, 1]} : vector<4x32xf32> to vector<1x32xf32>
    %230 = vector.broadcast %229 : vector<1x32xf32> to vector<48x32xf32>
    %231 = arith.mulf %228, %230 : vector<48x32xf32>
    %232 = vector.extract_strided_slice %0 {offsets = [1, 0], sizes = [1, 32], strides = [1, 1]} : vector<4x32xf32> to vector<1x32xf32>
    %233 = vector.broadcast %232 : vector<1x32xf32> to vector<48x32xf32>
    %234 = arith.mulf %228, %233 : vector<48x32xf32>
    %235 = vector.extract_strided_slice %0 {offsets = [2, 0], sizes = [1, 32], strides = [1, 1]} : vector<4x32xf32> to vector<1x32xf32>
    %236 = vector.broadcast %235 : vector<1x32xf32> to vector<48x32xf32>
    %237 = arith.mulf %228, %236 : vector<48x32xf32>
    %238 = vector.extract_strided_slice %0 {offsets = [3, 0], sizes = [1, 32], strides = [1, 1]} : vector<4x32xf32> to vector<1x32xf32>
    %239 = vector.broadcast %238 : vector<1x32xf32> to vector<48x32xf32>
    %240 = arith.mulf %228, %239 : vector<48x32xf32>
    %241 = tpu.concatenate %231, %234, %237, %240 in 0 : vector<48x32xf32>, vector<48x32xf32>, vector<48x32xf32>, vector<48x32xf32> -> vector<192x32xf32>
    %242 = arith.truncf %241 : vector<192x32xf32> to vector<192x32xbf16>
    %243 = arith.truncf %219 : vector<48x32xf32> to vector<48x32xbf16>
    %cst_120 = arith.constant dense<0.000000e+00> : vector<192x48xf32>
    %244 = tpu.matmul %242, %243, %cst_120 {dimension_numbers = #tpu.dot_dimension_numbers<[1], [1], [0], [0], [0, 0, 1, 0], [], []>} : vector<192x32xbf16>, vector<48x32xbf16>, vector<192x48xf32> -> vector<192x48xf32>
    %245 = arith.addf %244, %1 : vector<192x48xf32>
    %cst_121 = arith.constant dense<0xFF800000> : vector<192xf32>
    %246 = vector.multi_reduction <maximumf>, %245, %cst_121 [1] : vector<192x48xf32> to vector<192xf32>
    %247 = vector.shape_cast %246 : vector<192xf32> to vector<192x1xf32>
    %248 = vector.broadcast %247 : vector<192x1xf32> to vector<192x48xf32>
    %249 = arith.subf %245, %248 : vector<192x48xf32>
    %250 = math.exp %249 : vector<192x48xf32>
    %cst_122 = arith.constant dense<0.000000e+00> : vector<192xf32>
    %251 = vector.multi_reduction <add>, %250, %cst_122 [1] : vector<192x48xf32> to vector<192xf32>
    %252 = vector.shape_cast %251 : vector<192xf32> to vector<192x1xf32>
    %253 = tpu.reciprocal %252 {approx = true} : vector<192x1xf32> -> vector<192x1xf32>
    %254 = vector.broadcast %253 : vector<192x1xf32> to vector<192x48xf32>
    %255 = arith.mulf %250, %254 : vector<192x48xf32>
    %256 = arith.truncf %255 : vector<192x48xf32> to vector<192x48xbf16>
    %257 = arith.truncf %226 : vector<48x32xf32> to vector<48x32xbf16>
    %cst_123 = arith.constant dense<0.000000e+00> : vector<192x32xf32>
    %258 = tpu.matmul %256, %257, %cst_123 {dimension_numbers = #tpu.dot_dimension_numbers<[1], [0], [0], [1], [0, 0, 1, 1], [], []>} : vector<192x48xbf16>, vector<48x32xbf16>, vector<192x32xf32> -> vector<192x32xf32>
    %259 = vector.extract_strided_slice %258 {offsets = [0, 0], sizes = [48, 32], strides = [1, 1]} : vector<192x32xf32> to vector<48x32xf32>
    %260 = vector.extract_strided_slice %0 {offsets = [0, 0], sizes = [1, 32], strides = [1, 1]} : vector<4x32xf32> to vector<1x32xf32>
    %261 = vector.broadcast %260 : vector<1x32xf32> to vector<48x32xf32>
    %262 = arith.mulf %259, %261 : vector<48x32xf32>
    %263 = vector.extract_strided_slice %258 {offsets = [48, 0], sizes = [48, 32], strides = [1, 1]} : vector<192x32xf32> to vector<48x32xf32>
    %264 = vector.extract_strided_slice %0 {offsets = [1, 0], sizes = [1, 32], strides = [1, 1]} : vector<4x32xf32> to vector<1x32xf32>
    %265 = vector.broadcast %264 : vector<1x32xf32> to vector<48x32xf32>
    %266 = arith.mulf %263, %265 : vector<48x32xf32>
    %267 = arith.addf %262, %266 : vector<48x32xf32>
    %268 = vector.extract_strided_slice %258 {offsets = [96, 0], sizes = [48, 32], strides = [1, 1]} : vector<192x32xf32> to vector<48x32xf32>
    %269 = vector.extract_strided_slice %0 {offsets = [2, 0], sizes = [1, 32], strides = [1, 1]} : vector<4x32xf32> to vector<1x32xf32>
    %270 = vector.broadcast %269 : vector<1x32xf32> to vector<48x32xf32>
    %271 = arith.mulf %268, %270 : vector<48x32xf32>
    %272 = arith.addf %267, %271 : vector<48x32xf32>
    %273 = vector.extract_strided_slice %258 {offsets = [144, 0], sizes = [48, 32], strides = [1, 1]} : vector<192x32xf32> to vector<48x32xf32>
    %274 = vector.extract_strided_slice %0 {offsets = [3, 0], sizes = [1, 32], strides = [1, 1]} : vector<4x32xf32> to vector<1x32xf32>
    %275 = vector.broadcast %274 : vector<1x32xf32> to vector<48x32xf32>
    %276 = arith.mulf %273, %275 : vector<48x32xf32>
    %277 = arith.addf %272, %276 : vector<48x32xf32>
    %278 = arith.truncf %277 : vector<48x32xf32> to vector<48x32xbf16>
    %c1_124 = arith.constant 1 : index
    %c0_125 = arith.constant 0 : index
    %c0_126 = arith.constant 0 : index
    %279 = vector.load %arg14[%c1_124, %c0_125, %c0_126] : memref<2x32x32xbf16, #tpu.memory_space<vmem>>, vector<1x32x32xbf16>
    %280 = vector.shape_cast %279 : vector<1x32x32xbf16> to vector<32x32xbf16>
    %cst_127 = arith.constant dense<0.000000e+00> : vector<48x32xf32>
    %281 = tpu.matmul %278, %280, %cst_127 {dimension_numbers = #tpu.dot_dimension_numbers<[1], [0], [0], [1], [0, 0, 1, 1], [], []>} : vector<48x32xbf16>, vector<32x32xbf16>, vector<48x32xf32> -> vector<48x32xf32>
    %c1_128 = arith.constant 1 : index
    %c0_129 = arith.constant 0 : index
    %c0_130 = arith.constant 0 : index
    %282 = vector.load %arg15[%c1_128, %c0_129, %c0_130] : memref<2x1x32xf32, #tpu.memory_space<vmem>>, vector<1x1x32xf32>
    %283 = vector.shape_cast %282 : vector<1x1x32xf32> to vector<1x32xf32>
    %284 = vector.broadcast %283 : vector<1x32xf32> to vector<48x32xf32>
    %285 = arith.addf %281, %284 : vector<48x32xf32>
    %c1_131 = arith.constant 1 : index
    %c0_132 = arith.constant 0 : index
    %c0_133 = arith.constant 0 : index
    %286 = vector.load %arg16[%c1_131, %c0_132, %c0_133] : memref<2x1x32xf32, #tpu.memory_space<vmem>>, vector<1x1x32xf32>
    %287 = vector.shape_cast %286 : vector<1x1x32xf32> to vector<1x32xf32>
    %288 = vector.broadcast %287 : vector<1x32xf32> to vector<48x32xf32>
    %289 = arith.mulf %288, %285 : vector<48x32xf32>
    %290 = arith.addf %178, %289 : vector<48x32xf32>
    %c1_134 = arith.constant 1 : index
    %c0_135 = arith.constant 0 : index
    %c0_136 = arith.constant 0 : index
    %291 = vector.load %arg17[%c1_134, %c0_135, %c0_136] : memref<2x1x32xf32, #tpu.memory_space<vmem>>, vector<1x1x32xf32>
    %292 = vector.shape_cast %291 : vector<1x1x32xf32> to vector<1x32xf32>
    %c1_137 = arith.constant 1 : index
    %c0_138 = arith.constant 0 : index
    %c0_139 = arith.constant 0 : index
    %293 = vector.load %arg18[%c1_137, %c0_138, %c0_139] : memref<2x1x32xf32, #tpu.memory_space<vmem>>, vector<1x1x32xf32>
    %294 = vector.shape_cast %293 : vector<1x1x32xf32> to vector<1x32xf32>
    %cst_140 = arith.constant dense<0.000000e+00> : vector<48xf32>
    %295 = vector.multi_reduction <add>, %290, %cst_140 [1] : vector<48x32xf32> to vector<48xf32>
    %296 = vector.shape_cast %295 : vector<48xf32> to vector<48x1xf32>
    %cst_141 = arith.constant 3.200000e+01 : f32
    %297 = vector.broadcast %cst_141 : f32 to vector<48x1xf32>
    %298 = arith.divf %296, %297 : vector<48x1xf32>
    %299 = vector.broadcast %298 : vector<48x1xf32> to vector<48x32xf32>
    %300 = arith.subf %290, %299 : vector<48x32xf32>
    %301 = arith.mulf %300, %300 : vector<48x32xf32>
    %cst_142 = arith.constant dense<0.000000e+00> : vector<48xf32>
    %302 = vector.multi_reduction <add>, %301, %cst_142 [1] : vector<48x32xf32> to vector<48xf32>
    %303 = vector.shape_cast %302 : vector<48xf32> to vector<48x1xf32>
    %cst_143 = arith.constant 3.200000e+01 : f32
    %304 = vector.broadcast %cst_143 : f32 to vector<48x1xf32>
    %305 = arith.divf %303, %304 : vector<48x1xf32>
    %306 = vector.broadcast %298 : vector<48x1xf32> to vector<48x32xf32>
    %307 = arith.subf %290, %306 : vector<48x32xf32>
    %cst_144 = arith.constant 9.99999974E-6 : f32
    %308 = vector.broadcast %cst_144 : f32 to vector<48x1xf32>
    %309 = arith.addf %305, %308 : vector<48x1xf32>
    %310 = math.rsqrt %309 : vector<48x1xf32>
    %311 = vector.broadcast %310 : vector<48x1xf32> to vector<48x32xf32>
    %312 = arith.mulf %307, %311 : vector<48x32xf32>
    %313 = vector.broadcast %292 : vector<1x32xf32> to vector<48x32xf32>
    %314 = arith.mulf %312, %313 : vector<48x32xf32>
    %315 = vector.broadcast %294 : vector<1x32xf32> to vector<48x32xf32>
    %316 = arith.addf %314, %315 : vector<48x32xf32>
    %317 = arith.truncf %316 : vector<48x32xf32> to vector<48x32xbf16>
    %c1_145 = arith.constant 1 : index
    %c0_146 = arith.constant 0 : index
    %c0_147 = arith.constant 0 : index
    %318 = vector.load %arg19[%c1_145, %c0_146, %c0_147] : memref<2x32x128xbf16, #tpu.memory_space<vmem>>, vector<1x32x128xbf16>
    %319 = vector.shape_cast %318 : vector<1x32x128xbf16> to vector<32x128xbf16>
    %cst_148 = arith.constant dense<0.000000e+00> : vector<48x128xf32>
    %320 = tpu.matmul %317, %319, %cst_148 {dimension_numbers = #tpu.dot_dimension_numbers<[1], [0], [0], [1], [0, 0, 1, 1], [], []>} : vector<48x32xbf16>, vector<32x128xbf16>, vector<48x128xf32> -> vector<48x128xf32>
    %c1_149 = arith.constant 1 : index
    %c0_150 = arith.constant 0 : index
    %c0_151 = arith.constant 0 : index
    %321 = vector.load %arg20[%c1_149, %c0_150, %c0_151] : memref<2x1x128xf32, #tpu.memory_space<vmem>>, vector<1x1x128xf32>
    %322 = vector.shape_cast %321 : vector<1x1x128xf32> to vector<1x128xf32>
    %323 = vector.broadcast %322 : vector<1x128xf32> to vector<48x128xf32>
    %324 = arith.addf %320, %323 : vector<48x128xf32>
    %325 = arith.mulf %324, %324 : vector<48x128xf32>
    %326 = arith.mulf %324, %325 : vector<48x128xf32>
    %cst_152 = arith.constant 4.471500e-02 : f32
    %327 = vector.broadcast %cst_152 : f32 to vector<48x128xf32>
    %328 = arith.mulf %327, %326 : vector<48x128xf32>
    %329 = arith.addf %324, %328 : vector<48x128xf32>
    %cst_153 = arith.constant 0.797884583 : f32
    %330 = vector.broadcast %cst_153 : f32 to vector<48x128xf32>
    %331 = arith.mulf %330, %329 : vector<48x128xf32>
    %332 = math.tanh %331 : vector<48x128xf32>
    %cst_154 = arith.constant 1.000000e+00 : f32
    %333 = vector.broadcast %cst_154 : f32 to vector<48x128xf32>
    %334 = arith.addf %333, %332 : vector<48x128xf32>
    %cst_155 = arith.constant 5.000000e-01 : f32
    %335 = vector.broadcast %cst_155 : f32 to vector<48x128xf32>
    %336 = arith.mulf %335, %334 : vector<48x128xf32>
    %337 = arith.mulf %324, %336 : vector<48x128xf32>
    %338 = arith.truncf %337 : vector<48x128xf32> to vector<48x128xbf16>
    %c1_156 = arith.constant 1 : index
    %c0_157 = arith.constant 0 : index
    %c0_158 = arith.constant 0 : index
    %339 = vector.load %arg21[%c1_156, %c0_157, %c0_158] : memref<2x128x32xbf16, #tpu.memory_space<vmem>>, vector<1x128x32xbf16>
    %340 = vector.shape_cast %339 : vector<1x128x32xbf16> to vector<128x32xbf16>
    %cst_159 = arith.constant dense<0.000000e+00> : vector<48x32xf32>
    %341 = tpu.matmul %338, %340, %cst_159 {dimension_numbers = #tpu.dot_dimension_numbers<[1], [0], [0], [1], [0, 0, 1, 1], [], []>} : vector<48x128xbf16>, vector<128x32xbf16>, vector<48x32xf32> -> vector<48x32xf32>
    %c1_160 = arith.constant 1 : index
    %c0_161 = arith.constant 0 : index
    %c0_162 = arith.constant 0 : index
    %342 = vector.load %arg22[%c1_160, %c0_161, %c0_162] : memref<2x1x32xf32, #tpu.memory_space<vmem>>, vector<1x1x32xf32>
    %343 = vector.shape_cast %342 : vector<1x1x32xf32> to vector<1x32xf32>
    %344 = vector.broadcast %343 : vector<1x32xf32> to vector<48x32xf32>
    %345 = arith.addf %341, %344 : vector<48x32xf32>
    %c1_163 = arith.constant 1 : index
    %c0_164 = arith.constant 0 : index
    %c0_165 = arith.constant 0 : index
    %346 = vector.load %arg23[%c1_163, %c0_164, %c0_165] : memref<2x1x32xf32, #tpu.memory_space<vmem>>, vector<1x1x32xf32>
    %347 = vector.shape_cast %346 : vector<1x1x32xf32> to vector<1x32xf32>
    %348 = vector.broadcast %347 : vector<1x32xf32> to vector<48x32xf32>
    %349 = arith.mulf %348, %345 : vector<48x32xf32>
    %350 = arith.addf %290, %349 : vector<48x32xf32>
    %c0_166 = arith.constant 0 : index
    %c0_167 = arith.constant 0 : index
    %351 = vector.load %arg24[%c0_166, %c0_167] : memref<1x32xf32, #tpu.memory_space<vmem>>, vector<1x32xf32>
    %c0_168 = arith.constant 0 : index
    %c0_169 = arith.constant 0 : index
    %352 = vector.load %arg25[%c0_168, %c0_169] : memref<1x32xf32, #tpu.memory_space<vmem>>, vector<1x32xf32>
    %cst_170 = arith.constant dense<0.000000e+00> : vector<48xf32>
    %353 = vector.multi_reduction <add>, %350, %cst_170 [1] : vector<48x32xf32> to vector<48xf32>
    %354 = vector.shape_cast %353 : vector<48xf32> to vector<48x1xf32>
    %cst_171 = arith.constant 3.200000e+01 : f32
    %355 = vector.broadcast %cst_171 : f32 to vector<48x1xf32>
    %356 = arith.divf %354, %355 : vector<48x1xf32>
    %357 = vector.broadcast %356 : vector<48x1xf32> to vector<48x32xf32>
    %358 = arith.subf %350, %357 : vector<48x32xf32>
    %359 = arith.mulf %358, %358 : vector<48x32xf32>
    %cst_172 = arith.constant dense<0.000000e+00> : vector<48xf32>
    %360 = vector.multi_reduction <add>, %359, %cst_172 [1] : vector<48x32xf32> to vector<48xf32>
    %361 = vector.shape_cast %360 : vector<48xf32> to vector<48x1xf32>
    %cst_173 = arith.constant 3.200000e+01 : f32
    %362 = vector.broadcast %cst_173 : f32 to vector<48x1xf32>
    %363 = arith.divf %361, %362 : vector<48x1xf32>
    %364 = vector.broadcast %356 : vector<48x1xf32> to vector<48x32xf32>
    %365 = arith.subf %350, %364 : vector<48x32xf32>
    %cst_174 = arith.constant 9.99999974E-6 : f32
    %366 = vector.broadcast %cst_174 : f32 to vector<48x1xf32>
    %367 = arith.addf %363, %366 : vector<48x1xf32>
    %368 = math.rsqrt %367 : vector<48x1xf32>
    %369 = vector.broadcast %368 : vector<48x1xf32> to vector<48x32xf32>
    %370 = arith.mulf %365, %369 : vector<48x32xf32>
    %371 = vector.broadcast %351 : vector<1x32xf32> to vector<48x32xf32>
    %372 = arith.mulf %370, %371 : vector<48x32xf32>
    %373 = vector.broadcast %352 : vector<1x32xf32> to vector<48x32xf32>
    %374 = arith.addf %372, %373 : vector<48x32xf32>
    %375 = arith.truncf %374 : vector<48x32xf32> to vector<48x32xbf16>
    %c0_175 = arith.constant 0 : index
    %c0_176 = arith.constant 0 : index
    %376 = vector.load %arg26[%c0_175, %c0_176] : memref<32x128xbf16, #tpu.memory_space<vmem>>, vector<32x128xbf16>
    %cst_177 = arith.constant dense<0.000000e+00> : vector<48x128xf32>
    %377 = tpu.matmul %375, %376, %cst_177 {dimension_numbers = #tpu.dot_dimension_numbers<[1], [0], [0], [1], [0, 0, 1, 1], [], []>} : vector<48x32xbf16>, vector<32x128xbf16>, vector<48x128xf32> -> vector<48x128xf32>
    %c0_178 = arith.constant 0 : index
    %c0_179 = arith.constant 0 : index
    %378 = vector.load %arg27[%c0_178, %c0_179] : memref<1x128xf32, #tpu.memory_space<vmem>>, vector<1x128xf32>
    %379 = vector.broadcast %378 : vector<1x128xf32> to vector<48x128xf32>
    %380 = arith.addf %377, %379 : vector<48x128xf32>
    %381 = arith.mulf %380, %380 : vector<48x128xf32>
    %382 = arith.mulf %380, %381 : vector<48x128xf32>
    %cst_180 = arith.constant 4.471500e-02 : f32
    %383 = vector.broadcast %cst_180 : f32 to vector<48x128xf32>
    %384 = arith.mulf %383, %382 : vector<48x128xf32>
    %385 = arith.addf %380, %384 : vector<48x128xf32>
    %cst_181 = arith.constant 0.797884583 : f32
    %386 = vector.broadcast %cst_181 : f32 to vector<48x128xf32>
    %387 = arith.mulf %386, %385 : vector<48x128xf32>
    %388 = math.tanh %387 : vector<48x128xf32>
    %cst_182 = arith.constant 1.000000e+00 : f32
    %389 = vector.broadcast %cst_182 : f32 to vector<48x128xf32>
    %390 = arith.addf %389, %388 : vector<48x128xf32>
    %cst_183 = arith.constant 5.000000e-01 : f32
    %391 = vector.broadcast %cst_183 : f32 to vector<48x128xf32>
    %392 = arith.mulf %391, %390 : vector<48x128xf32>
    %393 = arith.mulf %380, %392 : vector<48x128xf32>
    %394 = arith.truncf %393 : vector<48x128xf32> to vector<48x128xbf16>
    %c0_184 = arith.constant 0 : index
    %c0_185 = arith.constant 0 : index
    %395 = vector.load %arg28[%c0_184, %c0_185] : memref<128x32xbf16, #tpu.memory_space<vmem>>, vector<128x32xbf16>
    %cst_186 = arith.constant dense<0.000000e+00> : vector<48x32xf32>
    %396 = tpu.matmul %394, %395, %cst_186 {dimension_numbers = #tpu.dot_dimension_numbers<[1], [0], [0], [1], [0, 0, 1, 1], [], []>} : vector<48x128xbf16>, vector<128x32xbf16>, vector<48x32xf32> -> vector<48x32xf32>
    %c0_187 = arith.constant 0 : index
    %c0_188 = arith.constant 0 : index
    %397 = vector.load %arg29[%c0_187, %c0_188] : memref<1x32xf32, #tpu.memory_space<vmem>>, vector<1x32xf32>
    %398 = vector.broadcast %397 : vector<1x32xf32> to vector<48x32xf32>
    %399 = arith.addf %396, %398 : vector<48x32xf32>
    %400 = arith.truncf %399 : vector<48x32xf32> to vector<48x32xbf16>
    %c0_189 = arith.constant 0 : index
    %c0_190 = arith.constant 0 : index
    %401 = vector.load %arg30[%c0_189, %c0_190] : memref<32x128xbf16, #tpu.memory_space<vmem>>, vector<32x128xbf16>
    %cst_191 = arith.constant dense<0.000000e+00> : vector<48x128xf32>
    %402 = tpu.matmul %400, %401, %cst_191 {dimension_numbers = #tpu.dot_dimension_numbers<[1], [0], [0], [1], [0, 0, 1, 1], [], []>} : vector<48x32xbf16>, vector<32x128xbf16>, vector<48x128xf32> -> vector<48x128xf32>
    %c0_192 = arith.constant 0 : index
    %c0_193 = arith.constant 0 : index
    %403 = vector.load %arg31[%c0_192, %c0_193] : memref<1x128xf32, #tpu.memory_space<vmem>>, vector<1x128xf32>
    %404 = vector.broadcast %403 : vector<1x128xf32> to vector<48x128xf32>
    %405 = arith.addf %402, %404 : vector<48x128xf32>
    %c0_194 = arith.constant 0 : index
    %c0_195 = arith.constant 0 : index
    %406 = vector.load %arg32[%c0_194, %c0_195] : memref<48x128xf32, #tpu.memory_space<vmem>>, vector<48x128xf32>
    tpu.vector_store %arg32[%c0_194, %c0_195], %405 {strides = array<i32>} : memref<48x128xf32, #tpu.memory_space<vmem>>, vector<48x128xf32>,
    return
  }
  func.func @transform_0(%arg0: i32) -> (i32, i32) {
    %c0_i32 = arith.constant 0 : i32
    %c0_i32_0 = arith.constant 0 : i32
    %c0_i32_1 = arith.constant 0 : i32
    return %c0_i32, %c0_i32_0 : i32, i32
  }
  func.func @transform_1(%arg0: i32) -> (i32, i32) {
    %c0_i32 = arith.constant 0 : i32
    %c0_i32_0 = arith.constant 0 : i32
    %c0_i32_1 = arith.constant 0 : i32
    return %c0_i32, %c0_i32_0 : i32, i32
  }
  func.func @transform_2(%arg0: i32) -> (i32, i32) {
    %c0_i32 = arith.constant 0 : i32
    %c0_i32_0 = arith.constant 0 : i32
    %c0_i32_1 = arith.constant 0 : i32
    return %c0_i32, %c0_i32_0 : i32, i32
  }
  func.func @transform_3(%arg0: i32) -> (i32, i32) {
    %c0_i32 = arith.constant 0 : i32
    %c0_i32_0 = arith.constant 0 : i32
    %c0_i32_1 = arith.constant 0 : i32
    return %c0_i32, %c0_i32_0 : i32, i32
  }
  func.func @transform_4(%arg0: i32) -> (i32, i32) {
    %c0_i32 = arith.constant 0 : i32
    %c0_i32_0 = arith.constant 0 : i32
    %c0_i32_1 = arith.constant 0 : i32
    return %c0_i32, %c0_i32_0 : i32, i32
  }
  func.func @transform_5(%arg0: i32) -> (i32, i32, i32) {
    %c0_i32 = arith.constant 0 : i32
    %c0_i32_0 = arith.constant 0 : i32
    %c0_i32_1 = arith.constant 0 : i32
    %c0_i32_2 = arith.constant 0 : i32
    return %c0_i32, %c0_i32_0, %c0_i32_1 : i32, i32, i32
  }
  func.func @transform_6(%arg0: i32) -> (i32, i32, i32) {
    %c0_i32 = arith.constant 0 : i32
    %c0_i32_0 = arith.constant 0 : i32
    %c0_i32_1 = arith.constant 0 : i32
    %c0_i32_2 = arith.constant 0 : i32
    return %c0_i32, %c0_i32_0, %c0_i32_1 : i32, i32, i32
  }
  func.func @transform_7(%arg0: i32) -> (i32, i32, i32) {
    %c0_i32 = arith.constant 0 : i32
    %c0_i32_0 = arith.constant 0 : i32
    %c0_i32_1 = arith.constant 0 : i32
    %c0_i32_2 = arith.constant 0 : i32
    return %c0_i32, %c0_i32_0, %c0_i32_1 : i32, i32, i32
  }
  func.func @transform_8(%arg0: i32) -> (i32, i32, i32) {
    %c0_i32 = arith.constant 0 : i32
    %c0_i32_0 = arith.constant 0 : i32
    %c0_i32_1 = arith.constant 0 : i32
    %c0_i32_2 = arith.constant 0 : i32
    return %c0_i32, %c0_i32_0, %c0_i32_1 : i32, i32, i32
  }
  func.func @transform_9(%arg0: i32) -> (i32, i32, i32) {
    %c0_i32 = arith.constant 0 : i32
    %c0_i32_0 = arith.constant 0 : i32
    %c0_i32_1 = arith.constant 0 : i32
    %c0_i32_2 = arith.constant 0 : i32
    return %c0_i32, %c0_i32_0, %c0_i32_1 : i32, i32, i32
  }
  func.func @transform_10(%arg0: i32) -> (i32, i32, i32) {
    %c0_i32 = arith.constant 0 : i32
    %c0_i32_0 = arith.constant 0 : i32
    %c0_i32_1 = arith.constant 0 : i32
    %c0_i32_2 = arith.constant 0 : i32
    return %c0_i32, %c0_i32_0, %c0_i32_1 : i32, i32, i32
  }
  func.func @transform_11(%arg0: i32) -> (i32, i32, i32) {
    %c0_i32 = arith.constant 0 : i32
    %c0_i32_0 = arith.constant 0 : i32
    %c0_i32_1 = arith.constant 0 : i32
    %c0_i32_2 = arith.constant 0 : i32
    return %c0_i32, %c0_i32_0, %c0_i32_1 : i32, i32, i32
  }
  func.func @transform_12(%arg0: i32) -> (i32, i32, i32) {
    %c0_i32 = arith.constant 0 : i32
    %c0_i32_0 = arith.constant 0 : i32
    %c0_i32_1 = arith.constant 0 : i32
    %c0_i32_2 = arith.constant 0 : i32
    return %c0_i32, %c0_i32_0, %c0_i32_1 : i32, i32, i32
  }
  func.func @transform_13(%arg0: i32) -> (i32, i32, i32) {
    %c0_i32 = arith.constant 0 : i32
    %c0_i32_0 = arith.constant 0 : i32
    %c0_i32_1 = arith.constant 0 : i32
    %c0_i32_2 = arith.constant 0 : i32
    return %c0_i32, %c0_i32_0, %c0_i32_1 : i32, i32, i32
  }
  func.func @transform_14(%arg0: i32) -> (i32, i32, i32) {
    %c0_i32 = arith.constant 0 : i32
    %c0_i32_0 = arith.constant 0 : i32
    %c0_i32_1 = arith.constant 0 : i32
    %c0_i32_2 = arith.constant 0 : i32
    return %c0_i32, %c0_i32_0, %c0_i32_1 : i32, i32, i32
  }
  func.func @transform_15(%arg0: i32) -> (i32, i32, i32) {
    %c0_i32 = arith.constant 0 : i32
    %c0_i32_0 = arith.constant 0 : i32
    %c0_i32_1 = arith.constant 0 : i32
    %c0_i32_2 = arith.constant 0 : i32
    return %c0_i32, %c0_i32_0, %c0_i32_1 : i32, i32, i32
  }
  func.func @transform_16(%arg0: i32) -> (i32, i32, i32) {
    %c0_i32 = arith.constant 0 : i32
    %c0_i32_0 = arith.constant 0 : i32
    %c0_i32_1 = arith.constant 0 : i32
    %c0_i32_2 = arith.constant 0 : i32
    return %c0_i32, %c0_i32_0, %c0_i32_1 : i32, i32, i32
  }
  func.func @transform_17(%arg0: i32) -> (i32, i32, i32) {
    %c0_i32 = arith.constant 0 : i32
    %c0_i32_0 = arith.constant 0 : i32
    %c0_i32_1 = arith.constant 0 : i32
    %c0_i32_2 = arith.constant 0 : i32
    return %c0_i32, %c0_i32_0, %c0_i32_1 : i32, i32, i32
  }
  func.func @transform_18(%arg0: i32) -> (i32, i32, i32) {
    %c0_i32 = arith.constant 0 : i32
    %c0_i32_0 = arith.constant 0 : i32
    %c0_i32_1 = arith.constant 0 : i32
    %c0_i32_2 = arith.constant 0 : i32
    return %c0_i32, %c0_i32_0, %c0_i32_1 : i32, i32, i32
  }
  func.func @transform_19(%arg0: i32) -> (i32, i32, i32) {
    %c0_i32 = arith.constant 0 : i32
    %c0_i32_0 = arith.constant 0 : i32
    %c0_i32_1 = arith.constant 0 : i32
    %c0_i32_2 = arith.constant 0 : i32
    return %c0_i32, %c0_i32_0, %c0_i32_1 : i32, i32, i32
  }
  func.func @transform_20(%arg0: i32) -> (i32, i32, i32) {
    %c0_i32 = arith.constant 0 : i32
    %c0_i32_0 = arith.constant 0 : i32
    %c0_i32_1 = arith.constant 0 : i32
    %c0_i32_2 = arith.constant 0 : i32
    return %c0_i32, %c0_i32_0, %c0_i32_1 : i32, i32, i32
  }
  func.func @transform_21(%arg0: i32) -> (i32, i32, i32) {
    %c0_i32 = arith.constant 0 : i32
    %c0_i32_0 = arith.constant 0 : i32
    %c0_i32_1 = arith.constant 0 : i32
    %c0_i32_2 = arith.constant 0 : i32
    return %c0_i32, %c0_i32_0, %c0_i32_1 : i32, i32, i32
  }
  func.func @transform_22(%arg0: i32) -> (i32, i32, i32) {
    %c0_i32 = arith.constant 0 : i32
    %c0_i32_0 = arith.constant 0 : i32
    %c0_i32_1 = arith.constant 0 : i32
    %c0_i32_2 = arith.constant 0 : i32
    return %c0_i32, %c0_i32_0, %c0_i32_1 : i32, i32, i32
  }
  func.func @transform_23(%arg0: i32) -> (i32, i32) {
    %c0_i32 = arith.constant 0 : i32
    %c0_i32_0 = arith.constant 0 : i32
    %c0_i32_1 = arith.constant 0 : i32
    return %c0_i32, %c0_i32_0 : i32, i32
  }
  func.func @transform_24(%arg0: i32) -> (i32, i32) {
    %c0_i32 = arith.constant 0 : i32
    %c0_i32_0 = arith.constant 0 : i32
    %c0_i32_1 = arith.constant 0 : i32
    return %c0_i32, %c0_i32_0 : i32, i32
  }
  func.func @transform_25(%arg0: i32) -> (i32, i32) {
    %c0_i32 = arith.constant 0 : i32
    %c0_i32_0 = arith.constant 0 : i32
    %c0_i32_1 = arith.constant 0 : i32
    return %c0_i32, %c0_i32_0 : i32, i32
  }
  func.func @transform_26(%arg0: i32) -> (i32, i32) {
    %c0_i32 = arith.constant 0 : i32
    %c0_i32_0 = arith.constant 0 : i32
    %c0_i32_1 = arith.constant 0 : i32
    return %c0_i32, %c0_i32_0 : i32, i32
  }
  func.func @transform_27(%arg0: i32) -> (i32, i32) {
    %c0_i32 = arith.constant 0 : i32
    %c0_i32_0 = arith.constant 0 : i32
    %c0_i32_1 = arith.constant 0 : i32
    return %c0_i32, %c0_i32_0 : i32, i32
  }
  func.func @transform_28(%arg0: i32) -> (i32, i32) {
    %c0_i32 = arith.constant 0 : i32
    %c0_i32_0 = arith.constant 0 : i32
    %c0_i32_1 = arith.constant 0 : i32
    return %c0_i32, %c0_i32_0 : i32, i32
  }
  func.func @transform_29(%arg0: i32) -> (i32, i32) {
    %c0_i32 = arith.constant 0 : i32
    %c0_i32_0 = arith.constant 0 : i32
    %c0_i32_1 = arith.constant 0 : i32
    return %c0_i32, %c0_i32_0 : i32, i32
  }
  func.func @transform_30(%arg0: i32) -> (i32, i32) {
    %c0_i32 = arith.constant 0 : i32
    %c0_i32_0 = arith.constant 0 : i32
    %c0_i32_1 = arith.constant 0 : i32
    return %c0_i32, %c0_i32_0 : i32, i32
  }
  func.func @transform_31(%arg0: i32) -> (i32, i32) {
    %c0_i32 = arith.constant 0 : i32
    %c0_i32_0 = arith.constant 0 : i32
    %c0_i32_1 = arith.constant 0 : i32
    return %c0_i32, %c0_i32_0 : i32, i32
  }
}

</mosaic_0001>

<llo_original>
// kernel: dpx_dense_forward.1
$region0: #{dpx_dense_forward.1}
  #allocation0 [shape = 'u32[]', space=smem, size = 0x4, offset = 0x4, fixed_abs, tag = 'smem constant byte address 0x4 - core index']
  #allocation1 [shape = 'u32[144,128]{1,0:T(1,128)}', space=vmem, size = 0x12000, scoped, tag = 'internal scratch']
  %s0 = inlined_call_operand.smem [shape: u32[32], index: -1, kind: input, shape index: {}]
  %s1 = sld [smem:[%s0]]
  %s2 = scalar_lea.smem %s0, 1
  %s3 = sld [smem:[%s2]]
  %s4 = scalar_lea.smem %s0, 2
  %s5 = sld [smem:[%s4]]
  %s6 = scalar_lea.smem %s0, 3
  %s7 = sld [smem:[%s6]]
  %s8 = scalar_lea.smem %s0, 4
  %s9 = sld [smem:[%s8]]
  %s10 = scalar_lea.smem %s0, 5
  %s11 = sld [smem:[%s10]]
  %s12 = scalar_lea.smem %s0, 6
  %s13 = sld [smem:[%s12]]
  %s14 = scalar_lea.smem %s0, 7
  %s15 = sld [smem:[%s14]]
  %s16 = scalar_lea.smem %s0, 8
  %s17 = sld [smem:[%s16]]
  %s18 = scalar_lea.smem %s0, 9
  %s19 = sld [smem:[%s18]]
  %s20 = scalar_lea.smem %s0, 10
  %s21 = sld [smem:[%s20]]
  %s22 = scalar_lea.smem %s0, 11
  %s23 = sld [smem:[%s22]]
  %s24 = scalar_lea.smem %s0, 12
  %s25 = sld [smem:[%s24]]
  %s26 = scalar_lea.smem %s0, 13
  %s27 = sld [smem:[%s26]]
  %s28 = scalar_lea.smem %s0, 14
  %s29 = sld [smem:[%s28]]
  %s30 = scalar_lea.smem %s0, 15
  %s31 = sld [smem:[%s30]]
  %s32 = scalar_lea.smem %s0, 16
  %s33 = sld [smem:[%s32]]
  %s34 = scalar_lea.smem %s0, 17
  %s35 = sld [smem:[%s34]]
  %s36 = scalar_lea.smem %s0, 18
  %s37 = sld [smem:[%s36]]
  %s38 = scalar_lea.smem %s0, 19
  %s39 = sld [smem:[%s38]]
  %s40 = scalar_lea.smem %s0, 20
  %s41 = sld [smem:[%s40]]
  %s42 = scalar_lea.smem %s0, 21
  %s43 = sld [smem:[%s42]]
  %s44 = scalar_lea.smem %s0, 22
  %s45 = sld [smem:[%s44]]
  %s46 = scalar_lea.smem %s0, 23
  %s47 = sld [smem:[%s46]]
  %s48 = scalar_lea.smem %s0, 24
  %s49 = sld [smem:[%s48]]
  %s50 = scalar_lea.smem %s0, 25
  %s51 = sld [smem:[%s50]]
  %s52 = scalar_lea.smem %s0, 26
  %s53 = sld [smem:[%s52]]
  %s54 = scalar_lea.smem %s0, 27
  %s55 = sld [smem:[%s54]]
  %s56 = scalar_lea.smem %s0, 28
  %s57 = sld [smem:[%s56]]
  %s58 = scalar_lea.smem %s0, 29
  %s59 = sld [smem:[%s58]]
  %s60 = scalar_lea.smem %s0, 30
  %s61 = sld [smem:[%s60]]
  %s62 = scalar_lea.smem %s0, 31
  %s63 = sld [smem:[%s62]]
  %s64 = sld [smem:[#allocation0]]
  $region134: #{dpx_dense_forward.1} parent=0
    _
  %s66 = ssub.s32 1, %s64
  %s67 = scalar_select 0, %s66, %s64
  // Predicated region
  $region2: #{dpx_dense_forward.1} parent=0 // pred_check
    _
  $region3: #{dpx_dense_forward.1} parent=0 // pred_check_branch
    %69 = sbr.rel (0) target = $region5
  $region4: #{dpx_dense_forward.1} parent=0 // pred_region
    _
  $region5: #{dpx_dense_forward.1} parent=0 // pred_fallthru
    _
  // Predicated region
  $region6: #{dpx_dense_forward.1} parent=0 // pred_check
    _
  $region7: #{dpx_dense_forward.1} parent=0 // pred_check_branch
    %71 = sbr.rel (0) target = $region9
  $region8: #{dpx_dense_forward.1} parent=0 // pred_region
    _
  $region9: #{dpx_dense_forward.1} parent=0 // pred_fallthru
    _
  // Predicated region
  $region10: #{dpx_dense_forward.1} parent=0 // pred_check
    _
  $region11: #{dpx_dense_forward.1} parent=0 // pred_check_branch
    %73 = sbr.rel (0) target = $region13
  $region12: #{dpx_dense_forward.1} parent=0 // pred_region
    _
  $region13: #{dpx_dense_forward.1} parent=0 // pred_fallthru
    _
  // Predicated region
  $region14: #{dpx_dense_forward.1} parent=0 // pred_check
    _
  $region15: #{dpx_dense_forward.1} parent=0 // pred_check_branch
    %75 = sbr.rel (0) target = $region17
  $region16: #{dpx_dense_forward.1} parent=0 // pred_region
    _
  $region17: #{dpx_dense_forward.1} parent=0 // pred_fallthru
    _
  // Predicated region
  $region18: #{dpx_dense_forward.1} parent=0 // pred_check
    _
  $region19: #{dpx_dense_forward.1} parent=0 // pred_check_branch
    %77 = sbr.rel (0) target = $region21
  $region20: #{dpx_dense_forward.1} parent=0 // pred_region
    _
  $region21: #{dpx_dense_forward.1} parent=0 // pred_fallthru
    _
  // Predicated region
  $region22: #{dpx_dense_forward.1} parent=0 // pred_check
    _
  $region23: #{dpx_dense_forward.1} parent=0 // pred_check_branch
    %79 = sbr.rel (0) target = $region25
  $region24: #{dpx_dense_forward.1} parent=0 // pred_region
    _
  $region25: #{dpx_dense_forward.1} parent=0 // pred_fallthru
    _
  // Predicated region
  $region26: #{dpx_dense_forward.1} parent=0 // pred_check
    _
  $region27: #{dpx_dense_forward.1} parent=0 // pred_check_branch
    %81 = sbr.rel (0) target = $region29
  $region28: #{dpx_dense_forward.1} parent=0 // pred_region
    _
  $region29: #{dpx_dense_forward.1} parent=0 // pred_fallthru
    _
  // Predicated region
  $region30: #{dpx_dense_forward.1} parent=0 // pred_check
    _
  $region31: #{dpx_dense_forward.1} parent=0 // pred_check_branch
    %83 = sbr.rel (0) target = $region33
  $region32: #{dpx_dense_forward.1} parent=0 // pred_region
    _
  $region33: #{dpx_dense_forward.1} parent=0 // pred_fallthru
    _
  // Predicated region
  $region34: #{dpx_dense_forward.1} parent=0 // pred_check
    _
  $region35: #{dpx_dense_forward.1} parent=0 // pred_check_branch
    %85 = sbr.rel (0) target = $region37
  $region36: #{dpx_dense_forward.1} parent=0 // pred_region
    _
  $region37: #{dpx_dense_forward.1} parent=0 // pred_fallthru
    _
  // Predicated region
  $region38: #{dpx_dense_forward.1} parent=0 // pred_check
    _
  $region39: #{dpx_dense_forward.1} parent=0 // pred_check_branch
    %87 = sbr.rel (0) target = $region41
  $region40: #{dpx_dense_forward.1} parent=0 // pred_region
    _
  $region41: #{dpx_dense_forward.1} parent=0 // pred_fallthru
    _
  // Predicated region
  $region42: #{dpx_dense_forward.1} parent=0 // pred_check
    _
  $region43: #{dpx_dense_forward.1} parent=0 // pred_check_branch
    %89 = sbr.rel (0) target = $region45
  $region44: #{dpx_dense_forward.1} parent=0 // pred_region
    _
  $region45: #{dpx_dense_forward.1} parent=0 // pred_fallthru
    _
  // Predicated region
  $region46: #{dpx_dense_forward.1} parent=0 // pred_check
    _
  $region47: #{dpx_dense_forward.1} parent=0 // pred_check_branch
    %91 = sbr.rel (0) target = $region49
  $region48: #{dpx_dense_forward.1} parent=0 // pred_region
    _
  $region49: #{dpx_dense_forward.1} parent=0 // pred_fallthru
    _
  // Predicated region
  $region50: #{dpx_dense_forward.1} parent=0 // pred_check
    _
  $region51: #{dpx_dense_forward.1} parent=0 // pred_check_branch
    %93 = sbr.rel (0) target = $region53
  $region52: #{dpx_dense_forward.1} parent=0 // pred_region
    _
  $region53: #{dpx_dense_forward.1} parent=0 // pred_fallthru
    _
  // Predicated region
  $region54: #{dpx_dense_forward.1} parent=0 // pred_check
    _
  $region55: #{dpx_dense_forward.1} parent=0 // pred_check_branch
    %95 = sbr.rel (0) target = $region57
  $region56: #{dpx_dense_forward.1} parent=0 // pred_region
    _
  $region57: #{dpx_dense_forward.1} parent=0 // pred_fallthru
    _
  // Predicated region
  $region58: #{dpx_dense_forward.1} parent=0 // pred_check
    _
  $region59: #{dpx_dense_forward.1} parent=0 // pred_check_branch
    %97 = sbr.rel (0) target = $region61
  $region60: #{dpx_dense_forward.1} parent=0 // pred_region
    _
  $region61: #{dpx_dense_forward.1} parent=0 // pred_fallthru
    _
  // Predicated region
  $region62: #{dpx_dense_forward.1} parent=0 // pred_check
    _
  $region63: #{dpx_dense_forward.1} parent=0 // pred_check_branch
    %99 = sbr.rel (0) target = $region65
  $region64: #{dpx_dense_forward.1} parent=0 // pred_region
    _
  $region65: #{dpx_dense_forward.1} parent=0 // pred_fallthru
    _
  // Predicated region
  $region66: #{dpx_dense_forward.1} parent=0 // pred_check
    _
  $region67: #{dpx_dense_forward.1} parent=0 // pred_check_branch
    %101 = sbr.rel (0) target = $region69
  $region68: #{dpx_dense_forward.1} parent=0 // pred_region
    _
  $region69: #{dpx_dense_forward.1} parent=0 // pred_fallthru
    _
  // Predicated region
  $region70: #{dpx_dense_forward.1} parent=0 // pred_check
    _
  $region71: #{dpx_dense_forward.1} parent=0 // pred_check_branch
    %103 = sbr.rel (0) target = $region73
  $region72: #{dpx_dense_forward.1} parent=0 // pred_region
    _
  $region73: #{dpx_dense_forward.1} parent=0 // pred_fallthru
    _
  // Predicated region
  $region74: #{dpx_dense_forward.1} parent=0 // pred_check
    _
  $region75: #{dpx_dense_forward.1} parent=0 // pred_check_branch
    %105 = sbr.rel (0) target = $region77
  $region76: #{dpx_dense_forward.1} parent=0 // pred_region
    _
  $region77: #{dpx_dense_forward.1} parent=0 // pred_fallthru
    _
  // Predicated region
  $region78: #{dpx_dense_forward.1} parent=0 // pred_check
    _
  $region79: #{dpx_dense_forward.1} parent=0 // pred_check_branch
    %107 = sbr.rel (0) target = $region81
  $region80: #{dpx_dense_forward.1} parent=0 // pred_region
    _
  $region81: #{dpx_dense_forward.1} parent=0 // pred_fallthru
    _
  // Predicated region
  $region82: #{dpx_dense_forward.1} parent=0 // pred_check
    _
  $region83: #{dpx_dense_forward.1} parent=0 // pred_check_branch
    %109 = sbr.rel (0) target = $region85
  $region84: #{dpx_dense_forward.1} parent=0 // pred_region
    _
  $region85: #{dpx_dense_forward.1} parent=0 // pred_fallthru
    _
  // Predicated region
  $region86: #{dpx_dense_forward.1} parent=0 // pred_check
    _
  $region87: #{dpx_dense_forward.1} parent=0 // pred_check_branch
    %111 = sbr.rel (0) target = $region89
  $region88: #{dpx_dense_forward.1} parent=0 // pred_region
    _
  $region89: #{dpx_dense_forward.1} parent=0 // pred_fallthru
    _
  // Predicated region
  $region90: #{dpx_dense_forward.1} parent=0 // pred_check
    _
  $region91: #{dpx_dense_forward.1} parent=0 // pred_check_branch
    %113 = sbr.rel (0) target = $region93
  $region92: #{dpx_dense_forward.1} parent=0 // pred_region
    _
  $region93: #{dpx_dense_forward.1} parent=0 // pred_fallthru
    _
  // Predicated region
  $region94: #{dpx_dense_forward.1} parent=0 // pred_check
    _
  $region95: #{dpx_dense_forward.1} parent=0 // pred_check_branch
    %115 = sbr.rel (0) target = $region97
  $region96: #{dpx_dense_forward.1} parent=0 // pred_region
    _
  $region97: #{dpx_dense_forward.1} parent=0 // pred_fallthru
    _
  // Predicated region
  $region98: #{dpx_dense_forward.1} parent=0 // pred_check
    _
  $region99: #{dpx_dense_forward.1} parent=0 // pred_check_branch
    %117 = sbr.rel (0) target = $region101
  $region100: #{dpx_dense_forward.1} parent=0 // pred_region
    _
  $region101: #{dpx_dense_forward.1} parent=0 // pred_fallthru
    _
  // Predicated region
  $region102: #{dpx_dense_forward.1} parent=0 // pred_check
    _
  $region103: #{dpx_dense_forward.1} parent=0 // pred_check_branch
    %119 = sbr.rel (0) target = $region105
  $region104: #{dpx_dense_forward.1} parent=0 // pred_region
    _
  $region105: #{dpx_dense_forward.1} parent=0 // pred_fallthru
    _
  // Predicated region
  $region106: #{dpx_dense_forward.1} parent=0 // pred_check
    _
  $region107: #{dpx_dense_forward.1} parent=0 // pred_check_branch
    %121 = sbr.rel (0) target = $region109
  $region108: #{dpx_dense_forward.1} parent=0 // pred_region
    _
  $region109: #{dpx_dense_forward.1} parent=0 // pred_fallthru
    _
  // Predicated region
  $region110: #{dpx_dense_forward.1} parent=0 // pred_check
    _
  $region111: #{dpx_dense_forward.1} parent=0 // pred_check_branch
    %123 = sbr.rel (0) target = $region113
  $region112: #{dpx_dense_forward.1} parent=0 // pred_region
    _
  $region113: #{dpx_dense_forward.1} parent=0 // pred_fallthru
    _
  // Predicated region
  $region114: #{dpx_dense_forward.1} parent=0 // pred_check
    _
  $region115: #{dpx_dense_forward.1} parent=0 // pred_check_branch
    %125 = sbr.rel (0) target = $region117
  $region116: #{dpx_dense_forward.1} parent=0 // pred_region
    _
  $region117: #{dpx_dense_forward.1} parent=0 // pred_fallthru
    _
  // Predicated region
  $region118: #{dpx_dense_forward.1} parent=0 // pred_check
    _
  $region119: #{dpx_dense_forward.1} parent=0 // pred_check_branch
    %127 = sbr.rel (0) target = $region121
  $region120: #{dpx_dense_forward.1} parent=0 // pred_region
    _
  $region121: #{dpx_dense_forward.1} parent=0 // pred_fallthru
    _
  // Predicated region
  $region122: #{dpx_dense_forward.1} parent=0 // pred_check
    _
  $region123: #{dpx_dense_forward.1} parent=0 // pred_check_branch
    %129 = sbr.rel (0) target = $region125
  $region124: #{dpx_dense_forward.1} parent=0 // pred_region
    _
  $region125: #{dpx_dense_forward.1} parent=0 // pred_fallthru
    _
  %v131 = vld [vmem:[%s7] sm:$0xf]
  %v132 = vld [vmem:[%s5] sm:$0xff]
  %v133 = vld [vmem:[%s5 + $0x8] sm:$0xff]
  %v134 = vld [vmem:[%s5 + $0x10] sm:$0xff]
  %v135 = vld [vmem:[%s5 + $0x18] sm:$0xff]
  %v136 = vld [vmem:[%s5 + $0x20] sm:$0xff]
  %v137 = vld [vmem:[%s5 + $0x28] sm:$0xff]
  %v138 = vld [vmem:[%s5 + $0x30] sm:$0xff]
  %v139 = vld [vmem:[%s5 + $0x38] sm:$0xff]
  %v140 = vld [vmem:[%s5 + $0x40] sm:$0xff]
  %v141 = vld [vmem:[%s5 + $0x48] sm:$0xff]
  %v142 = vld [vmem:[%s5 + $0x50] sm:$0xff]
  %v143 = vld [vmem:[%s5 + $0x58] sm:$0xff]
  %v144 = vld [vmem:[%s5 + $0x60] sm:$0xff]
  %v145 = vld [vmem:[%s5 + $0x68] sm:$0xff]
  %v146 = vld [vmem:[%s5 + $0x70] sm:$0xff]
  %v147 = vld [vmem:[%s5 + $0x78] sm:$0xff]
  %v148 = vld [vmem:[%s5 + $0x80] sm:$0xff]
  %v149 = vld [vmem:[%s5 + $0x88] sm:$0xff]
  %v150 = vld [vmem:[%s5 + $0x90] sm:$0xff]
  %v151 = vld [vmem:[%s5 + $0x98] sm:$0xff]
  %v152 = vld [vmem:[%s5 + $0xa0] sm:$0xff]
  %v153 = vld [vmem:[%s5 + $0xa8] sm:$0xff]
  %v154 = vld [vmem:[%s5 + $0xb0] sm:$0xff]
  %v155 = vld [vmem:[%s5 + $0xb8] sm:$0xff]
  %v156 = vld [vmem:[%s1] sm:$0xf]
  %v157 = vld [vmem:[%s1 + $0x4] sm:$0xf]
  %v158 = vld [vmem:[%s1 + $0x8] sm:$0xf]
  %v159 = vld [vmem:[%s1 + $0xc] sm:$0xf]
  %v160 = vld [vmem:[%s1 + $0x10] sm:$0xf]
  %v161 = vld [vmem:[%s1 + $0x14] sm:$0xf]
  %v162 = vld [vmem:[%s9] sm:$0xf]
  %v163 = vld [vmem:[%s9 + $0x4] sm:$0xf]
  %v164 = vld [vmem:[%s9 + $0x8] sm:$0xf]
  %v165 = vld [vmem:[%s9 + $0xc] sm:$0xf]
  %v166 = vld [vmem:[%s9 + $0x10] sm:$0xf]
  %v167 = vld [vmem:[%s9 + $0x14] sm:$0xf]
  %v168 = vld [vmem:[%s3] sm:$0xff]
  %v169 = vld [vmem:[%s3 + $0x8] sm:$0xff]
  %v170 = vld [vmem:[%s3 + $0x10] sm:$0xff]
  %v171 = vld [vmem:[%s3 + $0x18] sm:$0xff]
  %v172 = vld [vmem:[%s3 + $0x20] sm:$0xff]
  %v173 = vld [vmem:[%s3 + $0x28] sm:$0xff]
  %v180 = vunpack.c.l.b16 %v156
  %v181 = vunpack.c.l.b16 %v157
  %v182 = vunpack.c.l.b16 %v158
  %v183 = vunpack.c.l.b16 %v159
  %v184 = vunpack.c.l.b16 %v160
  %v185 = vunpack.c.l.b16 %v161
  %v186 = vpack.c.b16 %v181, %v180
  %v187 = vpack.c.b16 %v183, %v182
  %v188 = vpack.c.b16 %v185, %v184
  %v195 = vunpack.c.l.b16 %v162
  %v196 = vunpack.c.l.b16 %v163
  %v197 = vunpack.c.l.b16 %v164
  %v198 = vunpack.c.l.b16 %v165
  %v199 = vunpack.c.l.b16 %v166
  %v200 = vunpack.c.l.b16 %v167
  %v201 = vpack.c.b16 %v196, %v195
  %v202 = vpack.c.b16 %v198, %v197
  %v203 = vpack.c.b16 %v200, %v199
  %vm207 = vcmask 392192
  %v209 = vsel %vm207, %v186, 0
  %v212 = vsel %vm207, %v187, 0
  %v215 = vsel %vm207, %v188, 0
  %217 = vmatprep.subr.bf16.mxu0 0
  %218 = vmatpush1.bf16.msra.mxu0 0
  %219 = vmatprep.subr.bf16.mxu0 0
  %220 = vmatpush1.bf16.msra.mxu0 0
  %221 = vmatprep.subr.bf16.mxu0 0
  %222 = vmatpush1.bf16.msra.mxu0 0
  %223 = vmatprep.subr.bf16.mxu0 0
  %224 = vmatpush1.bf16.msra.mxu0 0
  %225 = vmatprep.subr.bf16.mxu0 0
  %226 = vmatpush1.bf16.msra.mxu0 0
  %227 = vmatprep.subr.bf16.mxu0 0
  %228 = vmatpush1.bf16.msra.mxu0 %v203
  %229 = vmatprep.subr.bf16.mxu0 0
  %230 = vmatpush1.bf16.msra.mxu0 %v202
  %231 = vmatprep.subr.bf16.mxu0 0
  %232 = vmatpush1.bf16.msra.mxu0 %v201
  %233 = vmatprep.subr.bf16.mxu0 0
  %234 = vmatpush2.bf16.msra.mxu0 0
  %235 = vmatprep.subr.bf16.mxu0 0
  %236 = vmatpush2.bf16.msra.mxu0 0
  %237 = vmatprep.subr.bf16.mxu0 0
  %238 = vmatpush2.bf16.msra.mxu0 0
  %239 = vmatprep.subr.bf16.mxu0 0
  %240 = vmatpush2.bf16.msra.mxu0 0
  %241 = vmatprep.subr.bf16.mxu0 0
  %242 = vmatpush2.bf16.msra.mxu0 0
  %243 = vmatprep.subr.bf16.mxu0 0
  %244 = vmatpush2.bf16.msra.mxu0 0
  %245 = vmatprep.subr.bf16.mxu0 0
  %246 = vmatpush2.bf16.msra.mxu0 0
  %247 = vmatprep.subr.bf16.mxu0 0
  %248 = vmatpush2.bf16.msra.mxu0 0
  %249 = vmatprep.mubr.bf16.mxu0 0
  %250 = vmatmul.mubr.bf16.gmra.mxu0 %v209
  %v251 = vpop.f32.mrf.mxu0
  %v252 = vadd.f32 %v168, %v251
  %v253 = vpop.f32.mrf.mxu0
  %v254 = vpop.f32.mrf.mxu0
  %v255 = vadd.f32 %v169, %v254
  %v256 = vpop.f32.mrf.mxu0
  %257 = vmatprep.mubr.bf16.mxu0 0
  %258 = vmatmul.mubr.bf16.gmra.mxu0 %v212
  %v259 = vpop.f32.mrf.mxu0
  %v260 = vadd.f32 %v170, %v259
  %v261 = vpop.f32.mrf.mxu0
  %v262 = vpop.f32.mrf.mxu0
  %v263 = vadd.f32 %v171, %v262
  %v264 = vpop.f32.mrf.mxu0
  %265 = vmatprep.mubr.bf16.mxu0 0
  %266 = vmatmul.mubr.bf16.gmra.mxu0 %v215
  %v267 = vpop.f32.mrf.mxu0
  %v268 = vadd.f32 %v172, %v267
  %v269 = vpop.f32.mrf.mxu0
  %v270 = vpop.f32.mrf.mxu0
  %v271 = vadd.f32 %v173, %v270
  %v272 = vpop.f32.mrf.mxu0
  %273 = vdwg.mxu0
  %v274 = vld [vmem:[%s11] sm:$0x1]
  %v275 = vld [vmem:[%s13] sm:$0x1]
  %vm276 = vcmask 261120
  %v277 = vsel %vm276, %v252, 0.0
  %278 = vadd.xlane.f32.xlu0 %v277
  %v279 = vpop.xlane.xlu0 %278
  %v280 = vsel %vm276, %v255, 0.0
  %281 = vadd.xlane.f32.xlu0 %v280
  %v282 = vpop.xlane.xlu0 %281
  %v283 = vsel %vm276, %v260, 0.0
  %284 = vadd.xlane.f32.xlu0 %v283
  %v285 = vpop.xlane.xlu0 %284
  %v286 = vsel %vm276, %v263, 0.0
  %287 = vadd.xlane.f32.xlu0 %v286
  %v288 = vpop.xlane.xlu0 %287
  %v289 = vsel %vm276, %v268, 0.0
  %290 = vadd.xlane.f32.xlu0 %v289
  %v291 = vpop.xlane.xlu0 %290
  %v292 = vsel %vm276, %v271, 0.0
  %293 = vadd.xlane.f32.xlu0 %v292
  %v294 = vpop.xlane.xlu0 %293
  %v295 = vrcp.pop 32.0
  %v296 = vmul.f32 %v279, %v295
  %v297 = vmul.f32 %v282, %v295
  %v298 = vmul.f32 %v285, %v295
  %v299 = vmul.f32 %v288, %v295
  %v300 = vmul.f32 %v291, %v295
  %v301 = vmul.f32 %v294, %v295
  %v302 = vsub.f32 %v252, %v296
  %v303 = vsub.f32 %v255, %v297
  %v304 = vsub.f32 %v260, %v298
  %v305 = vsub.f32 %v263, %v299
  %v306 = vsub.f32 %v268, %v300
  %v307 = vsub.f32 %v271, %v301
  %v308 = vmul.f32 %v302, %v302
  %v309 = vmul.f32 %v303, %v303
  %v310 = vmul.f32 %v304, %v304
  %v311 = vmul.f32 %v305, %v305
  %v312 = vmul.f32 %v306, %v306
  %v313 = vmul.f32 %v307, %v307
  %v314 = vsel %vm276, %v308, 0.0
  %315 = vadd.xlane.f32.xlu0 %v314
  %v316 = vpop.xlane.xlu0 %315
  %v317 = vsel %vm276, %v309, 0.0
  %318 = vadd.xlane.f32.xlu0 %v317
  %v319 = vpop.xlane.xlu0 %318
  %v320 = vsel %vm276, %v310, 0.0
  %321 = vadd.xlane.f32.xlu0 %v320
  %v322 = vpop.xlane.xlu0 %321
  %v323 = vsel %vm276, %v311, 0.0
  %324 = vadd.xlane.f32.xlu0 %v323
  %v325 = vpop.xlane.xlu0 %324
  %v326 = vsel %vm276, %v312, 0.0
  %327 = vadd.xlane.f32.xlu0 %v326
  %v328 = vpop.xlane.xlu0 %327
  %v329 = vsel %vm276, %v313, 0.0
  %330 = vadd.xlane.f32.xlu0 %v329
  %v331 = vpop.xlane.xlu0 %330
  %v332 = vmul.f32 %v316, %v295
  %v333 = vmul.f32 %v319, %v295
  %v334 = vmul.f32 %v322, %v295
  %v335 = vmul.f32 %v325, %v295
  %v336 = vmul.f32 %v328, %v295
  %v337 = vmul.f32 %v331, %v295
  %v338 = vadd.f32 %v332, 1e-05
  %v339 = vadd.f32 %v333, 1e-05
  %v340 = vadd.f32 %v334, 1e-05
  %v341 = vadd.f32 %v335, 1e-05
  %v342 = vadd.f32 %v336, 1e-05
  %v343 = vadd.f32 %v337, 1e-05
  %v344 = vrsqrt.pop %v338
  %v345 = vrsqrt.pop %v339
  %v346 = vrsqrt.pop %v340
  %v347 = vrsqrt.pop %v341
  %v348 = vrsqrt.pop %v342
  %v349 = vrsqrt.pop %v343
  %v350 = vmul.f32 %v302, %v344
  %v351 = vmul.f32 %v303, %v345
  %v352 = vmul.f32 %v304, %v346
  %v353 = vmul.f32 %v305, %v347
  %v354 = vmul.f32 %v306, %v348
  %v355 = vmul.f32 %v307, %v349
  %v357 = vlaneseq
  %v358 = vshrl.u32 %v357, 7
  %v359 = vsub.s32 0, %v358
  %v360 = vrot.slane %v274, %v359
  %v362 = vmul.f32 %v350, %v360
  %v363 = vmul.f32 %v351, %v360
  %v364 = vmul.f32 %v352, %v360
  %v365 = vmul.f32 %v353, %v360
  %v366 = vmul.f32 %v354, %v360
  %v367 = vmul.f32 %v355, %v360
  %v369 = vlaneseq
  %v370 = vshrl.u32 %v369, 7
  %v371 = vsub.s32 0, %v370
  %v372 = vrot.slane %v275, %v371
  %v374 = vadd.f32 %v362, %v372
  %v375 = vadd.f32 %v363, %v372
  %v376 = vadd.f32 %v364, %v372
  %v377 = vadd.f32 %v365, %v372
  %v378 = vadd.f32 %v366, %v372
  %v379 = vadd.f32 %v367, %v372
  %v380 = vpack.c.bf16 %v375, %v374
  %v381 = vpack.c.bf16 %v377, %v376
  %v382 = vpack.c.bf16 %v379, %v378
  %v383 = vld [vmem:[%s15] sm:$0xf]
  %v384 = vld [vmem:[%s15 + $0x4] sm:$0xf]
  %v385 = vld [vmem:[%s15 + $0x8] sm:$0xf]
  %v386 = vld [vmem:[%s15 + $0xc] sm:$0xf]
  %v387 = vld [vmem:[%s17] sm:$0x1]
  %v389 = vlaneseq
  %v390 = vshrl.u32 %v389, 7
  %v391 = vsub.s32 0, %v390
  %v392 = vrot.slane %v387, %v391
  %v398 = vunpack.c.l.b16 %v383
  %v399 = vunpack.c.l.b16 %v384
  %v400 = vunpack.c.l.b16 %v385
  %v401 = vunpack.c.l.b16 %v386
  %v402 = vpack.c.b16 %v399, %v398
  %v403 = vpack.c.b16 %v401, %v400
  %v407 = vsel %vm276, %v380, 0
  %v410 = vsel %vm276, %v381, 0
  %v413 = vsel %vm276, %v382, 0
  %415 = vmatprep.subr.bf16.mxu0 0
  %416 = vmatpush1.bf16.msra.mxu0 0
  %417 = vmatprep.subr.bf16.mxu0 0
  %418 = vmatpush1.bf16.msra.mxu0 0
  %419 = vmatprep.subr.bf16.mxu0 0
  %420 = vmatpush1.bf16.msra.mxu0 0
  %421 = vmatprep.subr.bf16.mxu0 0
  %422 = vmatpush1.bf16.msra.mxu0 0
  %423 = vmatprep.subr.bf16.mxu0 0
  %424 = vmatpush1.bf16.msra.mxu0 0
  %425 = vmatprep.subr.bf16.mxu0 0
  %426 = vmatpush1.bf16.msra.mxu0 0
  %427 = vmatprep.subr.bf16.mxu0 0
  %428 = vmatpush1.bf16.msra.mxu0 %v403
  %429 = vmatprep.subr.bf16.mxu0 0
  %430 = vmatpush1.bf16.msra.mxu0 %v402
  %431 = vmatprep.subr.bf16.mxu0 0
  %432 = vmatpush2.bf16.msra.mxu0 0
  %433 = vmatprep.subr.bf16.mxu0 0
  %434 = vmatpush2.bf16.msra.mxu0 0
  %435 = vmatprep.subr.bf16.mxu0 0
  %436 = vmatpush2.bf16.msra.mxu0 0
  %437 = vmatprep.subr.bf16.mxu0 0
  %438 = vmatpush2.bf16.msra.mxu0 0
  %439 = vmatprep.subr.bf16.mxu0 0
  %440 = vmatpush2.bf16.msra.mxu0 0
  %441 = vmatprep.subr.bf16.mxu0 0
  %442 = vmatpush2.bf16.msra.mxu0 0
  %443 = vmatprep.subr.bf16.mxu0 0
  %444 = vmatpush2.bf16.msra.mxu0 0
  %445 = vmatprep.subr.bf16.mxu0 0
  %446 = vmatpush2.bf16.msra.mxu0 0
  %447 = vmatprep.mubr.bf16.mxu0 0
  %448 = vmatmul.mubr.bf16.gmra.mxu0 %v407
  %v449 = vpop.f32.mrf.mxu0
  %v450 = vadd.f32 %v392, %v449
  %v451 = vpop.f32.mrf.mxu0
  %v452 = vpop.f32.mrf.mxu0
  %v453 = vadd.f32 %v392, %v452
  %v454 = vpop.f32.mrf.mxu0
  %455 = vmatprep.mubr.bf16.mxu0 0
  %456 = vmatmul.mubr.bf16.gmra.mxu0 %v410
  %v457 = vpop.f32.mrf.mxu0
  %v458 = vadd.f32 %v392, %v457
  %v459 = vpop.f32.mrf.mxu0
  %v460 = vpop.f32.mrf.mxu0
  %v461 = vadd.f32 %v392, %v460
  %v462 = vpop.f32.mrf.mxu0
  %463 = vmatprep.mubr.bf16.mxu0 0
  %464 = vmatmul.mubr.bf16.gmra.mxu0 %v413
  %v465 = vpop.f32.mrf.mxu0
  %v466 = vadd.f32 %v392, %v465
  %v467 = vpop.f32.mrf.mxu0
  %v468 = vpop.f32.mrf.mxu0
  %v469 = vadd.f32 %v392, %v468
  %v470 = vpop.f32.mrf.mxu0
  %471 = vdwg.mxu0
  %v472 = vld [vmem:[%s19] sm:$0xf]
  %v473 = vld [vmem:[%s19 + $0x4] sm:$0xf]
  %v474 = vld [vmem:[%s19 + $0x8] sm:$0xf]
  %v475 = vld [vmem:[%s19 + $0xc] sm:$0xf]
  %v476 = vld [vmem:[%s21] sm:$0x1]
  %v478 = vlaneseq
  %v479 = vshrl.u32 %v478, 7
  %v480 = vsub.s32 0, %v479
  %v481 = vrot.slane %v476, %v480
  %v487 = vunpack.c.l.b16 %v472
  %v488 = vunpack.c.l.b16 %v473
  %v489 = vunpack.c.l.b16 %v474
  %v490 = vunpack.c.l.b16 %v475
  %v491 = vpack.c.b16 %v488, %v487
  %v492 = vpack.c.b16 %v490, %v489
  %495 = vmatprep.subr.bf16.mxu0 0
  %496 = vmatpush1.bf16.msra.mxu0 0
  %497 = vmatprep.subr.bf16.mxu0 0
  %498 = vmatpush1.bf16.msra.mxu0 0
  %499 = vmatprep.subr.bf16.mxu0 0
  %500 = vmatpush1.bf16.msra.mxu0 0
  %501 = vmatprep.subr.bf16.mxu0 0
  %502 = vmatpush1.bf16.msra.mxu0 0
  %503 = vmatprep.subr.bf16.mxu0 0
  %504 = vmatpush1.bf16.msra.mxu0 0
  %505 = vmatprep.subr.bf16.mxu0 0
  %506 = vmatpush1.bf16.msra.mxu0 0
  %507 = vmatprep.subr.bf16.mxu0 0
  %508 = vmatpush1.bf16.msra.mxu0 %v492
  %509 = vmatprep.subr.bf16.mxu0 0
  %510 = vmatpush1.bf16.msra.mxu0 %v491
  %511 = vmatprep.subr.bf16.mxu0 0
  %512 = vmatpush2.bf16.msra.mxu0 0
  %513 = vmatprep.subr.bf16.mxu0 0
  %514 = vmatpush2.bf16.msra.mxu0 0
  %515 = vmatprep.subr.bf16.mxu0 0
  %516 = vmatpush2.bf16.msra.mxu0 0
  %517 = vmatprep.subr.bf16.mxu0 0
  %518 = vmatpush2.bf16.msra.mxu0 0
  %519 = vmatprep.subr.bf16.mxu0 0
  %520 = vmatpush2.bf16.msra.mxu0 0
  %521 = vmatprep.subr.bf16.mxu0 0
  %522 = vmatpush2.bf16.msra.mxu0 0
  %523 = vmatprep.subr.bf16.mxu0 0
  %524 = vmatpush2.bf16.msra.mxu0 0
  %525 = vmatprep.subr.bf16.mxu0 0
  %526 = vmatpush2.bf16.msra.mxu0 0
  %527 = vmatprep.mubr.bf16.mxu0 0
  %528 = vmatmul.mubr.bf16.gmra.mxu0 %v407
  %v529 = vpop.f32.mrf.mxu0
  %v530 = vadd.f32 %v481, %v529
  %v531 = vpop.f32.mrf.mxu0
  %v532 = vpop.f32.mrf.mxu0
  %v533 = vadd.f32 %v481, %v532
  %v534 = vpop.f32.mrf.mxu0
  %535 = vmatprep.mubr.bf16.mxu0 0
  %536 = vmatmul.mubr.bf16.gmra.mxu0 %v410
  %v537 = vpop.f32.mrf.mxu0
  %v538 = vadd.f32 %v481, %v537
  %v539 = vpop.f32.mrf.mxu0
  %v540 = vpop.f32.mrf.mxu0
  %v541 = vadd.f32 %v481, %v540
  %v542 = vpop.f32.mrf.mxu0
  %543 = vmatprep.mubr.bf16.mxu0 0
  %544 = vmatmul.mubr.bf16.gmra.mxu0 %v413
  %v545 = vpop.f32.mrf.mxu0
  %v546 = vadd.f32 %v481, %v545
  %v547 = vpop.f32.mrf.mxu0
  %v548 = vpop.f32.mrf.mxu0
  %v549 = vadd.f32 %v481, %v548
  %v550 = vpop.f32.mrf.mxu0
  %551 = vdwg.mxu0
  %v552 = vld [vmem:[%s23] sm:$0xf]
  %v553 = vld [vmem:[%s23 + $0x4] sm:$0xf]
  %v554 = vld [vmem:[%s23 + $0x8] sm:$0xf]
  %v555 = vld [vmem:[%s23 + $0xc] sm:$0xf]
  %v556 = vld [vmem:[%s25] sm:$0x1]
  %v558 = vlaneseq
  %v559 = vshrl.u32 %v558, 7
  %v560 = vsub.s32 0, %v559
  %v561 = vrot.slane %v556, %v560
  %v567 = vunpack.c.l.b16 %v552
  %v568 = vunpack.c.l.b16 %v553
  %v569 = vunpack.c.l.b16 %v554
  %v570 = vunpack.c.l.b16 %v555
  %v571 = vpack.c.b16 %v568, %v567
  %v572 = vpack.c.b16 %v570, %v569
  %575 = vmatprep.subr.bf16.mxu0 0
  %576 = vmatpush1.bf16.msra.mxu0 0
  %577 = vmatprep.subr.bf16.mxu0 0
  %578 = vmatpush1.bf16.msra.mxu0 0
  %579 = vmatprep.subr.bf16.mxu0 0
  %580 = vmatpush1.bf16.msra.mxu0 0
  %581 = vmatprep.subr.bf16.mxu0 0
  %582 = vmatpush1.bf16.msra.mxu0 0
  %583 = vmatprep.subr.bf16.mxu0 0
  %584 = vmatpush1.bf16.msra.mxu0 0
  %585 = vmatprep.subr.bf16.mxu0 0
  %586 = vmatpush1.bf16.msra.mxu0 0
  %587 = vmatprep.subr.bf16.mxu0 0
  %588 = vmatpush1.bf16.msra.mxu0 %v572
  %589 = vmatprep.subr.bf16.mxu0 0
  %590 = vmatpush1.bf16.msra.mxu0 %v571
  %591 = vmatprep.subr.bf16.mxu0 0
  %592 = vmatpush2.bf16.msra.mxu0 0
  %593 = vmatprep.subr.bf16.mxu0 0
  %594 = vmatpush2.bf16.msra.mxu0 0
  %595 = vmatprep.subr.bf16.mxu0 0
  %596 = vmatpush2.bf16.msra.mxu0 0
  %597 = vmatprep.subr.bf16.mxu0 0
  %598 = vmatpush2.bf16.msra.mxu0 0
  %599 = vmatprep.subr.bf16.mxu0 0
  %600 = vmatpush2.bf16.msra.mxu0 0
  %601 = vmatprep.subr.bf16.mxu0 0
  %602 = vmatpush2.bf16.msra.mxu0 0
  %603 = vmatprep.subr.bf16.mxu0 0
  %604 = vmatpush2.bf16.msra.mxu0 0
  %605 = vmatprep.subr.bf16.mxu0 0
  %606 = vmatpush2.bf16.msra.mxu0 0
  %607 = vmatprep.mubr.bf16.mxu0 0
  %608 = vmatmul.mubr.bf16.gmra.mxu0 %v407
  %v609 = vpop.f32.mrf.mxu0
  %v610 = vadd.f32 %v561, %v609
  %v611 = vpop.f32.mrf.mxu0
  %v612 = vpop.f32.mrf.mxu0
  %v613 = vadd.f32 %v561, %v612
  %v614 = vpop.f32.mrf.mxu0
  %615 = vmatprep.mubr.bf16.mxu0 0
  %616 = vmatmul.mubr.bf16.gmra.mxu0 %v410
  %v617 = vpop.f32.mrf.mxu0
  %v618 = vadd.f32 %v561, %v617
  %v619 = vpop.f32.mrf.mxu0
  %v620 = vpop.f32.mrf.mxu0
  %v621 = vadd.f32 %v561, %v620
  %v622 = vpop.f32.mrf.mxu0
  %623 = vmatprep.mubr.bf16.mxu0 0
  %624 = vmatmul.mubr.bf16.gmra.mxu0 %v413
  %v625 = vpop.f32.mrf.mxu0
  %v626 = vadd.f32 %v561, %v625
  %v627 = vpop.f32.mrf.mxu0
  %v628 = vpop.f32.mrf.mxu0
  %v629 = vadd.f32 %v561, %v628
  %v630 = vpop.f32.mrf.mxu0
  %631 = vdwg.mxu0
  %v632 = vmul.f32 %v450, 0.35355338
  %v633 = vmul.f32 %v453, 0.35355338
  %v634 = vmul.f32 %v458, 0.35355338
  %v635 = vmul.f32 %v461, 0.35355338
  %v636 = vmul.f32 %v466, 0.35355338
  %v637 = vmul.f32 %v469, 0.35355338
  %v638 = vlaneseq
  %v639 = vshrl.u32 %v638, 7
  %v640 = vsub.s32 0, %v639
  %v641 = vrot.slane %v131, %v640
  %v642 = vmul.f32 %v632, %v641
  %v643 = vmul.f32 %v633, %v641
  %v644 = vmul.f32 %v634, %v641
  %v645 = vmul.f32 %v635, %v641
  %v646 = vmul.f32 %v636, %v641
  %v647 = vmul.f32 %v637, %v641
  %v648 = vlaneseq
  %v649 = vshrl.u32 %v648, 7
  %v650 = vsub.s32 1, %v649
  %v651 = vrot.slane %v131, %v650
  %v652 = vmul.f32 %v632, %v651
  %v653 = vmul.f32 %v633, %v651
  %v654 = vmul.f32 %v634, %v651
  %v655 = vmul.f32 %v635, %v651
  %v656 = vmul.f32 %v636, %v651
  %v657 = vmul.f32 %v637, %v651
  %v658 = vlaneseq
  %v659 = vshrl.u32 %v658, 7
  %v660 = vsub.s32 2, %v659
  %v661 = vrot.slane %v131, %v660
  %v662 = vmul.f32 %v632, %v661
  %v663 = vmul.f32 %v633, %v661
  %v664 = vmul.f32 %v634, %v661
  %v665 = vmul.f32 %v635, %v661
  %v666 = vmul.f32 %v636, %v661
  %v667 = vmul.f32 %v637, %v661
  %v668 = vlaneseq
  %v669 = vshrl.u32 %v668, 7
  %v670 = vsub.s32 3, %v669
  %v671 = vrot.slane %v131, %v670
  %v672 = vmul.f32 %v632, %v671
  %v673 = vmul.f32 %v633, %v671
  %v674 = vmul.f32 %v634, %v671
  %v675 = vmul.f32 %v635, %v671
  %v676 = vmul.f32 %v636, %v671
  %v677 = vmul.f32 %v637, %v671
  %v678 = vpack.c.bf16 %v643, %v642
  %v679 = vpack.c.bf16 %v645, %v644
  %v680 = vpack.c.bf16 %v647, %v646
  %v681 = vpack.c.bf16 %v653, %v652
  %v682 = vpack.c.bf16 %v655, %v654
  %v683 = vpack.c.bf16 %v657, %v656
  %v684 = vpack.c.bf16 %v663, %v662
  %v685 = vpack.c.bf16 %v665, %v664
  %v686 = vpack.c.bf16 %v667, %v666
  %v687 = vpack.c.bf16 %v673, %v672
  %v688 = vpack.c.bf16 %v675, %v674
  %v689 = vpack.c.bf16 %v677, %v676
  %v690 = vpack.c.bf16 %v533, %v530
  %v691 = vpack.c.bf16 %v541, %v538
  %v692 = vpack.c.bf16 %v549, %v546
  %v694 = vsel %vm276, %v678, 0
  %v697 = vsel %vm276, %v679, 0
  %v700 = vsel %vm276, %v680, 0
  %v703 = vsel %vm276, %v681, 0
  %v706 = vsel %vm276, %v682, 0
  %v709 = vsel %vm276, %v683, 0
  %v712 = vsel %vm276, %v684, 0
  %v715 = vsel %vm276, %v685, 0
  %v718 = vsel %vm276, %v686, 0
  %v721 = vsel %vm276, %v687, 0
  %v724 = vsel %vm276, %v688, 0
  %v727 = vsel %vm276, %v689, 0
  %v730 = vsel %vm276, %v690, 0
  %v733 = vsel %vm276, %v691, 0
  %v736 = vsel %vm276, %v692, 0
  %738 = vmatprep.subr.bf16.mxu0 0
  %739 = vmatpush1.bf16.xpose.msra.mxu0 0
  %740 = vmatprep.subr.bf16.mxu0 0
  %741 = vmatpush1.bf16.xpose.msra.mxu0 0
  %742 = vmatprep.subr.bf16.mxu0 0
  %743 = vmatpush1.bf16.xpose.msra.mxu0 0
  %744 = vmatprep.subr.bf16.mxu0 0
  %745 = vmatpush1.bf16.xpose.msra.mxu0 0
  %746 = vmatprep.subr.bf16.mxu0 0
  %747 = vmatpush1.bf16.xpose.msra.mxu0 0
  %748 = vmatprep.subr.bf16.mxu0 0
  %749 = vmatpush1.bf16.xpose.msra.mxu0 %v736
  %750 = vmatprep.subr.bf16.mxu0 0
  %751 = vmatpush1.bf16.xpose.msra.mxu0 %v733
  %752 = vmatprep.subr.bf16.mxu0 0
  %753 = vmatpush1.bf16.xpose.msra.mxu0 %v730
  %754 = vmatprep.subr.bf16.mxu0 0
  %755 = vmatpush2.bf16.xpose.msra.mxu0 0
  %756 = vmatprep.subr.bf16.mxu0 0
  %757 = vmatpush2.bf16.xpose.msra.mxu0 0
  %758 = vmatprep.subr.bf16.mxu0 0
  %759 = vmatpush2.bf16.xpose.msra.mxu0 0
  %760 = vmatprep.subr.bf16.mxu0 0
  %761 = vmatpush2.bf16.xpose.msra.mxu0 0
  %762 = vmatprep.subr.bf16.mxu0 0
  %763 = vmatpush2.bf16.xpose.msra.mxu0 0
  %764 = vmatprep.subr.bf16.mxu0 0
  %765 = vmatpush2.bf16.xpose.msra.mxu0 0
  %766 = vmatprep.subr.bf16.mxu0 0
  %767 = vmatpush2.bf16.xpose.msra.mxu0 0
  %768 = vmatprep.subr.bf16.mxu0 0
  %769 = vmatpush2.bf16.xpose.msra.mxu0 0
  %770 = vmatprep.mubr.bf16.mxu0 0
  %771 = vmatmul.mubr.bf16.gmra.mxu0 %v694
  %v772 = vpop.f32.mrf.mxu0
  %v773 = vadd.f32 %v132, %v772
  %v774 = vpop.f32.mrf.mxu0
  %v775 = vpop.f32.mrf.mxu0
  %v776 = vadd.f32 %v133, %v775
  %v777 = vpop.f32.mrf.mxu0
  %778 = vmatprep.mubr.bf16.mxu0 0
  %779 = vmatmul.mubr.bf16.gmra.mxu0 %v697
  %v780 = vpop.f32.mrf.mxu0
  %v781 = vadd.f32 %v134, %v780
  %v782 = vpop.f32.mrf.mxu0
  %v783 = vpop.f32.mrf.mxu0
  %v784 = vadd.f32 %v135, %v783
  %v785 = vpop.f32.mrf.mxu0
  %786 = vmatprep.mubr.bf16.mxu0 0
  %787 = vmatmul.mubr.bf16.gmra.mxu0 %v700
  %v788 = vpop.f32.mrf.mxu0
  %v789 = vadd.f32 %v136, %v788
  %v790 = vpop.f32.mrf.mxu0
  %v791 = vpop.f32.mrf.mxu0
  %v792 = vadd.f32 %v137, %v791
  %v793 = vpop.f32.mrf.mxu0
  %794 = vmatprep.mubr.bf16.mxu0 0
  %795 = vmatmul.mubr.bf16.gmra.mxu0 %v703
  %v796 = vpop.f32.mrf.mxu0
  %v797 = vadd.f32 %v138, %v796
  %v798 = vpop.f32.mrf.mxu0
  %v799 = vpop.f32.mrf.mxu0
  %v800 = vadd.f32 %v139, %v799
  %v801 = vpop.f32.mrf.mxu0
  %802 = vmatprep.mubr.bf16.mxu0 0
  %803 = vmatmul.mubr.bf16.gmra.mxu0 %v706
  %v804 = vpop.f32.mrf.mxu0
  %v805 = vadd.f32 %v140, %v804
  %v806 = vpop.f32.mrf.mxu0
  %v807 = vpop.f32.mrf.mxu0
  %v808 = vadd.f32 %v141, %v807
  %v809 = vpop.f32.mrf.mxu0
  %810 = vmatprep.mubr.bf16.mxu0 0
  %811 = vmatmul.mubr.bf16.gmra.mxu0 %v709
  %v812 = vpop.f32.mrf.mxu0
  %v813 = vadd.f32 %v142, %v812
  %v814 = vpop.f32.mrf.mxu0
  %v815 = vpop.f32.mrf.mxu0
  %v816 = vadd.f32 %v143, %v815
  %v817 = vpop.f32.mrf.mxu0
  %818 = vmatprep.mubr.bf16.mxu0 0
  %819 = vmatmul.mubr.bf16.gmra.mxu0 %v712
  %v820 = vpop.f32.mrf.mxu0
  %v821 = vadd.f32 %v144, %v820
  %v822 = vpop.f32.mrf.mxu0
  %v823 = vpop.f32.mrf.mxu0
  %v824 = vadd.f32 %v145, %v823
  %v825 = vpop.f32.mrf.mxu0
  %826 = vmatprep.mubr.bf16.mxu0 0
  %827 = vmatmul.mubr.bf16.gmra.mxu0 %v715
  %v828 = vpop.f32.mrf.mxu0
  %v829 = vadd.f32 %v146, %v828
  %v830 = vpop.f32.mrf.mxu0
  %v831 = vpop.f32.mrf.mxu0
  %v832 = vadd.f32 %v147, %v831
  %v833 = vpop.f32.mrf.mxu0
  %834 = vmatprep.mubr.bf16.mxu0 0
  %835 = vmatmul.mubr.bf16.gmra.mxu0 %v718
  %v836 = vpop.f32.mrf.mxu0
  %v837 = vadd.f32 %v148, %v836
  %v838 = vpop.f32.mrf.mxu0
  %v839 = vpop.f32.mrf.mxu0
  %v840 = vadd.f32 %v149, %v839
  %v841 = vpop.f32.mrf.mxu0
  %842 = vmatprep.mubr.bf16.mxu0 0
  %843 = vmatmul.mubr.bf16.gmra.mxu0 %v721
  %v844 = vpop.f32.mrf.mxu0
  %v845 = vadd.f32 %v150, %v844
  %v846 = vpop.f32.mrf.mxu0
  %v847 = vpop.f32.mrf.mxu0
  %v848 = vadd.f32 %v151, %v847
  %v849 = vpop.f32.mrf.mxu0
  %850 = vmatprep.mubr.bf16.mxu0 0
  %851 = vmatmul.mubr.bf16.gmra.mxu0 %v724
  %v852 = vpop.f32.mrf.mxu0
  %v853 = vadd.f32 %v152, %v852
  %v854 = vpop.f32.mrf.mxu0
  %v855 = vpop.f32.mrf.mxu0
  %v856 = vadd.f32 %v153, %v855
  %v857 = vpop.f32.mrf.mxu0
  %858 = vmatprep.mubr.bf16.mxu0 0
  %859 = vmatmul.mubr.bf16.gmra.mxu0 %v727
  %v860 = vpop.f32.mrf.mxu0
  %v861 = vadd.f32 %v154, %v860
  %v862 = vpop.f32.mrf.mxu0
  %v863 = vpop.f32.mrf.mxu0
  %v864 = vadd.f32 %v155, %v863
  %v865 = vpop.f32.mrf.mxu0
  %866 = vdwg.mxu0
  %v867 = vsel %vm207, %v773, -inf
  %868 = vmax.xlane.f32.xlu0 %v867
  %v869 = vpop.xlane.xlu0 %868
  %v870 = vsel %vm207, %v776, -inf
  %871 = vmax.xlane.f32.xlu0 %v870
  %v872 = vpop.xlane.xlu0 %871
  %v873 = vsel %vm207, %v781, -inf
  %874 = vmax.xlane.f32.xlu0 %v873
  %v875 = vpop.xlane.xlu0 %874
  %v876 = vsel %vm207, %v784, -inf
  %877 = vmax.xlane.f32.xlu0 %v876
  %v878 = vpop.xlane.xlu0 %877
  %v879 = vsel %vm207, %v789, -inf
  %880 = vmax.xlane.f32.xlu0 %v879
  %v881 = vpop.xlane.xlu0 %880
  %v882 = vsel %vm207, %v792, -inf
  %883 = vmax.xlane.f32.xlu0 %v882
  %v884 = vpop.xlane.xlu0 %883
  %v885 = vsel %vm207, %v797, -inf
  %886 = vmax.xlane.f32.xlu0 %v885
  %v887 = vpop.xlane.xlu0 %886
  %v888 = vsel %vm207, %v800, -inf
  %889 = vmax.xlane.f32.xlu0 %v888
  %v890 = vpop.xlane.xlu0 %889
  %v891 = vsel %vm207, %v805, -inf
  %892 = vmax.xlane.f32.xlu0 %v891
  %v893 = vpop.xlane.xlu0 %892
  %v894 = vsel %vm207, %v808, -inf
  %895 = vmax.xlane.f32.xlu0 %v894
  %v896 = vpop.xlane.xlu0 %895
  %v897 = vsel %vm207, %v813, -inf
  %898 = vmax.xlane.f32.xlu0 %v897
  %v899 = vpop.xlane.xlu0 %898
  %v900 = vsel %vm207, %v816, -inf
  %901 = vmax.xlane.f32.xlu0 %v900
  %v902 = vpop.xlane.xlu0 %901
  %v903 = vsel %vm207, %v821, -inf
  %904 = vmax.xlane.f32.xlu0 %v903
  %v905 = vpop.xlane.xlu0 %904
  %v906 = vsel %vm207, %v824, -inf
  %907 = vmax.xlane.f32.xlu0 %v906
  %v908 = vpop.xlane.xlu0 %907
  %v909 = vsel %vm207, %v829, -inf
  %910 = vmax.xlane.f32.xlu0 %v909
  %v911 = vpop.xlane.xlu0 %910
  %v912 = vsel %vm207, %v832, -inf
  %913 = vmax.xlane.f32.xlu0 %v912
  %v914 = vpop.xlane.xlu0 %913
  %v915 = vsel %vm207, %v837, -inf
  %916 = vmax.xlane.f32.xlu0 %v915
  %v917 = vpop.xlane.xlu0 %916
  %v918 = vsel %vm207, %v840, -inf
  %919 = vmax.xlane.f32.xlu0 %v918
  %v920 = vpop.xlane.xlu0 %919
  %v921 = vsel %vm207, %v845, -inf
  %922 = vmax.xlane.f32.xlu0 %v921
  %v923 = vpop.xlane.xlu0 %922
  %v924 = vsel %vm207, %v848, -inf
  %925 = vmax.xlane.f32.xlu0 %v924
  %v926 = vpop.xlane.xlu0 %925
  %v927 = vsel %vm207, %v853, -inf
  %928 = vmax.xlane.f32.xlu0 %v927
  %v929 = vpop.xlane.xlu0 %928
  %v930 = vsel %vm207, %v856, -inf
  %931 = vmax.xlane.f32.xlu0 %v930
  %v932 = vpop.xlane.xlu0 %931
  %v933 = vsel %vm207, %v861, -inf
  %934 = vmax.xlane.f32.xlu0 %v933
  %v935 = vpop.xlane.xlu0 %934
  %v936 = vsel %vm207, %v864, -inf
  %937 = vmax.xlane.f32.xlu0 %v936
  %v938 = vpop.xlane.xlu0 %937
  %v939 = vsub.f32 %v773, %v869
  %v940 = vsub.f32 %v776, %v872
  %v941 = vsub.f32 %v781, %v875
  %v942 = vsub.f32 %v784, %v878
  %v943 = vsub.f32 %v789, %v881
  %v944 = vsub.f32 %v792, %v884
  %v945 = vsub.f32 %v797, %v887
  %v946 = vsub.f32 %v800, %v890
  %v947 = vsub.f32 %v805, %v893
  %v948 = vsub.f32 %v808, %v896
  %v949 = vsub.f32 %v813, %v899
  %v950 = vsub.f32 %v816, %v902
  %v951 = vsub.f32 %v821, %v905
  %v952 = vsub.f32 %v824, %v908
  %v953 = vsub.f32 %v829, %v911
  %v954 = vsub.f32 %v832, %v914
  %v955 = vsub.f32 %v837, %v917
  %v956 = vsub.f32 %v840, %v920
  %v957 = vsub.f32 %v845, %v923
  %v958 = vsub.f32 %v848, %v926
  %v959 = vsub.f32 %v853, %v929
  %v960 = vsub.f32 %v856, %v932
  %v961 = vsub.f32 %v861, %v935
  %v962 = vsub.f32 %v864, %v938
  %v963 = vmul.f32 %v939, 1.442695
  %v964 = vpow.pop %v963
  %v965 = vmul.f32 %v940, 1.442695
  %v966 = vpow.pop %v965
  %v967 = vmul.f32 %v941, 1.442695
  %v968 = vpow.pop %v967
  %v969 = vmul.f32 %v942, 1.442695
  %v970 = vpow.pop %v969
  %v971 = vmul.f32 %v943, 1.442695
  %v972 = vpow.pop %v971
  %v973 = vmul.f32 %v944, 1.442695
  %v974 = vpow.pop %v973
  %v975 = vmul.f32 %v945, 1.442695
  %v976 = vpow.pop %v975
  %v977 = vmul.f32 %v946, 1.442695
  %v978 = vpow.pop %v977
  %v979 = vmul.f32 %v947, 1.442695
  %v980 = vpow.pop %v979
  %v981 = vmul.f32 %v948, 1.442695
  %v982 = vpow.pop %v981
  %v983 = vmul.f32 %v949, 1.442695
  %v984 = vpow.pop %v983
  %v985 = vmul.f32 %v950, 1.442695
  %v986 = vpow.pop %v985
  %v987 = vmul.f32 %v951, 1.442695
  %v988 = vpow.pop %v987
  %v989 = vmul.f32 %v952, 1.442695
  %v990 = vpow.pop %v989
  %v991 = vmul.f32 %v953, 1.442695
  %v992 = vpow.pop %v991
  %v993 = vmul.f32 %v954, 1.442695
  %v994 = vpow.pop %v993
  %v995 = vmul.f32 %v955, 1.442695
  %v996 = vpow.pop %v995
  %v997 = vmul.f32 %v956, 1.442695
  %v998 = vpow.pop %v997
  %v999 = vmul.f32 %v957, 1.442695
  %v1000 = vpow.pop %v999
  %v1001 = vmul.f32 %v958, 1.442695
  %v1002 = vpow.pop %v1001
  %v1003 = vmul.f32 %v959, 1.442695
  %v1004 = vpow.pop %v1003
  %v1005 = vmul.f32 %v960, 1.442695
  %v1006 = vpow.pop %v1005
  %v1007 = vmul.f32 %v961, 1.442695
  %v1008 = vpow.pop %v1007
  %v1009 = vmul.f32 %v962, 1.442695
  %v1010 = vpow.pop %v1009
  %v1011 = vsel %vm207, %v964, 0.0
  %1012 = vadd.xlane.f32.xlu0 %v1011
  %v1013 = vpop.xlane.xlu0 %1012
  %v1014 = vsel %vm207, %v966, 0.0
  %1015 = vadd.xlane.f32.xlu0 %v1014
  %v1016 = vpop.xlane.xlu0 %1015
  %v1017 = vsel %vm207, %v968, 0.0
  %1018 = vadd.xlane.f32.xlu0 %v1017
  %v1019 = vpop.xlane.xlu0 %1018
  %v1020 = vsel %vm207, %v970, 0.0
  %1021 = vadd.xlane.f32.xlu0 %v1020
  %v1022 = vpop.xlane.xlu0 %1021
  %v1023 = vsel %vm207, %v972, 0.0
  %1024 = vadd.xlane.f32.xlu0 %v1023
  %v1025 = vpop.xlane.xlu0 %1024
  %v1026 = vsel %vm207, %v974, 0.0
  %1027 = vadd.xlane.f32.xlu0 %v1026
  %v1028 = vpop.xlane.xlu0 %1027
  %v1029 = vsel %vm207, %v976, 0.0
  %1030 = vadd.xlane.f32.xlu0 %v1029
  %v1031 = vpop.xlane.xlu0 %1030
  %v1032 = vsel %vm207, %v978, 0.0
  %1033 = vadd.xlane.f32.xlu0 %v1032
  %v1034 = vpop.xlane.xlu0 %1033
  %v1035 = vsel %vm207, %v980, 0.0
  %1036 = vadd.xlane.f32.xlu0 %v1035
  %v1037 = vpop.xlane.xlu0 %1036
  %v1038 = vsel %vm207, %v982, 0.0
  %1039 = vadd.xlane.f32.xlu0 %v1038
  %v1040 = vpop.xlane.xlu0 %1039
  %v1041 = vsel %vm207, %v984, 0.0
  %1042 = vadd.xlane.f32.xlu0 %v1041
  %v1043 = vpop.xlane.xlu0 %1042
  %v1044 = vsel %vm207, %v986, 0.0
  %1045 = vadd.xlane.f32.xlu0 %v1044
  %v1046 = vpop.xlane.xlu0 %1045
  %v1047 = vsel %vm207, %v988, 0.0
  %1048 = vadd.xlane.f32.xlu0 %v1047
  %v1049 = vpop.xlane.xlu0 %1048
  %v1050 = vsel %vm207, %v990, 0.0
  %1051 = vadd.xlane.f32.xlu0 %v1050
  %v1052 = vpop.xlane.xlu0 %1051
  %v1053 = vsel %vm207, %v992, 0.0
  %1054 = vadd.xlane.f32.xlu0 %v1053
  %v1055 = vpop.xlane.xlu0 %1054
  %v1056 = vsel %vm207, %v994, 0.0
  %1057 = vadd.xlane.f32.xlu0 %v1056
  %v1058 = vpop.xlane.xlu0 %1057
  %v1059 = vsel %vm207, %v996, 0.0
  %1060 = vadd.xlane.f32.xlu0 %v1059
  %v1061 = vpop.xlane.xlu0 %1060
  %v1062 = vsel %vm207, %v998, 0.0
  %1063 = vadd.xlane.f32.xlu0 %v1062
  %v1064 = vpop.xlane.xlu0 %1063
  %v1065 = vsel %vm207, %v1000, 0.0
  %1066 = vadd.xlane.f32.xlu0 %v1065
  %v1067 = vpop.xlane.xlu0 %1066
  %v1068 = vsel %vm207, %v1002, 0.0
  %1069 = vadd.xlane.f32.xlu0 %v1068
  %v1070 = vpop.xlane.xlu0 %1069
  %v1071 = vsel %vm207, %v1004, 0.0
  %1072 = vadd.xlane.f32.xlu0 %v1071
  %v1073 = vpop.xlane.xlu0 %1072
  %v1074 = vsel %vm207, %v1006, 0.0
  %1075 = vadd.xlane.f32.xlu0 %v1074
  %v1076 = vpop.xlane.xlu0 %1075
  %v1077 = vsel %vm207, %v1008, 0.0
  %1078 = vadd.xlane.f32.xlu0 %v1077
  %v1079 = vpop.xlane.xlu0 %1078
  %v1080 = vsel %vm207, %v1010, 0.0
  %1081 = vadd.xlane.f32.xlu0 %v1080
  %v1082 = vpop.xlane.xlu0 %1081
  %v1083 = vrcp.pop %v1013
  %v1084 = vrcp.pop %v1016
  %v1085 = vrcp.pop %v1019
  %v1086 = vrcp.pop %v1022
  %v1087 = vrcp.pop %v1025
  %v1088 = vrcp.pop %v1028
  %v1089 = vrcp.pop %v1031
  %v1090 = vrcp.pop %v1034
  %v1091 = vrcp.pop %v1037
  %v1092 = vrcp.pop %v1040
  %v1093 = vrcp.pop %v1043
  %v1094 = vrcp.pop %v1046
  %v1095 = vrcp.pop %v1049
  %v1096 = vrcp.pop %v1052
  %v1097 = vrcp.pop %v1055
  %v1098 = vrcp.pop %v1058
  %v1099 = vrcp.pop %v1061
  %v1100 = vrcp.pop %v1064
  %v1101 = vrcp.pop %v1067
  %v1102 = vrcp.pop %v1070
  %v1103 = vrcp.pop %v1073
  %v1104 = vrcp.pop %v1076
  %v1105 = vrcp.pop %v1079
  %v1106 = vrcp.pop %v1082
  %v1107 = vmul.f32 %v964, %v1083
  %v1108 = vmul.f32 %v966, %v1084
  %v1109 = vmul.f32 %v968, %v1085
  %v1110 = vmul.f32 %v970, %v1086
  %v1111 = vmul.f32 %v972, %v1087
  %v1112 = vmul.f32 %v974, %v1088
  %v1113 = vmul.f32 %v976, %v1089
  %v1114 = vmul.f32 %v978, %v1090
  %v1115 = vmul.f32 %v980, %v1091
  %v1116 = vmul.f32 %v982, %v1092
  %v1117 = vmul.f32 %v984, %v1093
  %v1118 = vmul.f32 %v986, %v1094
  %v1119 = vmul.f32 %v988, %v1095
  %v1120 = vmul.f32 %v990, %v1096
  %v1121 = vmul.f32 %v992, %v1097
  %v1122 = vmul.f32 %v994, %v1098
  %v1123 = vmul.f32 %v996, %v1099
  %v1124 = vmul.f32 %v998, %v1100
  %v1125 = vmul.f32 %v1000, %v1101
  %v1126 = vmul.f32 %v1002, %v1102
  %v1127 = vmul.f32 %v1004, %v1103
  %v1128 = vmul.f32 %v1006, %v1104
  %v1129 = vmul.f32 %v1008, %v1105
  %v1130 = vmul.f32 %v1010, %v1106
  %v1131 = vpack.c.bf16 %v1108, %v1107
  %v1132 = vpack.c.bf16 %v1110, %v1109
  %v1133 = vpack.c.bf16 %v1112, %v1111
  %v1134 = vpack.c.bf16 %v1114, %v1113
  %v1135 = vpack.c.bf16 %v1116, %v1115
  %v1136 = vpack.c.bf16 %v1118, %v1117
  %v1137 = vpack.c.bf16 %v1120, %v1119
  %v1138 = vpack.c.bf16 %v1122, %v1121
  %v1139 = vpack.c.bf16 %v1124, %v1123
  %v1140 = vpack.c.bf16 %v1126, %v1125
  %v1141 = vpack.c.bf16 %v1128, %v1127
  %v1142 = vpack.c.bf16 %v1130, %v1129
  %v1143 = vpack.c.bf16 %v613, %v610
  %v1144 = vpack.c.bf16 %v621, %v618
  %v1145 = vpack.c.bf16 %v629, %v626
  %v1147 = vsel %vm207, %v1131, 0
  %v1150 = vsel %vm207, %v1132, 0
  %v1153 = vsel %vm207, %v1133, 0
  %v1156 = vsel %vm207, %v1134, 0
  %v1159 = vsel %vm207, %v1135, 0
  %v1162 = vsel %vm207, %v1136, 0
  %v1165 = vsel %vm207, %v1137, 0
  %v1168 = vsel %vm207, %v1138, 0
  %v1171 = vsel %vm207, %v1139, 0
  %v1174 = vsel %vm207, %v1140, 0
  %v1177 = vsel %vm207, %v1141, 0
  %v1180 = vsel %vm207, %v1142, 0
  %1182 = vmatprep.subr.bf16.mxu0 0
  %1183 = vmatpush1.bf16.msra.mxu0 0
  %1184 = vmatprep.subr.bf16.mxu0 0
  %1185 = vmatpush1.bf16.msra.mxu0 0
  %1186 = vmatprep.subr.bf16.mxu0 0
  %1187 = vmatpush1.bf16.msra.mxu0 0
  %1188 = vmatprep.subr.bf16.mxu0 0
  %1189 = vmatpush1.bf16.msra.mxu0 0
  %1190 = vmatprep.subr.bf16.mxu0 0
  %1191 = vmatpush1.bf16.msra.mxu0 0
  %1192 = vmatprep.subr.bf16.mxu0 0
  %1193 = vmatpush1.bf16.msra.mxu0 %v1145
  %1194 = vmatprep.subr.bf16.mxu0 0
  %1195 = vmatpush1.bf16.msra.mxu0 %v1144
  %1196 = vmatprep.subr.bf16.mxu0 0
  %1197 = vmatpush1.bf16.msra.mxu0 %v1143
  %1198 = vmatprep.subr.bf16.mxu0 0
  %1199 = vmatpush2.bf16.msra.mxu0 0
  %1200 = vmatprep.subr.bf16.mxu0 0
  %1201 = vmatpush2.bf16.msra.mxu0 0
  %1202 = vmatprep.subr.bf16.mxu0 0
  %1203 = vmatpush2.bf16.msra.mxu0 0
  %1204 = vmatprep.subr.bf16.mxu0 0
  %1205 = vmatpush2.bf16.msra.mxu0 0
  %1206 = vmatprep.subr.bf16.mxu0 0
  %1207 = vmatpush2.bf16.msra.mxu0 0
  %1208 = vmatprep.subr.bf16.mxu0 0
  %1209 = vmatpush2.bf16.msra.mxu0 0
  %1210 = vmatprep.subr.bf16.mxu0 0
  %1211 = vmatpush2.bf16.msra.mxu0 0
  %1212 = vmatprep.subr.bf16.mxu0 0
  %1213 = vmatpush2.bf16.msra.mxu0 0
  %1214 = vmatprep.mubr.bf16.mxu0 0
  %1215 = vmatmul.mubr.bf16.gmra.mxu0 %v1147
  %v1216 = vpop.f32.mrf.mxu0
  %v1217 = vadd.f32 0.0, %v1216
  %v1218 = vpop.f32.mrf.mxu0
  %v1219 = vpop.f32.mrf.mxu0
  %v1220 = vadd.f32 0.0, %v1219
  %v1221 = vpop.f32.mrf.mxu0
  %1222 = vmatprep.mubr.bf16.mxu0 0
  %1223 = vmatmul.mubr.bf16.gmra.mxu0 %v1150
  %v1224 = vpop.f32.mrf.mxu0
  %v1225 = vadd.f32 0.0, %v1224
  %v1226 = vpop.f32.mrf.mxu0
  %v1227 = vpop.f32.mrf.mxu0
  %v1228 = vadd.f32 0.0, %v1227
  %v1229 = vpop.f32.mrf.mxu0
  %1230 = vmatprep.mubr.bf16.mxu0 0
  %1231 = vmatmul.mubr.bf16.gmra.mxu0 %v1153
  %v1232 = vpop.f32.mrf.mxu0
  %v1233 = vadd.f32 0.0, %v1232
  %v1234 = vpop.f32.mrf.mxu0
  %v1235 = vpop.f32.mrf.mxu0
  %v1236 = vadd.f32 0.0, %v1235
  %v1237 = vpop.f32.mrf.mxu0
  %1238 = vmatprep.mubr.bf16.mxu0 0
  %1239 = vmatmul.mubr.bf16.gmra.mxu0 %v1156
  %v1240 = vpop.f32.mrf.mxu0
  %v1241 = vadd.f32 0.0, %v1240
  %v1242 = vpop.f32.mrf.mxu0
  %v1243 = vpop.f32.mrf.mxu0
  %v1244 = vadd.f32 0.0, %v1243
  %v1245 = vpop.f32.mrf.mxu0
  %1246 = vmatprep.mubr.bf16.mxu0 0
  %1247 = vmatmul.mubr.bf16.gmra.mxu0 %v1159
  %v1248 = vpop.f32.mrf.mxu0
  %v1249 = vadd.f32 0.0, %v1248
  %v1250 = vpop.f32.mrf.mxu0
  %v1251 = vpop.f32.mrf.mxu0
  %v1252 = vadd.f32 0.0, %v1251
  %v1253 = vpop.f32.mrf.mxu0
  %1254 = vmatprep.mubr.bf16.mxu0 0
  %1255 = vmatmul.mubr.bf16.gmra.mxu0 %v1162
  %v1256 = vpop.f32.mrf.mxu0
  %v1257 = vadd.f32 0.0, %v1256
  %v1258 = vpop.f32.mrf.mxu0
  %v1259 = vpop.f32.mrf.mxu0
  %v1260 = vadd.f32 0.0, %v1259
  %v1261 = vpop.f32.mrf.mxu0
  %1262 = vmatprep.mubr.bf16.mxu0 0
  %1263 = vmatmul.mubr.bf16.gmra.mxu0 %v1165
  %v1264 = vpop.f32.mrf.mxu0
  %v1265 = vadd.f32 0.0, %v1264
  %v1266 = vpop.f32.mrf.mxu0
  %v1267 = vpop.f32.mrf.mxu0
  %v1268 = vadd.f32 0.0, %v1267
  %v1269 = vpop.f32.mrf.mxu0
  %1270 = vmatprep.mubr.bf16.mxu0 0
  %1271 = vmatmul.mubr.bf16.gmra.mxu0 %v1168
  %v1272 = vpop.f32.mrf.mxu0
  %v1273 = vadd.f32 0.0, %v1272
  %v1274 = vpop.f32.mrf.mxu0
  %v1275 = vpop.f32.mrf.mxu0
  %v1276 = vadd.f32 0.0, %v1275
  %v1277 = vpop.f32.mrf.mxu0
  %1278 = vmatprep.mubr.bf16.mxu0 0
  %1279 = vmatmul.mubr.bf16.gmra.mxu0 %v1171
  %v1280 = vpop.f32.mrf.mxu0
  %v1281 = vadd.f32 0.0, %v1280
  %v1282 = vpop.f32.mrf.mxu0
  %v1283 = vpop.f32.mrf.mxu0
  %v1284 = vadd.f32 0.0, %v1283
  %v1285 = vpop.f32.mrf.mxu0
  %1286 = vmatprep.mubr.bf16.mxu0 0
  %1287 = vmatmul.mubr.bf16.gmra.mxu0 %v1174
  %v1288 = vpop.f32.mrf.mxu0
  %v1289 = vadd.f32 0.0, %v1288
  %v1290 = vpop.f32.mrf.mxu0
  %v1291 = vpop.f32.mrf.mxu0
  %v1292 = vadd.f32 0.0, %v1291
  %v1293 = vpop.f32.mrf.mxu0
  %1294 = vmatprep.mubr.bf16.mxu0 0
  %1295 = vmatmul.mubr.bf16.gmra.mxu0 %v1177
  %v1296 = vpop.f32.mrf.mxu0
  %v1297 = vadd.f32 0.0, %v1296
  %v1298 = vpop.f32.mrf.mxu0
  %v1299 = vpop.f32.mrf.mxu0
  %v1300 = vadd.f32 0.0, %v1299
  %v1301 = vpop.f32.mrf.mxu0
  %1302 = vmatprep.mubr.bf16.mxu0 0
  %1303 = vmatmul.mubr.bf16.gmra.mxu0 %v1180
  %v1304 = vpop.f32.mrf.mxu0
  %v1305 = vadd.f32 0.0, %v1304
  %v1306 = vpop.f32.mrf.mxu0
  %v1307 = vpop.f32.mrf.mxu0
  %v1308 = vadd.f32 0.0, %v1307
  %v1309 = vpop.f32.mrf.mxu0
  %1310 = vdwg.mxu0
  %v1311 = vmul.f32 %v1217, %v641
  %v1312 = vmul.f32 %v1220, %v641
  %v1313 = vmul.f32 %v1225, %v641
  %v1314 = vmul.f32 %v1228, %v641
  %v1315 = vmul.f32 %v1233, %v641
  %v1316 = vmul.f32 %v1236, %v641
  %v1317 = vmul.f32 %v1241, %v651
  %v1318 = vmul.f32 %v1244, %v651
  %v1319 = vmul.f32 %v1249, %v651
  %v1320 = vmul.f32 %v1252, %v651
  %v1321 = vmul.f32 %v1257, %v651
  %v1322 = vmul.f32 %v1260, %v651
  %v1323 = vadd.f32 %v1311, %v1317
  %v1324 = vadd.f32 %v1312, %v1318
  %v1325 = vadd.f32 %v1313, %v1319
  %v1326 = vadd.f32 %v1314, %v1320
  %v1327 = vadd.f32 %v1315, %v1321
  %v1328 = vadd.f32 %v1316, %v1322
  %v1329 = vmul.f32 %v1265, %v661
  %v1330 = vmul.f32 %v1268, %v661
  %v1331 = vmul.f32 %v1273, %v661
  %v1332 = vmul.f32 %v1276, %v661
  %v1333 = vmul.f32 %v1281, %v661
  %v1334 = vmul.f32 %v1284, %v661
  %v1335 = vadd.f32 %v1323, %v1329
  %v1336 = vadd.f32 %v1324, %v1330
  %v1337 = vadd.f32 %v1325, %v1331
  %v1338 = vadd.f32 %v1326, %v1332
  %v1339 = vadd.f32 %v1327, %v1333
  %v1340 = vadd.f32 %v1328, %v1334
  %v1341 = vmul.f32 %v1289, %v671
  %v1342 = vmul.f32 %v1292, %v671
  %v1343 = vmul.f32 %v1297, %v671
  %v1344 = vmul.f32 %v1300, %v671
  %v1345 = vmul.f32 %v1305, %v671
  %v1346 = vmul.f32 %v1308, %v671
  %v1347 = vadd.f32 %v1335, %v1341
  %v1348 = vadd.f32 %v1336, %v1342
  %v1349 = vadd.f32 %v1337, %v1343
  %v1350 = vadd.f32 %v1338, %v1344
  %v1351 = vadd.f32 %v1339, %v1345
  %v1352 = vadd.f32 %v1340, %v1346
  %v1353 = vpack.c.bf16 %v1348, %v1347
  %v1354 = vpack.c.bf16 %v1350, %v1349
  %v1355 = vpack.c.bf16 %v1352, %v1351
  %v1356 = vld [vmem:[%s27] sm:$0xf]
  %v1357 = vld [vmem:[%s27 + $0x4] sm:$0xf]
  %v1358 = vld [vmem:[%s27 + $0x8] sm:$0xf]
  %v1359 = vld [vmem:[%s27 + $0xc] sm:$0xf]
  %v1360 = vld [vmem:[%s29] sm:$0x1]
  %v1362 = vlaneseq
  %v1363 = vshrl.u32 %v1362, 7
  %v1364 = vsub.s32 0, %v1363
  %v1365 = vrot.slane %v1360, %v1364
  %v1371 = vunpack.c.l.b16 %v1356
  %v1372 = vunpack.c.l.b16 %v1357
  %v1373 = vunpack.c.l.b16 %v1358
  %v1374 = vunpack.c.l.b16 %v1359
  %v1375 = vpack.c.b16 %v1372, %v1371
  %v1376 = vpack.c.b16 %v1374, %v1373
  %v1380 = vsel %vm276, %v1353, 0
  %v1383 = vsel %vm276, %v1354, 0
  %v1386 = vsel %vm276, %v1355, 0
  %1388 = vmatprep.subr.bf16.mxu0 0
  %1389 = vmatpush1.bf16.msra.mxu0 0
  %1390 = vmatprep.subr.bf16.mxu0 0
  %1391 = vmatpush1.bf16.msra.mxu0 0
  %1392 = vmatprep.subr.bf16.mxu0 0
  %1393 = vmatpush1.bf16.msra.mxu0 0
  %1394 = vmatprep.subr.bf16.mxu0 0
  %1395 = vmatpush1.bf16.msra.mxu0 0
  %1396 = vmatprep.subr.bf16.mxu0 0
  %1397 = vmatpush1.bf16.msra.mxu0 0
  %1398 = vmatprep.subr.bf16.mxu0 0
  %1399 = vmatpush1.bf16.msra.mxu0 0
  %1400 = vmatprep.subr.bf16.mxu0 0
  %1401 = vmatpush1.bf16.msra.mxu0 %v1376
  %1402 = vmatprep.subr.bf16.mxu0 0
  %1403 = vmatpush1.bf16.msra.mxu0 %v1375
  %1404 = vmatprep.subr.bf16.mxu0 0
  %1405 = vmatpush2.bf16.msra.mxu0 0
  %1406 = vmatprep.subr.bf16.mxu0 0
  %1407 = vmatpush2.bf16.msra.mxu0 0
  %1408 = vmatprep.subr.bf16.mxu0 0
  %1409 = vmatpush2.bf16.msra.mxu0 0
  %1410 = vmatprep.subr.bf16.mxu0 0
  %1411 = vmatpush2.bf16.msra.mxu0 0
  %1412 = vmatprep.subr.bf16.mxu0 0
  %1413 = vmatpush2.bf16.msra.mxu0 0
  %1414 = vmatprep.subr.bf16.mxu0 0
  %1415 = vmatpush2.bf16.msra.mxu0 0
  %1416 = vmatprep.subr.bf16.mxu0 0
  %1417 = vmatpush2.bf16.msra.mxu0 0
  %1418 = vmatprep.subr.bf16.mxu0 0
  %1419 = vmatpush2.bf16.msra.mxu0 0
  %1420 = vmatprep.mubr.bf16.mxu0 0
  %1421 = vmatmul.mubr.bf16.gmra.mxu0 %v1380
  %v1422 = vpop.f32.mrf.mxu0
  %v1423 = vadd.f32 %v1365, %v1422
  %v1424 = vpop.f32.mrf.mxu0
  %v1425 = vpop.f32.mrf.mxu0
  %v1426 = vadd.f32 %v1365, %v1425
  %v1427 = vpop.f32.mrf.mxu0
  %1428 = vmatprep.mubr.bf16.mxu0 0
  %1429 = vmatmul.mubr.bf16.gmra.mxu0 %v1383
  %v1430 = vpop.f32.mrf.mxu0
  %v1431 = vadd.f32 %v1365, %v1430
  %v1432 = vpop.f32.mrf.mxu0
  %v1433 = vpop.f32.mrf.mxu0
  %v1434 = vadd.f32 %v1365, %v1433
  %v1435 = vpop.f32.mrf.mxu0
  %1436 = vmatprep.mubr.bf16.mxu0 0
  %1437 = vmatmul.mubr.bf16.gmra.mxu0 %v1386
  %v1438 = vpop.f32.mrf.mxu0
  %v1439 = vadd.f32 %v1365, %v1438
  %v1440 = vpop.f32.mrf.mxu0
  %v1441 = vpop.f32.mrf.mxu0
  %v1442 = vadd.f32 %v1365, %v1441
  %v1443 = vpop.f32.mrf.mxu0
  %1444 = vdwg.mxu0
  %v1445 = vld [vmem:[%s31] sm:$0x1]
  %v1447 = vlaneseq
  %v1448 = vshrl.u32 %v1447, 7
  %v1449 = vsub.s32 0, %v1448
  %v1450 = vrot.slane %v1445, %v1449
  %v1452 = vmul.f32 %v1450, %v1423
  %v1453 = vmul.f32 %v1450, %v1426
  %v1454 = vmul.f32 %v1450, %v1431
  %v1455 = vmul.f32 %v1450, %v1434
  %v1456 = vmul.f32 %v1450, %v1439
  %v1457 = vmul.f32 %v1450, %v1442
  %v1458 = vadd.f32 %v252, %v1452
  %v1459 = vadd.f32 %v255, %v1453
  %v1460 = vadd.f32 %v260, %v1454
  %v1461 = vadd.f32 %v263, %v1455
  %v1462 = vadd.f32 %v268, %v1456
  %v1463 = vadd.f32 %v271, %v1457
  %v1464 = vld [vmem:[%s33] sm:$0x1]
  %v1465 = vld [vmem:[%s35] sm:$0x1]
  %v1466 = vsel %vm276, %v1458, 0.0
  %1467 = vadd.xlane.f32.xlu0 %v1466
  %v1468 = vpop.xlane.xlu0 %1467
  %v1469 = vsel %vm276, %v1459, 0.0
  %1470 = vadd.xlane.f32.xlu0 %v1469
  %v1471 = vpop.xlane.xlu0 %1470
  %v1472 = vsel %vm276, %v1460, 0.0
  %1473 = vadd.xlane.f32.xlu0 %v1472
  %v1474 = vpop.xlane.xlu0 %1473
  %v1475 = vsel %vm276, %v1461, 0.0
  %1476 = vadd.xlane.f32.xlu0 %v1475
  %v1477 = vpop.xlane.xlu0 %1476
  %v1478 = vsel %vm276, %v1462, 0.0
  %1479 = vadd.xlane.f32.xlu0 %v1478
  %v1480 = vpop.xlane.xlu0 %1479
  %v1481 = vsel %vm276, %v1463, 0.0
  %1482 = vadd.xlane.f32.xlu0 %v1481
  %v1483 = vpop.xlane.xlu0 %1482
  %v1484 = vmul.f32 %v1468, %v295
  %v1485 = vmul.f32 %v1471, %v295
  %v1486 = vmul.f32 %v1474, %v295
  %v1487 = vmul.f32 %v1477, %v295
  %v1488 = vmul.f32 %v1480, %v295
  %v1489 = vmul.f32 %v1483, %v295
  %v1490 = vsub.f32 %v1458, %v1484
  %v1491 = vsub.f32 %v1459, %v1485
  %v1492 = vsub.f32 %v1460, %v1486
  %v1493 = vsub.f32 %v1461, %v1487
  %v1494 = vsub.f32 %v1462, %v1488
  %v1495 = vsub.f32 %v1463, %v1489
  %v1496 = vmul.f32 %v1490, %v1490
  %v1497 = vmul.f32 %v1491, %v1491
  %v1498 = vmul.f32 %v1492, %v1492
  %v1499 = vmul.f32 %v1493, %v1493
  %v1500 = vmul.f32 %v1494, %v1494
  %v1501 = vmul.f32 %v1495, %v1495
  %v1502 = vsel %vm276, %v1496, 0.0
  %1503 = vadd.xlane.f32.xlu0 %v1502
  %v1504 = vpop.xlane.xlu0 %1503
  %v1505 = vsel %vm276, %v1497, 0.0
  %1506 = vadd.xlane.f32.xlu0 %v1505
  %v1507 = vpop.xlane.xlu0 %1506
  %v1508 = vsel %vm276, %v1498, 0.0
  %1509 = vadd.xlane.f32.xlu0 %v1508
  %v1510 = vpop.xlane.xlu0 %1509
  %v1511 = vsel %vm276, %v1499, 0.0
  %1512 = vadd.xlane.f32.xlu0 %v1511
  %v1513 = vpop.xlane.xlu0 %1512
  %v1514 = vsel %vm276, %v1500, 0.0
  %1515 = vadd.xlane.f32.xlu0 %v1514
  %v1516 = vpop.xlane.xlu0 %1515
  %v1517 = vsel %vm276, %v1501, 0.0
  %1518 = vadd.xlane.f32.xlu0 %v1517
  %v1519 = vpop.xlane.xlu0 %1518
  %v1520 = vmul.f32 %v1504, %v295
  %v1521 = vmul.f32 %v1507, %v295
  %v1522 = vmul.f32 %v1510, %v295
  %v1523 = vmul.f32 %v1513, %v295
  %v1524 = vmul.f32 %v1516, %v295
  %v1525 = vmul.f32 %v1519, %v295
  %v1526 = vadd.f32 %v1520, 1e-05
  %v1527 = vadd.f32 %v1521, 1e-05
  %v1528 = vadd.f32 %v1522, 1e-05
  %v1529 = vadd.f32 %v1523, 1e-05
  %v1530 = vadd.f32 %v1524, 1e-05
  %v1531 = vadd.f32 %v1525, 1e-05
  %v1532 = vrsqrt.pop %v1526
  %v1533 = vrsqrt.pop %v1527
  %v1534 = vrsqrt.pop %v1528
  %v1535 = vrsqrt.pop %v1529
  %v1536 = vrsqrt.pop %v1530
  %v1537 = vrsqrt.pop %v1531
  %v1538 = vmul.f32 %v1490, %v1532
  %v1539 = vmul.f32 %v1491, %v1533
  %v1540 = vmul.f32 %v1492, %v1534
  %v1541 = vmul.f32 %v1493, %v1535
  %v1542 = vmul.f32 %v1494, %v1536
  %v1543 = vmul.f32 %v1495, %v1537
  %v1545 = vlaneseq
  %v1546 = vshrl.u32 %v1545, 7
  %v1547 = vsub.s32 0, %v1546
  %v1548 = vrot.slane %v1464, %v1547
  %v1550 = vmul.f32 %v1538, %v1548
  %v1551 = vmul.f32 %v1539, %v1548
  %v1552 = vmul.f32 %v1540, %v1548
  %v1553 = vmul.f32 %v1541, %v1548
  %v1554 = vmul.f32 %v1542, %v1548
  %v1555 = vmul.f32 %v1543, %v1548
  %v1557 = vlaneseq
  %v1558 = vshrl.u32 %v1557, 7
  %v1559 = vsub.s32 0, %v1558
  %v1560 = vrot.slane %v1465, %v1559
  %v1562 = vadd.f32 %v1550, %v1560
  %v1563 = vadd.f32 %v1551, %v1560
  %v1564 = vadd.f32 %v1552, %v1560
  %v1565 = vadd.f32 %v1553, %v1560
  %v1566 = vadd.f32 %v1554, %v1560
  %v1567 = vadd.f32 %v1555, %v1560
  %v1568 = vpack.c.bf16 %v1563, %v1562
  %v1569 = vpack.c.bf16 %v1565, %v1564
  %v1570 = vpack.c.bf16 %v1567, %v1566
  %v1571 = vld [vmem:[%s37] sm:$0xf]
  %v1572 = vld [vmem:[%s37 + $0x4] sm:$0xf]
  %v1573 = vld [vmem:[%s37 + $0x8] sm:$0xf]
  %v1574 = vld [vmem:[%s37 + $0xc] sm:$0xf]
  %v1575 = vld [vmem:[%s39] sm:$0x1]
  %v1577 = vlaneseq
  %v1578 = vshrl.u32 %v1577, 7
  %v1579 = vsub.s32 0, %v1578
  %v1580 = vrot.slane %v1575, %v1579
  %v1586 = vunpack.c.l.b16 %v1571
  %v1587 = vunpack.c.l.b16 %v1572
  %v1588 = vunpack.c.l.b16 %v1573
  %v1589 = vunpack.c.l.b16 %v1574
  %v1590 = vpack.c.b16 %v1587, %v1586
  %v1591 = vpack.c.b16 %v1589, %v1588
  %v1595 = vsel %vm276, %v1568, 0
  %v1598 = vsel %vm276, %v1569, 0
  %v1601 = vsel %vm276, %v1570, 0
  %1603 = vmatprep.subr.bf16.mxu0 0
  %1604 = vmatpush1.bf16.msra.mxu0 0
  %1605 = vmatprep.subr.bf16.mxu0 0
  %1606 = vmatpush1.bf16.msra.mxu0 0
  %1607 = vmatprep.subr.bf16.mxu0 0
  %1608 = vmatpush1.bf16.msra.mxu0 0
  %1609 = vmatprep.subr.bf16.mxu0 0
  %1610 = vmatpush1.bf16.msra.mxu0 0
  %1611 = vmatprep.subr.bf16.mxu0 0
  %1612 = vmatpush1.bf16.msra.mxu0 0
  %1613 = vmatprep.subr.bf16.mxu0 0
  %1614 = vmatpush1.bf16.msra.mxu0 0
  %1615 = vmatprep.subr.bf16.mxu0 0
  %1616 = vmatpush1.bf16.msra.mxu0 %v1591
  %1617 = vmatprep.subr.bf16.mxu0 0
  %1618 = vmatpush1.bf16.msra.mxu0 %v1590
  %1619 = vmatprep.subr.bf16.mxu0 0
  %1620 = vmatpush2.bf16.msra.mxu0 0
  %1621 = vmatprep.subr.bf16.mxu0 0
  %1622 = vmatpush2.bf16.msra.mxu0 0
  %1623 = vmatprep.subr.bf16.mxu0 0
  %1624 = vmatpush2.bf16.msra.mxu0 0
  %1625 = vmatprep.subr.bf16.mxu0 0
  %1626 = vmatpush2.bf16.msra.mxu0 0
  %1627 = vmatprep.subr.bf16.mxu0 0
  %1628 = vmatpush2.bf16.msra.mxu0 0
  %1629 = vmatprep.subr.bf16.mxu0 0
  %1630 = vmatpush2.bf16.msra.mxu0 0
  %1631 = vmatprep.subr.bf16.mxu0 0
  %1632 = vmatpush2.bf16.msra.mxu0 0
  %1633 = vmatprep.subr.bf16.mxu0 0
  %1634 = vmatpush2.bf16.msra.mxu0 0
  %1635 = vmatprep.mubr.bf16.mxu0 0
  %1636 = vmatmul.mubr.bf16.gmra.mxu0 %v1595
  %v1637 = vpop.f32.mrf.mxu0
  %v1638 = vadd.f32 %v1580, %v1637
  %v1639 = vpop.f32.mrf.mxu0
  %v1640 = vpop.f32.mrf.mxu0
  %v1641 = vadd.f32 %v1580, %v1640
  %v1642 = vpop.f32.mrf.mxu0
  %1643 = vmatprep.mubr.bf16.mxu0 0
  %1644 = vmatmul.mubr.bf16.gmra.mxu0 %v1598
  %v1645 = vpop.f32.mrf.mxu0
  %v1646 = vadd.f32 %v1580, %v1645
  %v1647 = vpop.f32.mrf.mxu0
  %v1648 = vpop.f32.mrf.mxu0
  %v1649 = vadd.f32 %v1580, %v1648
  %v1650 = vpop.f32.mrf.mxu0
  %1651 = vmatprep.mubr.bf16.mxu0 0
  %1652 = vmatmul.mubr.bf16.gmra.mxu0 %v1601
  %v1653 = vpop.f32.mrf.mxu0
  %v1654 = vadd.f32 %v1580, %v1653
  %v1655 = vpop.f32.mrf.mxu0
  %v1656 = vpop.f32.mrf.mxu0
  %v1657 = vadd.f32 %v1580, %v1656
  %v1658 = vpop.f32.mrf.mxu0
  %1659 = vdwg.mxu0
  %v1660 = vmul.f32 %v1638, %v1638
  %v1661 = vmul.f32 %v1641, %v1641
  %v1662 = vmul.f32 %v1646, %v1646
  %v1663 = vmul.f32 %v1649, %v1649
  %v1664 = vmul.f32 %v1654, %v1654
  %v1665 = vmul.f32 %v1657, %v1657
  %v1666 = vmul.f32 %v1638, %v1660
  %v1667 = vmul.f32 %v1641, %v1661
  %v1668 = vmul.f32 %v1646, %v1662
  %v1669 = vmul.f32 %v1649, %v1663
  %v1670 = vmul.f32 %v1654, %v1664
  %v1671 = vmul.f32 %v1657, %v1665
  %v1672 = vmul.f32 %v1666, 0.044715
  %v1673 = vmul.f32 %v1667, 0.044715
  %v1674 = vmul.f32 %v1668, 0.044715
  %v1675 = vmul.f32 %v1669, 0.044715
  %v1676 = vmul.f32 %v1670, 0.044715
  %v1677 = vmul.f32 %v1671, 0.044715
  %v1678 = vadd.f32 %v1638, %v1672
  %v1679 = vadd.f32 %v1641, %v1673
  %v1680 = vadd.f32 %v1646, %v1674
  %v1681 = vadd.f32 %v1649, %v1675
  %v1682 = vadd.f32 %v1654, %v1676
  %v1683 = vadd.f32 %v1657, %v1677
  %v1684 = vmul.f32 %v1678, 0.7978846
  %v1685 = vmul.f32 %v1679, 0.7978846
  %v1686 = vmul.f32 %v1680, 0.7978846
  %v1687 = vmul.f32 %v1681, 0.7978846
  %v1688 = vmul.f32 %v1682, 0.7978846
  %v1689 = vmul.f32 %v1683, 0.7978846
  %v1690 = vtanh.pop %v1684
  %v1691 = vtanh.pop %v1685
  %v1692 = vtanh.pop %v1686
  %v1693 = vtanh.pop %v1687
  %v1694 = vtanh.pop %v1688
  %v1695 = vtanh.pop %v1689
  %v1696 = vadd.f32 %v1690, 1.0
  %v1697 = vadd.f32 %v1691, 1.0
  %v1698 = vadd.f32 %v1692, 1.0
  %v1699 = vadd.f32 %v1693, 1.0
  %v1700 = vadd.f32 %v1694, 1.0
  %v1701 = vadd.f32 %v1695, 1.0
  %v1702 = vmul.f32 %v1696, 0.5
  %v1703 = vmul.f32 %v1697, 0.5
  %v1704 = vmul.f32 %v1698, 0.5
  %v1705 = vmul.f32 %v1699, 0.5
  %v1706 = vmul.f32 %v1700, 0.5
  %v1707 = vmul.f32 %v1701, 0.5
  %v1708 = vmul.f32 %v1638, %v1702
  %v1709 = vmul.f32 %v1641, %v1703
  %v1710 = vmul.f32 %v1646, %v1704
  %v1711 = vmul.f32 %v1649, %v1705
  %v1712 = vmul.f32 %v1654, %v1706
  %v1713 = vmul.f32 %v1657, %v1707
  %v1714 = vpack.c.bf16 %v1709, %v1708
  %v1715 = vpack.c.bf16 %v1711, %v1710
  %v1716 = vpack.c.bf16 %v1713, %v1712
  %v1717 = vld [vmem:[%s41] sm:$0xf]
  %v1718 = vld [vmem:[%s41 + $0x4] sm:$0xf]
  %v1719 = vld [vmem:[%s41 + $0x8] sm:$0xf]
  %v1720 = vld [vmem:[%s41 + $0xc] sm:$0xf]
  %v1721 = vld [vmem:[%s41 + $0x10] sm:$0xf]
  %v1722 = vld [vmem:[%s41 + $0x14] sm:$0xf]
  %v1723 = vld [vmem:[%s41 + $0x18] sm:$0xf]
  %v1724 = vld [vmem:[%s41 + $0x1c] sm:$0xf]
  %v1725 = vld [vmem:[%s41 + $0x20] sm:$0xf]
  %v1726 = vld [vmem:[%s41 + $0x24] sm:$0xf]
  %v1727 = vld [vmem:[%s41 + $0x28] sm:$0xf]
  %v1728 = vld [vmem:[%s41 + $0x2c] sm:$0xf]
  %v1729 = vld [vmem:[%s41 + $0x30] sm:$0xf]
  %v1730 = vld [vmem:[%s41 + $0x34] sm:$0xf]
  %v1731 = vld [vmem:[%s41 + $0x38] sm:$0xf]
  %v1732 = vld [vmem:[%s41 + $0x3c] sm:$0xf]
  %v1733 = vld [vmem:[%s43] sm:$0x1]
  %v1735 = vlaneseq
  %v1736 = vshrl.u32 %v1735, 7
  %v1737 = vsub.s32 0, %v1736
  %v1738 = vrot.slane %v1733, %v1737
  %v1756 = vunpack.c.l.b16 %v1717
  %v1757 = vunpack.c.l.b16 %v1718
  %v1758 = vunpack.c.l.b16 %v1719
  %v1759 = vunpack.c.l.b16 %v1720
  %v1760 = vunpack.c.l.b16 %v1721
  %v1761 = vunpack.c.l.b16 %v1722
  %v1762 = vunpack.c.l.b16 %v1723
  %v1763 = vunpack.c.l.b16 %v1724
  %v1764 = vunpack.c.l.b16 %v1725
  %v1765 = vunpack.c.l.b16 %v1726
  %v1766 = vunpack.c.l.b16 %v1727
  %v1767 = vunpack.c.l.b16 %v1728
  %v1768 = vunpack.c.l.b16 %v1729
  %v1769 = vunpack.c.l.b16 %v1730
  %v1770 = vunpack.c.l.b16 %v1731
  %v1771 = vunpack.c.l.b16 %v1732
  %v1772 = vpack.c.b16 %v1757, %v1756
  %v1773 = vpack.c.b16 %v1759, %v1758
  %v1774 = vpack.c.b16 %v1761, %v1760
  %v1775 = vpack.c.b16 %v1763, %v1762
  %v1776 = vpack.c.b16 %v1765, %v1764
  %v1777 = vpack.c.b16 %v1767, %v1766
  %v1778 = vpack.c.b16 %v1769, %v1768
  %v1779 = vpack.c.b16 %v1771, %v1770
  %1788 = vmatprep.subr.bf16.mxu0 0
  %1789 = vmatpush1.bf16.msra.mxu0 %v1779
  %1790 = vmatprep.subr.bf16.mxu0 0
  %1791 = vmatpush1.bf16.msra.mxu0 %v1778
  %1792 = vmatprep.subr.bf16.mxu0 0
  %1793 = vmatpush1.bf16.msra.mxu0 %v1777
  %1794 = vmatprep.subr.bf16.mxu0 0
  %1795 = vmatpush1.bf16.msra.mxu0 %v1776
  %1796 = vmatprep.subr.bf16.mxu0 0
  %1797 = vmatpush1.bf16.msra.mxu0 %v1775
  %1798 = vmatprep.subr.bf16.mxu0 0
  %1799 = vmatpush1.bf16.msra.mxu0 %v1774
  %1800 = vmatprep.subr.bf16.mxu0 0
  %1801 = vmatpush1.bf16.msra.mxu0 %v1773
  %1802 = vmatprep.subr.bf16.mxu0 0
  %1803 = vmatpush1.bf16.msra.mxu0 %v1772
  %1804 = vmatprep.subr.bf16.mxu0 0
  %1805 = vmatpush2.bf16.msra.mxu0 0
  %1806 = vmatprep.subr.bf16.mxu0 0
  %1807 = vmatpush2.bf16.msra.mxu0 0
  %1808 = vmatprep.subr.bf16.mxu0 0
  %1809 = vmatpush2.bf16.msra.mxu0 0
  %1810 = vmatprep.subr.bf16.mxu0 0
  %1811 = vmatpush2.bf16.msra.mxu0 0
  %1812 = vmatprep.subr.bf16.mxu0 0
  %1813 = vmatpush2.bf16.msra.mxu0 0
  %1814 = vmatprep.subr.bf16.mxu0 0
  %1815 = vmatpush2.bf16.msra.mxu0 0
  %1816 = vmatprep.subr.bf16.mxu0 0
  %1817 = vmatpush2.bf16.msra.mxu0 0
  %1818 = vmatprep.subr.bf16.mxu0 0
  %1819 = vmatpush2.bf16.msra.mxu0 0
  %1820 = vmatprep.mubr.bf16.mxu0 0
  %1821 = vmatmul.mubr.bf16.gmra.mxu0 %v1714
  %v1822 = vpop.f32.mrf.mxu0
  %v1823 = vadd.f32 %v1738, %v1822
  %v1824 = vpop.f32.mrf.mxu0
  %v1825 = vpop.f32.mrf.mxu0
  %v1826 = vadd.f32 %v1738, %v1825
  %v1827 = vpop.f32.mrf.mxu0
  %1828 = vmatprep.mubr.bf16.mxu0 0
  %1829 = vmatmul.mubr.bf16.gmra.mxu0 %v1715
  %v1830 = vpop.f32.mrf.mxu0
  %v1831 = vadd.f32 %v1738, %v1830
  %v1832 = vpop.f32.mrf.mxu0
  %v1833 = vpop.f32.mrf.mxu0
  %v1834 = vadd.f32 %v1738, %v1833
  %v1835 = vpop.f32.mrf.mxu0
  %1836 = vmatprep.mubr.bf16.mxu0 0
  %1837 = vmatmul.mubr.bf16.gmra.mxu0 %v1716
  %v1838 = vpop.f32.mrf.mxu0
  %v1839 = vadd.f32 %v1738, %v1838
  %v1840 = vpop.f32.mrf.mxu0
  %v1841 = vpop.f32.mrf.mxu0
  %v1842 = vadd.f32 %v1738, %v1841
  %v1843 = vpop.f32.mrf.mxu0
  %1844 = vdwg.mxu0
  %v1845 = vld [vmem:[%s45] sm:$0x1]
  %v1847 = vlaneseq
  %v1848 = vshrl.u32 %v1847, 7
  %v1849 = vsub.s32 0, %v1848
  %v1850 = vrot.slane %v1845, %v1849
  %v1852 = vmul.f32 %v1850, %v1823
  %v1853 = vmul.f32 %v1850, %v1826
  %v1854 = vmul.f32 %v1850, %v1831
  %v1855 = vmul.f32 %v1850, %v1834
  %v1856 = vmul.f32 %v1850, %v1839
  %v1857 = vmul.f32 %v1850, %v1842
  %v1858 = vadd.f32 %v1458, %v1852
  %v1859 = vadd.f32 %v1459, %v1853
  %v1860 = vadd.f32 %v1460, %v1854
  %v1861 = vadd.f32 %v1461, %v1855
  %v1862 = vadd.f32 %v1462, %v1856
  %v1863 = vadd.f32 %v1463, %v1857
  %s1864 = scalar_lea.vmem %s11, 1
  %v1865 = vld [vmem:[%s1864] sm:$0x1]
  %s1866 = scalar_lea.vmem %s13, 1
  %v1867 = vld [vmem:[%s1866] sm:$0x1]
  %v1868 = vsel %vm276, %v1858, 0.0
  %1869 = vadd.xlane.f32.xlu0 %v1868
  %v1870 = vpop.xlane.xlu0 %1869
  %v1871 = vsel %vm276, %v1859, 0.0
  %1872 = vadd.xlane.f32.xlu0 %v1871
  %v1873 = vpop.xlane.xlu0 %1872
  %v1874 = vsel %vm276, %v1860, 0.0
  %1875 = vadd.xlane.f32.xlu0 %v1874
  %v1876 = vpop.xlane.xlu0 %1875
  %v1877 = vsel %vm276, %v1861, 0.0
  %1878 = vadd.xlane.f32.xlu0 %v1877
  %v1879 = vpop.xlane.xlu0 %1878
  %v1880 = vsel %vm276, %v1862, 0.0
  %1881 = vadd.xlane.f32.xlu0 %v1880
  %v1882 = vpop.xlane.xlu0 %1881
  %v1883 = vsel %vm276, %v1863, 0.0
  %1884 = vadd.xlane.f32.xlu0 %v1883
  %v1885 = vpop.xlane.xlu0 %1884
  %v1886 = vmul.f32 %v1870, %v295
  %v1887 = vmul.f32 %v1873, %v295
  %v1888 = vmul.f32 %v1876, %v295
  %v1889 = vmul.f32 %v1879, %v295
  %v1890 = vmul.f32 %v1882, %v295
  %v1891 = vmul.f32 %v1885, %v295
  %v1892 = vsub.f32 %v1858, %v1886
  %v1893 = vsub.f32 %v1859, %v1887
  %v1894 = vsub.f32 %v1860, %v1888
  %v1895 = vsub.f32 %v1861, %v1889
  %v1896 = vsub.f32 %v1862, %v1890
  %v1897 = vsub.f32 %v1863, %v1891
  %v1898 = vmul.f32 %v1892, %v1892
  %v1899 = vmul.f32 %v1893, %v1893
  %v1900 = vmul.f32 %v1894, %v1894
  %v1901 = vmul.f32 %v1895, %v1895
  %v1902 = vmul.f32 %v1896, %v1896
  %v1903 = vmul.f32 %v1897, %v1897
  %v1904 = vsel %vm276, %v1898, 0.0
  %1905 = vadd.xlane.f32.xlu0 %v1904
  %v1906 = vpop.xlane.xlu0 %1905
  %v1907 = vsel %vm276, %v1899, 0.0
  %1908 = vadd.xlane.f32.xlu0 %v1907
  %v1909 = vpop.xlane.xlu0 %1908
  %v1910 = vsel %vm276, %v1900, 0.0
  %1911 = vadd.xlane.f32.xlu0 %v1910
  %v1912 = vpop.xlane.xlu0 %1911
  %v1913 = vsel %vm276, %v1901, 0.0
  %1914 = vadd.xlane.f32.xlu0 %v1913
  %v1915 = vpop.xlane.xlu0 %1914
  %v1916 = vsel %vm276, %v1902, 0.0
  %1917 = vadd.xlane.f32.xlu0 %v1916
  %v1918 = vpop.xlane.xlu0 %1917
  %v1919 = vsel %vm276, %v1903, 0.0
  %1920 = vadd.xlane.f32.xlu0 %v1919
  %v1921 = vpop.xlane.xlu0 %1920
  %v1922 = vmul.f32 %v1906, %v295
  %v1923 = vmul.f32 %v1909, %v295
  %v1924 = vmul.f32 %v1912, %v295
  %v1925 = vmul.f32 %v1915, %v295
  %v1926 = vmul.f32 %v1918, %v295
  %v1927 = vmul.f32 %v1921, %v295
  %v1928 = vadd.f32 %v1922, 1e-05
  %v1929 = vadd.f32 %v1923, 1e-05
  %v1930 = vadd.f32 %v1924, 1e-05
  %v1931 = vadd.f32 %v1925, 1e-05
  %v1932 = vadd.f32 %v1926, 1e-05
  %v1933 = vadd.f32 %v1927, 1e-05
  %v1934 = vrsqrt.pop %v1928
  %v1935 = vrsqrt.pop %v1929
  %v1936 = vrsqrt.pop %v1930
  %v1937 = vrsqrt.pop %v1931
  %v1938 = vrsqrt.pop %v1932
  %v1939 = vrsqrt.pop %v1933
  %v1940 = vmul.f32 %v1892, %v1934
  %v1941 = vmul.f32 %v1893, %v1935
  %v1942 = vmul.f32 %v1894, %v1936
  %v1943 = vmul.f32 %v1895, %v1937
  %v1944 = vmul.f32 %v1896, %v1938
  %v1945 = vmul.f32 %v1897, %v1939
  %v1947 = vlaneseq
  %v1948 = vshrl.u32 %v1947, 7
  %v1949 = vsub.s32 0, %v1948
  %v1950 = vrot.slane %v1865, %v1949
  %v1952 = vmul.f32 %v1940, %v1950
  %v1953 = vmul.f32 %v1941, %v1950
  %v1954 = vmul.f32 %v1942, %v1950
  %v1955 = vmul.f32 %v1943, %v1950
  %v1956 = vmul.f32 %v1944, %v1950
  %v1957 = vmul.f32 %v1945, %v1950
  %v1959 = vlaneseq
  %v1960 = vshrl.u32 %v1959, 7
  %v1961 = vsub.s32 0, %v1960
  %v1962 = vrot.slane %v1867, %v1961
  %v1964 = vadd.f32 %v1952, %v1962
  %v1965 = vadd.f32 %v1953, %v1962
  %v1966 = vadd.f32 %v1954, %v1962
  %v1967 = vadd.f32 %v1955, %v1962
  %v1968 = vadd.f32 %v1956, %v1962
  %v1969 = vadd.f32 %v1957, %v1962
  %v1970 = vpack.c.bf16 %v1965, %v1964
  %v1971 = vpack.c.bf16 %v1967, %v1966
  %v1972 = vpack.c.bf16 %v1969, %v1968
  %s1973 = scalar_lea.vmem %s15, 16
  %v1974 = vld [vmem:[%s1973] sm:$0xf]
  %v1975 = vld [vmem:[%s1973 + $0x4] sm:$0xf]
  %v1976 = vld [vmem:[%s1973 + $0x8] sm:$0xf]
  %v1977 = vld [vmem:[%s1973 + $0xc] sm:$0xf]
  %s1978 = scalar_lea.vmem %s17, 1
  %v1979 = vld [vmem:[%s1978] sm:$0x1]
  %v1981 = vlaneseq
  %v1982 = vshrl.u32 %v1981, 7
  %v1983 = vsub.s32 0, %v1982
  %v1984 = vrot.slane %v1979, %v1983
  %v1990 = vunpack.c.l.b16 %v1974
  %v1991 = vunpack.c.l.b16 %v1975
  %v1992 = vunpack.c.l.b16 %v1976
  %v1993 = vunpack.c.l.b16 %v1977
  %v1994 = vpack.c.b16 %v1991, %v1990
  %v1995 = vpack.c.b16 %v1993, %v1992
  %v1999 = vsel %vm276, %v1970, 0
  %v2002 = vsel %vm276, %v1971, 0
  %v2005 = vsel %vm276, %v1972, 0
  %2007 = vmatprep.subr.bf16.mxu0 0
  %2008 = vmatpush1.bf16.msra.mxu0 0
  %2009 = vmatprep.subr.bf16.mxu0 0
  %2010 = vmatpush1.bf16.msra.mxu0 0
  %2011 = vmatprep.subr.bf16.mxu0 0
  %2012 = vmatpush1.bf16.msra.mxu0 0
  %2013 = vmatprep.subr.bf16.mxu0 0
  %2014 = vmatpush1.bf16.msra.mxu0 0
  %2015 = vmatprep.subr.bf16.mxu0 0
  %2016 = vmatpush1.bf16.msra.mxu0 0
  %2017 = vmatprep.subr.bf16.mxu0 0
  %2018 = vmatpush1.bf16.msra.mxu0 0
  %2019 = vmatprep.subr.bf16.mxu0 0
  %2020 = vmatpush1.bf16.msra.mxu0 %v1995
  %2021 = vmatprep.subr.bf16.mxu0 0
  %2022 = vmatpush1.bf16.msra.mxu0 %v1994
  %2023 = vmatprep.subr.bf16.mxu0 0
  %2024 = vmatpush2.bf16.msra.mxu0 0
  %2025 = vmatprep.subr.bf16.mxu0 0
  %2026 = vmatpush2.bf16.msra.mxu0 0
  %2027 = vmatprep.subr.bf16.mxu0 0
  %2028 = vmatpush2.bf16.msra.mxu0 0
  %2029 = vmatprep.subr.bf16.mxu0 0
  %2030 = vmatpush2.bf16.msra.mxu0 0
  %2031 = vmatprep.subr.bf16.mxu0 0
  %2032 = vmatpush2.bf16.msra.mxu0 0
  %2033 = vmatprep.subr.bf16.mxu0 0
  %2034 = vmatpush2.bf16.msra.mxu0 0
  %2035 = vmatprep.subr.bf16.mxu0 0
  %2036 = vmatpush2.bf16.msra.mxu0 0
  %2037 = vmatprep.subr.bf16.mxu0 0
  %2038 = vmatpush2.bf16.msra.mxu0 0
  %2039 = vmatprep.mubr.bf16.mxu0 0
  %2040 = vmatmul.mubr.bf16.gmra.mxu0 %v1999
  %v2041 = vpop.f32.mrf.mxu0
  %v2042 = vadd.f32 %v1984, %v2041
  %v2043 = vpop.f32.mrf.mxu0
  %v2044 = vpop.f32.mrf.mxu0
  %v2045 = vadd.f32 %v1984, %v2044
  %v2046 = vpop.f32.mrf.mxu0
  %2047 = vmatprep.mubr.bf16.mxu0 0
  %2048 = vmatmul.mubr.bf16.gmra.mxu0 %v2002
  %v2049 = vpop.f32.mrf.mxu0
  %v2050 = vadd.f32 %v1984, %v2049
  %v2051 = vpop.f32.mrf.mxu0
  %v2052 = vpop.f32.mrf.mxu0
  %v2053 = vadd.f32 %v1984, %v2052
  %v2054 = vpop.f32.mrf.mxu0
  %2055 = vmatprep.mubr.bf16.mxu0 0
  %2056 = vmatmul.mubr.bf16.gmra.mxu0 %v2005
  %v2057 = vpop.f32.mrf.mxu0
  %v2058 = vadd.f32 %v1984, %v2057
  %v2059 = vpop.f32.mrf.mxu0
  %v2060 = vpop.f32.mrf.mxu0
  %v2061 = vadd.f32 %v1984, %v2060
  %v2062 = vpop.f32.mrf.mxu0
  %2063 = vdwg.mxu0
  %s2064 = scalar_lea.vmem %s19, 16
  %v2065 = vld [vmem:[%s2064] sm:$0xf]
  %v2066 = vld [vmem:[%s2064 + $0x4] sm:$0xf]
  %v2067 = vld [vmem:[%s2064 + $0x8] sm:$0xf]
  %v2068 = vld [vmem:[%s2064 + $0xc] sm:$0xf]
  %s2069 = scalar_lea.vmem %s21, 1
  %v2070 = vld [vmem:[%s2069] sm:$0x1]
  %v2072 = vlaneseq
  %v2073 = vshrl.u32 %v2072, 7
  %v2074 = vsub.s32 0, %v2073
  %v2075 = vrot.slane %v2070, %v2074
  %v2081 = vunpack.c.l.b16 %v2065
  %v2082 = vunpack.c.l.b16 %v2066
  %v2083 = vunpack.c.l.b16 %v2067
  %v2084 = vunpack.c.l.b16 %v2068
  %v2085 = vpack.c.b16 %v2082, %v2081
  %v2086 = vpack.c.b16 %v2084, %v2083
  %2089 = vmatprep.subr.bf16.mxu0 0
  %2090 = vmatpush1.bf16.msra.mxu0 0
  %2091 = vmatprep.subr.bf16.mxu0 0
  %2092 = vmatpush1.bf16.msra.mxu0 0
  %2093 = vmatprep.subr.bf16.mxu0 0
  %2094 = vmatpush1.bf16.msra.mxu0 0
  %2095 = vmatprep.subr.bf16.mxu0 0
  %2096 = vmatpush1.bf16.msra.mxu0 0
  %2097 = vmatprep.subr.bf16.mxu0 0
  %2098 = vmatpush1.bf16.msra.mxu0 0
  %2099 = vmatprep.subr.bf16.mxu0 0
  %2100 = vmatpush1.bf16.msra.mxu0 0
  %2101 = vmatprep.subr.bf16.mxu0 0
  %2102 = vmatpush1.bf16.msra.mxu0 %v2086
  %2103 = vmatprep.subr.bf16.mxu0 0
  %2104 = vmatpush1.bf16.msra.mxu0 %v2085
  %2105 = vmatprep.subr.bf16.mxu0 0
  %2106 = vmatpush2.bf16.msra.mxu0 0
  %2107 = vmatprep.subr.bf16.mxu0 0
  %2108 = vmatpush2.bf16.msra.mxu0 0
  %2109 = vmatprep.subr.bf16.mxu0 0
  %2110 = vmatpush2.bf16.msra.mxu0 0
  %2111 = vmatprep.subr.bf16.mxu0 0
  %2112 = vmatpush2.bf16.msra.mxu0 0
  %2113 = vmatprep.subr.bf16.mxu0 0
  %2114 = vmatpush2.bf16.msra.mxu0 0
  %2115 = vmatprep.subr.bf16.mxu0 0
  %2116 = vmatpush2.bf16.msra.mxu0 0
  %2117 = vmatprep.subr.bf16.mxu0 0
  %2118 = vmatpush2.bf16.msra.mxu0 0
  %2119 = vmatprep.subr.bf16.mxu0 0
  %2120 = vmatpush2.bf16.msra.mxu0 0
  %2121 = vmatprep.mubr.bf16.mxu0 0
  %2122 = vmatmul.mubr.bf16.gmra.mxu0 %v1999
  %v2123 = vpop.f32.mrf.mxu0
  %v2124 = vadd.f32 %v2075, %v2123
  %v2125 = vpop.f32.mrf.mxu0
  %v2126 = vpop.f32.mrf.mxu0
  %v2127 = vadd.f32 %v2075, %v2126
  %v2128 = vpop.f32.mrf.mxu0
  %2129 = vmatprep.mubr.bf16.mxu0 0
  %2130 = vmatmul.mubr.bf16.gmra.mxu0 %v2002
  %v2131 = vpop.f32.mrf.mxu0
  %v2132 = vadd.f32 %v2075, %v2131
  %v2133 = vpop.f32.mrf.mxu0
  %v2134 = vpop.f32.mrf.mxu0
  %v2135 = vadd.f32 %v2075, %v2134
  %v2136 = vpop.f32.mrf.mxu0
  %2137 = vmatprep.mubr.bf16.mxu0 0
  %2138 = vmatmul.mubr.bf16.gmra.mxu0 %v2005
  %v2139 = vpop.f32.mrf.mxu0
  %v2140 = vadd.f32 %v2075, %v2139
  %v2141 = vpop.f32.mrf.mxu0
  %v2142 = vpop.f32.mrf.mxu0
  %v2143 = vadd.f32 %v2075, %v2142
  %v2144 = vpop.f32.mrf.mxu0
  %2145 = vdwg.mxu0
  %s2146 = scalar_lea.vmem %s23, 16
  %v2147 = vld [vmem:[%s2146] sm:$0xf]
  %v2148 = vld [vmem:[%s2146 + $0x4] sm:$0xf]
  %v2149 = vld [vmem:[%s2146 + $0x8] sm:$0xf]
  %v2150 = vld [vmem:[%s2146 + $0xc] sm:$0xf]
  %s2151 = scalar_lea.vmem %s25, 1
  %v2152 = vld [vmem:[%s2151] sm:$0x1]
  %v2154 = vlaneseq
  %v2155 = vshrl.u32 %v2154, 7
  %v2156 = vsub.s32 0, %v2155
  %v2157 = vrot.slane %v2152, %v2156
  %v2163 = vunpack.c.l.b16 %v2147
  %v2164 = vunpack.c.l.b16 %v2148
  %v2165 = vunpack.c.l.b16 %v2149
  %v2166 = vunpack.c.l.b16 %v2150
  %v2167 = vpack.c.b16 %v2164, %v2163
  %v2168 = vpack.c.b16 %v2166, %v2165
  %2171 = vmatprep.subr.bf16.mxu0 0
  %2172 = vmatpush1.bf16.msra.mxu0 0
  %2173 = vmatprep.subr.bf16.mxu0 0
  %2174 = vmatpush1.bf16.msra.mxu0 0
  %2175 = vmatprep.subr.bf16.mxu0 0
  %2176 = vmatpush1.bf16.msra.mxu0 0
  %2177 = vmatprep.subr.bf16.mxu0 0
  %2178 = vmatpush1.bf16.msra.mxu0 0
  %2179 = vmatprep.subr.bf16.mxu0 0
  %2180 = vmatpush1.bf16.msra.mxu0 0
  %2181 = vmatprep.subr.bf16.mxu0 0
  %2182 = vmatpush1.bf16.msra.mxu0 0
  %2183 = vmatprep.subr.bf16.mxu0 0
  %2184 = vmatpush1.bf16.msra.mxu0 %v2168
  %2185 = vmatprep.subr.bf16.mxu0 0
  %2186 = vmatpush1.bf16.msra.mxu0 %v2167
  %2187 = vmatprep.subr.bf16.mxu0 0
  %2188 = vmatpush2.bf16.msra.mxu0 0
  %2189 = vmatprep.subr.bf16.mxu0 0
  %2190 = vmatpush2.bf16.msra.mxu0 0
  %2191 = vmatprep.subr.bf16.mxu0 0
  %2192 = vmatpush2.bf16.msra.mxu0 0
  %2193 = vmatprep.subr.bf16.mxu0 0
  %2194 = vmatpush2.bf16.msra.mxu0 0
  %2195 = vmatprep.subr.bf16.mxu0 0
  %2196 = vmatpush2.bf16.msra.mxu0 0
  %2197 = vmatprep.subr.bf16.mxu0 0
  %2198 = vmatpush2.bf16.msra.mxu0 0
  %2199 = vmatprep.subr.bf16.mxu0 0
  %2200 = vmatpush2.bf16.msra.mxu0 0
  %2201 = vmatprep.subr.bf16.mxu0 0
  %2202 = vmatpush2.bf16.msra.mxu0 0
  %2203 = vmatprep.mubr.bf16.mxu0 0
  %2204 = vmatmul.mubr.bf16.gmra.mxu0 %v1999
  %v2205 = vpop.f32.mrf.mxu0
  %v2206 = vadd.f32 %v2157, %v2205
  %v2207 = vpop.f32.mrf.mxu0
  %v2208 = vpop.f32.mrf.mxu0
  %v2209 = vadd.f32 %v2157, %v2208
  %v2210 = vpop.f32.mrf.mxu0
  %2211 = vmatprep.mubr.bf16.mxu0 0
  %2212 = vmatmul.mubr.bf16.gmra.mxu0 %v2002
  %v2213 = vpop.f32.mrf.mxu0
  %v2214 = vadd.f32 %v2157, %v2213
  %v2215 = vpop.f32.mrf.mxu0
  %v2216 = vpop.f32.mrf.mxu0
  %v2217 = vadd.f32 %v2157, %v2216
  %v2218 = vpop.f32.mrf.mxu0
  %2219 = vmatprep.mubr.bf16.mxu0 0
  %2220 = vmatmul.mubr.bf16.gmra.mxu0 %v2005
  %v2221 = vpop.f32.mrf.mxu0
  %v2222 = vadd.f32 %v2157, %v2221
  %v2223 = vpop.f32.mrf.mxu0
  %v2224 = vpop.f32.mrf.mxu0
  %v2225 = vadd.f32 %v2157, %v2224
  %v2226 = vpop.f32.mrf.mxu0
  %2227 = vdwg.mxu0
  %v2228 = vmul.f32 %v2042, 0.35355338
  %v2229 = vmul.f32 %v2045, 0.35355338
  %v2230 = vmul.f32 %v2050, 0.35355338
  %v2231 = vmul.f32 %v2053, 0.35355338
  %v2232 = vmul.f32 %v2058, 0.35355338
  %v2233 = vmul.f32 %v2061, 0.35355338
  %v2234 = vmul.f32 %v2228, %v641
  %v2235 = vmul.f32 %v2229, %v641
  %v2236 = vmul.f32 %v2230, %v641
  %v2237 = vmul.f32 %v2231, %v641
  %v2238 = vmul.f32 %v2232, %v641
  %v2239 = vmul.f32 %v2233, %v641
  %v2240 = vmul.f32 %v2228, %v651
  %v2241 = vmul.f32 %v2229, %v651
  %v2242 = vmul.f32 %v2230, %v651
  %v2243 = vmul.f32 %v2231, %v651
  %v2244 = vmul.f32 %v2232, %v651
  %v2245 = vmul.f32 %v2233, %v651
  %v2246 = vmul.f32 %v2228, %v661
  %v2247 = vmul.f32 %v2229, %v661
  %v2248 = vmul.f32 %v2230, %v661
  %v2249 = vmul.f32 %v2231, %v661
  %v2250 = vmul.f32 %v2232, %v661
  %v2251 = vmul.f32 %v2233, %v661
  %v2252 = vmul.f32 %v2228, %v671
  %v2253 = vmul.f32 %v2229, %v671
  %v2254 = vmul.f32 %v2230, %v671
  %v2255 = vmul.f32 %v2231, %v671
  %v2256 = vmul.f32 %v2232, %v671
  %v2257 = vmul.f32 %v2233, %v671
  %v2258 = vpack.c.bf16 %v2235, %v2234
  %v2259 = vpack.c.bf16 %v2237, %v2236
  %v2260 = vpack.c.bf16 %v2239, %v2238
  %v2261 = vpack.c.bf16 %v2241, %v2240
  %v2262 = vpack.c.bf16 %v2243, %v2242
  %v2263 = vpack.c.bf16 %v2245, %v2244
  %v2264 = vpack.c.bf16 %v2247, %v2246
  %v2265 = vpack.c.bf16 %v2249, %v2248
  %v2266 = vpack.c.bf16 %v2251, %v2250
  %v2267 = vpack.c.bf16 %v2253, %v2252
  %v2268 = vpack.c.bf16 %v2255, %v2254
  %v2269 = vpack.c.bf16 %v2257, %v2256
  %v2270 = vpack.c.bf16 %v2127, %v2124
  %v2271 = vpack.c.bf16 %v2135, %v2132
  %v2272 = vpack.c.bf16 %v2143, %v2140
  %v2274 = vsel %vm276, %v2258, 0
  %v2277 = vsel %vm276, %v2259, 0
  %v2280 = vsel %vm276, %v2260, 0
  %v2283 = vsel %vm276, %v2261, 0
  %v2286 = vsel %vm276, %v2262, 0
  %v2289 = vsel %vm276, %v2263, 0
  %v2292 = vsel %vm276, %v2264, 0
  %v2295 = vsel %vm276, %v2265, 0
  %v2298 = vsel %vm276, %v2266, 0
  %v2301 = vsel %vm276, %v2267, 0
  %v2304 = vsel %vm276, %v2268, 0
  %v2307 = vsel %vm276, %v2269, 0
  %v2310 = vsel %vm276, %v2270, 0
  %v2313 = vsel %vm276, %v2271, 0
  %v2316 = vsel %vm276, %v2272, 0
  %2318 = vmatprep.subr.bf16.mxu0 0
  %2319 = vmatpush1.bf16.xpose.msra.mxu0 0
  %2320 = vmatprep.subr.bf16.mxu0 0
  %2321 = vmatpush1.bf16.xpose.msra.mxu0 0
  %2322 = vmatprep.subr.bf16.mxu0 0
  %2323 = vmatpush1.bf16.xpose.msra.mxu0 0
  %2324 = vmatprep.subr.bf16.mxu0 0
  %2325 = vmatpush1.bf16.xpose.msra.mxu0 0
  %2326 = vmatprep.subr.bf16.mxu0 0
  %2327 = vmatpush1.bf16.xpose.msra.mxu0 0
  %2328 = vmatprep.subr.bf16.mxu0 0
  %2329 = vmatpush1.bf16.xpose.msra.mxu0 %v2316
  %2330 = vmatprep.subr.bf16.mxu0 0
  %2331 = vmatpush1.bf16.xpose.msra.mxu0 %v2313
  %2332 = vmatprep.subr.bf16.mxu0 0
  %2333 = vmatpush1.bf16.xpose.msra.mxu0 %v2310
  %2334 = vmatprep.subr.bf16.mxu0 0
  %2335 = vmatpush2.bf16.xpose.msra.mxu0 0
  %2336 = vmatprep.subr.bf16.mxu0 0
  %2337 = vmatpush2.bf16.xpose.msra.mxu0 0
  %2338 = vmatprep.subr.bf16.mxu0 0
  %2339 = vmatpush2.bf16.xpose.msra.mxu0 0
  %2340 = vmatprep.subr.bf16.mxu0 0
  %2341 = vmatpush2.bf16.xpose.msra.mxu0 0
  %2342 = vmatprep.subr.bf16.mxu0 0
  %2343 = vmatpush2.bf16.xpose.msra.mxu0 0
  %2344 = vmatprep.subr.bf16.mxu0 0
  %2345 = vmatpush2.bf16.xpose.msra.mxu0 0
  %2346 = vmatprep.subr.bf16.mxu0 0
  %2347 = vmatpush2.bf16.xpose.msra.mxu0 0
  %2348 = vmatprep.subr.bf16.mxu0 0
  %2349 = vmatpush2.bf16.xpose.msra.mxu0 0
  %2350 = vmatprep.mubr.bf16.mxu0 0
  %2351 = vmatmul.mubr.bf16.gmra.mxu0 %v2274
  %v2352 = vpop.f32.mrf.mxu0
  %v2353 = vadd.f32 %v132, %v2352
  %v2354 = vpop.f32.mrf.mxu0
  %v2355 = vpop.f32.mrf.mxu0
  %v2356 = vadd.f32 %v133, %v2355
  %v2357 = vpop.f32.mrf.mxu0
  %2358 = vmatprep.mubr.bf16.mxu0 0
  %2359 = vmatmul.mubr.bf16.gmra.mxu0 %v2277
  %v2360 = vpop.f32.mrf.mxu0
  %v2361 = vadd.f32 %v134, %v2360
  %v2362 = vpop.f32.mrf.mxu0
  %v2363 = vpop.f32.mrf.mxu0
  %v2364 = vadd.f32 %v135, %v2363
  %v2365 = vpop.f32.mrf.mxu0
  %2366 = vmatprep.mubr.bf16.mxu0 0
  %2367 = vmatmul.mubr.bf16.gmra.mxu0 %v2280
  %v2368 = vpop.f32.mrf.mxu0
  %v2369 = vadd.f32 %v136, %v2368
  %v2370 = vpop.f32.mrf.mxu0
  %v2371 = vpop.f32.mrf.mxu0
  %v2372 = vadd.f32 %v137, %v2371
  %v2373 = vpop.f32.mrf.mxu0
  %2374 = vmatprep.mubr.bf16.mxu0 0
  %2375 = vmatmul.mubr.bf16.gmra.mxu0 %v2283
  %v2376 = vpop.f32.mrf.mxu0
  %v2377 = vadd.f32 %v138, %v2376
  %v2378 = vpop.f32.mrf.mxu0
  %v2379 = vpop.f32.mrf.mxu0
  %v2380 = vadd.f32 %v139, %v2379
  %v2381 = vpop.f32.mrf.mxu0
  %2382 = vmatprep.mubr.bf16.mxu0 0
  %2383 = vmatmul.mubr.bf16.gmra.mxu0 %v2286
  %v2384 = vpop.f32.mrf.mxu0
  %v2385 = vadd.f32 %v140, %v2384
  %v2386 = vpop.f32.mrf.mxu0
  %v2387 = vpop.f32.mrf.mxu0
  %v2388 = vadd.f32 %v141, %v2387
  %v2389 = vpop.f32.mrf.mxu0
  %2390 = vmatprep.mubr.bf16.mxu0 0
  %2391 = vmatmul.mubr.bf16.gmra.mxu0 %v2289
  %v2392 = vpop.f32.mrf.mxu0
  %v2393 = vadd.f32 %v142, %v2392
  %v2394 = vpop.f32.mrf.mxu0
  %v2395 = vpop.f32.mrf.mxu0
  %v2396 = vadd.f32 %v143, %v2395
  %v2397 = vpop.f32.mrf.mxu0
  %2398 = vmatprep.mubr.bf16.mxu0 0
  %2399 = vmatmul.mubr.bf16.gmra.mxu0 %v2292
  %v2400 = vpop.f32.mrf.mxu0
  %v2401 = vadd.f32 %v144, %v2400
  %v2402 = vpop.f32.mrf.mxu0
  %v2403 = vpop.f32.mrf.mxu0
  %v2404 = vadd.f32 %v145, %v2403
  %v2405 = vpop.f32.mrf.mxu0
  %2406 = vmatprep.mubr.bf16.mxu0 0
  %2407 = vmatmul.mubr.bf16.gmra.mxu0 %v2295
  %v2408 = vpop.f32.mrf.mxu0
  %v2409 = vadd.f32 %v146, %v2408
  %v2410 = vpop.f32.mrf.mxu0
  %v2411 = vpop.f32.mrf.mxu0
  %v2412 = vadd.f32 %v147, %v2411
  %v2413 = vpop.f32.mrf.mxu0
  %2414 = vmatprep.mubr.bf16.mxu0 0
  %2415 = vmatmul.mubr.bf16.gmra.mxu0 %v2298
  %v2416 = vpop.f32.mrf.mxu0
  %v2417 = vadd.f32 %v148, %v2416
  %v2418 = vpop.f32.mrf.mxu0
  %v2419 = vpop.f32.mrf.mxu0
  %v2420 = vadd.f32 %v149, %v2419
  %v2421 = vpop.f32.mrf.mxu0
  %2422 = vmatprep.mubr.bf16.mxu0 0
  %2423 = vmatmul.mubr.bf16.gmra.mxu0 %v2301
  %v2424 = vpop.f32.mrf.mxu0
  %v2425 = vadd.f32 %v150, %v2424
  %v2426 = vpop.f32.mrf.mxu0
  %v2427 = vpop.f32.mrf.mxu0
  %v2428 = vadd.f32 %v151, %v2427
  %v2429 = vpop.f32.mrf.mxu0
  %2430 = vmatprep.mubr.bf16.mxu0 0
  %2431 = vmatmul.mubr.bf16.gmra.mxu0 %v2304
  %v2432 = vpop.f32.mrf.mxu0
  %v2433 = vadd.f32 %v152, %v2432
  %v2434 = vpop.f32.mrf.mxu0
  %v2435 = vpop.f32.mrf.mxu0
  %v2436 = vadd.f32 %v153, %v2435
  %v2437 = vpop.f32.mrf.mxu0
  %2438 = vmatprep.mubr.bf16.mxu0 0
  %2439 = vmatmul.mubr.bf16.gmra.mxu0 %v2307
  %v2440 = vpop.f32.mrf.mxu0
  %v2441 = vadd.f32 %v154, %v2440
  %v2442 = vpop.f32.mrf.mxu0
  %v2443 = vpop.f32.mrf.mxu0
  %v2444 = vadd.f32 %v155, %v2443
  %v2445 = vpop.f32.mrf.mxu0
  %2446 = vdwg.mxu0
  %v2447 = vsel %vm207, %v2353, -inf
  %2448 = vmax.xlane.f32.xlu0 %v2447
  %v2449 = vpop.xlane.xlu0 %2448
  %v2450 = vsel %vm207, %v2356, -inf
  %2451 = vmax.xlane.f32.xlu0 %v2450
  %v2452 = vpop.xlane.xlu0 %2451
  %v2453 = vsel %vm207, %v2361, -inf
  %2454 = vmax.xlane.f32.xlu0 %v2453
  %v2455 = vpop.xlane.xlu0 %2454
  %v2456 = vsel %vm207, %v2364, -inf
  %2457 = vmax.xlane.f32.xlu0 %v2456
  %v2458 = vpop.xlane.xlu0 %2457
  %v2459 = vsel %vm207, %v2369, -inf
  %2460 = vmax.xlane.f32.xlu0 %v2459
  %v2461 = vpop.xlane.xlu0 %2460
  %v2462 = vsel %vm207, %v2372, -inf
  %2463 = vmax.xlane.f32.xlu0 %v2462
  %v2464 = vpop.xlane.xlu0 %2463
  %v2465 = vsel %vm207, %v2377, -inf
  %2466 = vmax.xlane.f32.xlu0 %v2465
  %v2467 = vpop.xlane.xlu0 %2466
  %v2468 = vsel %vm207, %v2380, -inf
  %2469 = vmax.xlane.f32.xlu0 %v2468
  %v2470 = vpop.xlane.xlu0 %2469
  %v2471 = vsel %vm207, %v2385, -inf
  %2472 = vmax.xlane.f32.xlu0 %v2471
  %v2473 = vpop.xlane.xlu0 %2472
  %v2474 = vsel %vm207, %v2388, -inf
  %2475 = vmax.xlane.f32.xlu0 %v2474
  %v2476 = vpop.xlane.xlu0 %2475
  %v2477 = vsel %vm207, %v2393, -inf
  %2478 = vmax.xlane.f32.xlu0 %v2477
  %v2479 = vpop.xlane.xlu0 %2478
  %v2480 = vsel %vm207, %v2396, -inf
  %2481 = vmax.xlane.f32.xlu0 %v2480
  %v2482 = vpop.xlane.xlu0 %2481
  %v2483 = vsel %vm207, %v2401, -inf
  %2484 = vmax.xlane.f32.xlu0 %v2483
  %v2485 = vpop.xlane.xlu0 %2484
  %v2486 = vsel %vm207, %v2404, -inf
  %2487 = vmax.xlane.f32.xlu0 %v2486
  %v2488 = vpop.xlane.xlu0 %2487
  %v2489 = vsel %vm207, %v2409, -inf
  %2490 = vmax.xlane.f32.xlu0 %v2489
  %v2491 = vpop.xlane.xlu0 %2490
  %v2492 = vsel %vm207, %v2412, -inf
  %2493 = vmax.xlane.f32.xlu0 %v2492
  %v2494 = vpop.xlane.xlu0 %2493
  %v2495 = vsel %vm207, %v2417, -inf
  %2496 = vmax.xlane.f32.xlu0 %v2495
  %v2497 = vpop.xlane.xlu0 %2496
  %v2498 = vsel %vm207, %v2420, -inf
  %2499 = vmax.xlane.f32.xlu0 %v2498
  %v2500 = vpop.xlane.xlu0 %2499
  %v2501 = vsel %vm207, %v2425, -inf
  %2502 = vmax.xlane.f32.xlu0 %v2501
  %v2503 = vpop.xlane.xlu0 %2502
  %v2504 = vsel %vm207, %v2428, -inf
  %2505 = vmax.xlane.f32.xlu0 %v2504
  %v2506 = vpop.xlane.xlu0 %2505
  %v2507 = vsel %vm207, %v2433, -inf
  %2508 = vmax.xlane.f32.xlu0 %v2507
  %v2509 = vpop.xlane.xlu0 %2508
  %v2510 = vsel %vm207, %v2436, -inf
  %2511 = vmax.xlane.f32.xlu0 %v2510
  %v2512 = vpop.xlane.xlu0 %2511
  %v2513 = vsel %vm207, %v2441, -inf
  %2514 = vmax.xlane.f32.xlu0 %v2513
  %v2515 = vpop.xlane.xlu0 %2514
  %v2516 = vsel %vm207, %v2444, -inf
  %2517 = vmax.xlane.f32.xlu0 %v2516
  %v2518 = vpop.xlane.xlu0 %2517
  %v2519 = vsub.f32 %v2353, %v2449
  %v2520 = vsub.f32 %v2356, %v2452
  %v2521 = vsub.f32 %v2361, %v2455
  %v2522 = vsub.f32 %v2364, %v2458
  %v2523 = vsub.f32 %v2369, %v2461
  %v2524 = vsub.f32 %v2372, %v2464
  %v2525 = vsub.f32 %v2377, %v2467
  %v2526 = vsub.f32 %v2380, %v2470
  %v2527 = vsub.f32 %v2385, %v2473
  %v2528 = vsub.f32 %v2388, %v2476
  %v2529 = vsub.f32 %v2393, %v2479
  %v2530 = vsub.f32 %v2396, %v2482
  %v2531 = vsub.f32 %v2401, %v2485
  %v2532 = vsub.f32 %v2404, %v2488
  %v2533 = vsub.f32 %v2409, %v2491
  %v2534 = vsub.f32 %v2412, %v2494
  %v2535 = vsub.f32 %v2417, %v2497
  %v2536 = vsub.f32 %v2420, %v2500
  %v2537 = vsub.f32 %v2425, %v2503
  %v2538 = vsub.f32 %v2428, %v2506
  %v2539 = vsub.f32 %v2433, %v2509
  %v2540 = vsub.f32 %v2436, %v2512
  %v2541 = vsub.f32 %v2441, %v2515
  %v2542 = vsub.f32 %v2444, %v2518
  %v2543 = vmul.f32 %v2519, 1.442695
  %v2544 = vpow.pop %v2543
  %v2545 = vmul.f32 %v2520, 1.442695
  %v2546 = vpow.pop %v2545
  %v2547 = vmul.f32 %v2521, 1.442695
  %v2548 = vpow.pop %v2547
  %v2549 = vmul.f32 %v2522, 1.442695
  %v2550 = vpow.pop %v2549
  %v2551 = vmul.f32 %v2523, 1.442695
  %v2552 = vpow.pop %v2551
  %v2553 = vmul.f32 %v2524, 1.442695
  %v2554 = vpow.pop %v2553
  %v2555 = vmul.f32 %v2525, 1.442695
  %v2556 = vpow.pop %v2555
  %v2557 = vmul.f32 %v2526, 1.442695
  %v2558 = vpow.pop %v2557
  %v2559 = vmul.f32 %v2527, 1.442695
  %v2560 = vpow.pop %v2559
  %v2561 = vmul.f32 %v2528, 1.442695
  %v2562 = vpow.pop %v2561
  %v2563 = vmul.f32 %v2529, 1.442695
  %v2564 = vpow.pop %v2563
  %v2565 = vmul.f32 %v2530, 1.442695
  %v2566 = vpow.pop %v2565
  %v2567 = vmul.f32 %v2531, 1.442695
  %v2568 = vpow.pop %v2567
  %v2569 = vmul.f32 %v2532, 1.442695
  %v2570 = vpow.pop %v2569
  %v2571 = vmul.f32 %v2533, 1.442695
  %v2572 = vpow.pop %v2571
  %v2573 = vmul.f32 %v2534, 1.442695
  %v2574 = vpow.pop %v2573
  %v2575 = vmul.f32 %v2535, 1.442695
  %v2576 = vpow.pop %v2575
  %v2577 = vmul.f32 %v2536, 1.442695
  %v2578 = vpow.pop %v2577
  %v2579 = vmul.f32 %v2537, 1.442695
  %v2580 = vpow.pop %v2579
  %v2581 = vmul.f32 %v2538, 1.442695
  %v2582 = vpow.pop %v2581
  %v2583 = vmul.f32 %v2539, 1.442695
  %v2584 = vpow.pop %v2583
  %v2585 = vmul.f32 %v2540, 1.442695
  %v2586 = vpow.pop %v2585
  %v2587 = vmul.f32 %v2541, 1.442695
  %v2588 = vpow.pop %v2587
  %v2589 = vmul.f32 %v2542, 1.442695
  %v2590 = vpow.pop %v2589
  %v2591 = vsel %vm207, %v2544, 0.0
  %2592 = vadd.xlane.f32.xlu0 %v2591
  %v2593 = vpop.xlane.xlu0 %2592
  %v2594 = vsel %vm207, %v2546, 0.0
  %2595 = vadd.xlane.f32.xlu0 %v2594
  %v2596 = vpop.xlane.xlu0 %2595
  %v2597 = vsel %vm207, %v2548, 0.0
  %2598 = vadd.xlane.f32.xlu0 %v2597
  %v2599 = vpop.xlane.xlu0 %2598
  %v2600 = vsel %vm207, %v2550, 0.0
  %2601 = vadd.xlane.f32.xlu0 %v2600
  %v2602 = vpop.xlane.xlu0 %2601
  %v2603 = vsel %vm207, %v2552, 0.0
  %2604 = vadd.xlane.f32.xlu0 %v2603
  %v2605 = vpop.xlane.xlu0 %2604
  %v2606 = vsel %vm207, %v2554, 0.0
  %2607 = vadd.xlane.f32.xlu0 %v2606
  %v2608 = vpop.xlane.xlu0 %2607
  %v2609 = vsel %vm207, %v2556, 0.0
  %2610 = vadd.xlane.f32.xlu0 %v2609
  %v2611 = vpop.xlane.xlu0 %2610
  %v2612 = vsel %vm207, %v2558, 0.0
  %2613 = vadd.xlane.f32.xlu0 %v2612
  %v2614 = vpop.xlane.xlu0 %2613
  %v2615 = vsel %vm207, %v2560, 0.0
  %2616 = vadd.xlane.f32.xlu0 %v2615
  %v2617 = vpop.xlane.xlu0 %2616
  %v2618 = vsel %vm207, %v2562, 0.0
  %2619 = vadd.xlane.f32.xlu0 %v2618
  %v2620 = vpop.xlane.xlu0 %2619
  %v2621 = vsel %vm207, %v2564, 0.0
  %2622 = vadd.xlane.f32.xlu0 %v2621
  %v2623 = vpop.xlane.xlu0 %2622
  %v2624 = vsel %vm207, %v2566, 0.0
  %2625 = vadd.xlane.f32.xlu0 %v2624
  %v2626 = vpop.xlane.xlu0 %2625
  %v2627 = vsel %vm207, %v2568, 0.0
  %2628 = vadd.xlane.f32.xlu0 %v2627
  %v2629 = vpop.xlane.xlu0 %2628
  %v2630 = vsel %vm207, %v2570, 0.0
  %2631 = vadd.xlane.f32.xlu0 %v2630
  %v2632 = vpop.xlane.xlu0 %2631
  %v2633 = vsel %vm207, %v2572, 0.0
  %2634 = vadd.xlane.f32.xlu0 %v2633
  %v2635 = vpop.xlane.xlu0 %2634
  %v2636 = vsel %vm207, %v2574, 0.0
  %2637 = vadd.xlane.f32.xlu0 %v2636
  %v2638 = vpop.xlane.xlu0 %2637
  %v2639 = vsel %vm207, %v2576, 0.0
  %2640 = vadd.xlane.f32.xlu0 %v2639
  %v2641 = vpop.xlane.xlu0 %2640
  %v2642 = vsel %vm207, %v2578, 0.0
  %2643 = vadd.xlane.f32.xlu0 %v2642
  %v2644 = vpop.xlane.xlu0 %2643
  %v2645 = vsel %vm207, %v2580, 0.0
  %2646 = vadd.xlane.f32.xlu0 %v2645
  %v2647 = vpop.xlane.xlu0 %2646
  %v2648 = vsel %vm207, %v2582, 0.0
  %2649 = vadd.xlane.f32.xlu0 %v2648
  %v2650 = vpop.xlane.xlu0 %2649
  %v2651 = vsel %vm207, %v2584, 0.0
  %2652 = vadd.xlane.f32.xlu0 %v2651
  %v2653 = vpop.xlane.xlu0 %2652
  %v2654 = vsel %vm207, %v2586, 0.0
  %2655 = vadd.xlane.f32.xlu0 %v2654
  %v2656 = vpop.xlane.xlu0 %2655
  %v2657 = vsel %vm207, %v2588, 0.0
  %2658 = vadd.xlane.f32.xlu0 %v2657
  %v2659 = vpop.xlane.xlu0 %2658
  %v2660 = vsel %vm207, %v2590, 0.0
  %2661 = vadd.xlane.f32.xlu0 %v2660
  %v2662 = vpop.xlane.xlu0 %2661
  %v2663 = vrcp.pop %v2593
  %v2664 = vrcp.pop %v2596
  %v2665 = vrcp.pop %v2599
  %v2666 = vrcp.pop %v2602
  %v2667 = vrcp.pop %v2605
  %v2668 = vrcp.pop %v2608
  %v2669 = vrcp.pop %v2611
  %v2670 = vrcp.pop %v2614
  %v2671 = vrcp.pop %v2617
  %v2672 = vrcp.pop %v2620
  %v2673 = vrcp.pop %v2623
  %v2674 = vrcp.pop %v2626
  %v2675 = vrcp.pop %v2629
  %v2676 = vrcp.pop %v2632
  %v2677 = vrcp.pop %v2635
  %v2678 = vrcp.pop %v2638
  %v2679 = vrcp.pop %v2641
  %v2680 = vrcp.pop %v2644
  %v2681 = vrcp.pop %v2647
  %v2682 = vrcp.pop %v2650
  %v2683 = vrcp.pop %v2653
  %v2684 = vrcp.pop %v2656
  %v2685 = vrcp.pop %v2659
  %v2686 = vrcp.pop %v2662
  %v2687 = vmul.f32 %v2544, %v2663
  %v2688 = vmul.f32 %v2546, %v2664
  %v2689 = vmul.f32 %v2548, %v2665
  %v2690 = vmul.f32 %v2550, %v2666
  %v2691 = vmul.f32 %v2552, %v2667
  %v2692 = vmul.f32 %v2554, %v2668
  %v2693 = vmul.f32 %v2556, %v2669
  %v2694 = vmul.f32 %v2558, %v2670
  %v2695 = vmul.f32 %v2560, %v2671
  %v2696 = vmul.f32 %v2562, %v2672
  %v2697 = vmul.f32 %v2564, %v2673
  %v2698 = vmul.f32 %v2566, %v2674
  %v2699 = vmul.f32 %v2568, %v2675
  %v2700 = vmul.f32 %v2570, %v2676
  %v2701 = vmul.f32 %v2572, %v2677
  %v2702 = vmul.f32 %v2574, %v2678
  %v2703 = vmul.f32 %v2576, %v2679
  %v2704 = vmul.f32 %v2578, %v2680
  %v2705 = vmul.f32 %v2580, %v2681
  %v2706 = vmul.f32 %v2582, %v2682
  %v2707 = vmul.f32 %v2584, %v2683
  %v2708 = vmul.f32 %v2586, %v2684
  %v2709 = vmul.f32 %v2588, %v2685
  %v2710 = vmul.f32 %v2590, %v2686
  %v2711 = vpack.c.bf16 %v2688, %v2687
  %v2712 = vpack.c.bf16 %v2690, %v2689
  %v2713 = vpack.c.bf16 %v2692, %v2691
  %v2714 = vpack.c.bf16 %v2694, %v2693
  %v2715 = vpack.c.bf16 %v2696, %v2695
  %v2716 = vpack.c.bf16 %v2698, %v2697
  %v2717 = vpack.c.bf16 %v2700, %v2699
  %v2718 = vpack.c.bf16 %v2702, %v2701
  %v2719 = vpack.c.bf16 %v2704, %v2703
  %v2720 = vpack.c.bf16 %v2706, %v2705
  %v2721 = vpack.c.bf16 %v2708, %v2707
  %v2722 = vpack.c.bf16 %v2710, %v2709
  %v2723 = vpack.c.bf16 %v2209, %v2206
  %v2724 = vpack.c.bf16 %v2217, %v2214
  %v2725 = vpack.c.bf16 %v2225, %v2222
  %v2727 = vsel %vm207, %v2711, 0
  %v2730 = vsel %vm207, %v2712, 0
  %v2733 = vsel %vm207, %v2713, 0
  %v2736 = vsel %vm207, %v2714, 0
  %v2739 = vsel %vm207, %v2715, 0
  %v2742 = vsel %vm207, %v2716, 0
  %v2745 = vsel %vm207, %v2717, 0
  %v2748 = vsel %vm207, %v2718, 0
  %v2751 = vsel %vm207, %v2719, 0
  %v2754 = vsel %vm207, %v2720, 0
  %v2757 = vsel %vm207, %v2721, 0
  %v2760 = vsel %vm207, %v2722, 0
  %2762 = vmatprep.subr.bf16.mxu0 0
  %2763 = vmatpush1.bf16.msra.mxu0 0
  %2764 = vmatprep.subr.bf16.mxu0 0
  %2765 = vmatpush1.bf16.msra.mxu0 0
  %2766 = vmatprep.subr.bf16.mxu0 0
  %2767 = vmatpush1.bf16.msra.mxu0 0
  %2768 = vmatprep.subr.bf16.mxu0 0
  %2769 = vmatpush1.bf16.msra.mxu0 0
  %2770 = vmatprep.subr.bf16.mxu0 0
  %2771 = vmatpush1.bf16.msra.mxu0 0
  %2772 = vmatprep.subr.bf16.mxu0 0
  %2773 = vmatpush1.bf16.msra.mxu0 %v2725
  %2774 = vmatprep.subr.bf16.mxu0 0
  %2775 = vmatpush1.bf16.msra.mxu0 %v2724
  %2776 = vmatprep.subr.bf16.mxu0 0
  %2777 = vmatpush1.bf16.msra.mxu0 %v2723
  %2778 = vmatprep.subr.bf16.mxu0 0
  %2779 = vmatpush2.bf16.msra.mxu0 0
  %2780 = vmatprep.subr.bf16.mxu0 0
  %2781 = vmatpush2.bf16.msra.mxu0 0
  %2782 = vmatprep.subr.bf16.mxu0 0
  %2783 = vmatpush2.bf16.msra.mxu0 0
  %2784 = vmatprep.subr.bf16.mxu0 0
  %2785 = vmatpush2.bf16.msra.mxu0 0
  %2786 = vmatprep.subr.bf16.mxu0 0
  %2787 = vmatpush2.bf16.msra.mxu0 0
  %2788 = vmatprep.subr.bf16.mxu0 0
  %2789 = vmatpush2.bf16.msra.mxu0 0
  %2790 = vmatprep.subr.bf16.mxu0 0
  %2791 = vmatpush2.bf16.msra.mxu0 0
  %2792 = vmatprep.subr.bf16.mxu0 0
  %2793 = vmatpush2.bf16.msra.mxu0 0
  %2794 = vmatprep.mubr.bf16.mxu0 0
  %2795 = vmatmul.mubr.bf16.gmra.mxu0 %v2727
  %v2796 = vpop.f32.mrf.mxu0
  %v2797 = vadd.f32 0.0, %v2796
  %v2798 = vpop.f32.mrf.mxu0
  %v2799 = vpop.f32.mrf.mxu0
  %v2800 = vadd.f32 0.0, %v2799
  %v2801 = vpop.f32.mrf.mxu0
  %2802 = vmatprep.mubr.bf16.mxu0 0
  %2803 = vmatmul.mubr.bf16.gmra.mxu0 %v2730
  %v2804 = vpop.f32.mrf.mxu0
  %v2805 = vadd.f32 0.0, %v2804
  %v2806 = vpop.f32.mrf.mxu0
  %v2807 = vpop.f32.mrf.mxu0
  %v2808 = vadd.f32 0.0, %v2807
  %v2809 = vpop.f32.mrf.mxu0
  %2810 = vmatprep.mubr.bf16.mxu0 0
  %2811 = vmatmul.mubr.bf16.gmra.mxu0 %v2733
  %v2812 = vpop.f32.mrf.mxu0
  %v2813 = vadd.f32 0.0, %v2812
  %v2814 = vpop.f32.mrf.mxu0
  %v2815 = vpop.f32.mrf.mxu0
  %v2816 = vadd.f32 0.0, %v2815
  %v2817 = vpop.f32.mrf.mxu0
  %2818 = vmatprep.mubr.bf16.mxu0 0
  %2819 = vmatmul.mubr.bf16.gmra.mxu0 %v2736
  %v2820 = vpop.f32.mrf.mxu0
  %v2821 = vadd.f32 0.0, %v2820
  %v2822 = vpop.f32.mrf.mxu0
  %v2823 = vpop.f32.mrf.mxu0
  %v2824 = vadd.f32 0.0, %v2823
  %v2825 = vpop.f32.mrf.mxu0
  %2826 = vmatprep.mubr.bf16.mxu0 0
  %2827 = vmatmul.mubr.bf16.gmra.mxu0 %v2739
  %v2828 = vpop.f32.mrf.mxu0
  %v2829 = vadd.f32 0.0, %v2828
  %v2830 = vpop.f32.mrf.mxu0
  %v2831 = vpop.f32.mrf.mxu0
  %v2832 = vadd.f32 0.0, %v2831
  %v2833 = vpop.f32.mrf.mxu0
  %2834 = vmatprep.mubr.bf16.mxu0 0
  %2835 = vmatmul.mubr.bf16.gmra.mxu0 %v2742
  %v2836 = vpop.f32.mrf.mxu0
  %v2837 = vadd.f32 0.0, %v2836
  %v2838 = vpop.f32.mrf.mxu0
  %v2839 = vpop.f32.mrf.mxu0
  %v2840 = vadd.f32 0.0, %v2839
  %v2841 = vpop.f32.mrf.mxu0
  %2842 = vmatprep.mubr.bf16.mxu0 0
  %2843 = vmatmul.mubr.bf16.gmra.mxu0 %v2745
  %v2844 = vpop.f32.mrf.mxu0
  %v2845 = vadd.f32 0.0, %v2844
  %v2846 = vpop.f32.mrf.mxu0
  %v2847 = vpop.f32.mrf.mxu0
  %v2848 = vadd.f32 0.0, %v2847
  %v2849 = vpop.f32.mrf.mxu0
  %2850 = vmatprep.mubr.bf16.mxu0 0
  %2851 = vmatmul.mubr.bf16.gmra.mxu0 %v2748
  %v2852 = vpop.f32.mrf.mxu0
  %v2853 = vadd.f32 0.0, %v2852
  %v2854 = vpop.f32.mrf.mxu0
  %v2855 = vpop.f32.mrf.mxu0
  %v2856 = vadd.f32 0.0, %v2855
  %v2857 = vpop.f32.mrf.mxu0
  %2858 = vmatprep.mubr.bf16.mxu0 0
  %2859 = vmatmul.mubr.bf16.gmra.mxu0 %v2751
  %v2860 = vpop.f32.mrf.mxu0
  %v2861 = vadd.f32 0.0, %v2860
  %v2862 = vpop.f32.mrf.mxu0
  %v2863 = vpop.f32.mrf.mxu0
  %v2864 = vadd.f32 0.0, %v2863
  %v2865 = vpop.f32.mrf.mxu0
  %2866 = vmatprep.mubr.bf16.mxu0 0
  %2867 = vmatmul.mubr.bf16.gmra.mxu0 %v2754
  %v2868 = vpop.f32.mrf.mxu0
  %v2869 = vadd.f32 0.0, %v2868
  %v2870 = vpop.f32.mrf.mxu0
  %v2871 = vpop.f32.mrf.mxu0
  %v2872 = vadd.f32 0.0, %v2871
  %v2873 = vpop.f32.mrf.mxu0
  %2874 = vmatprep.mubr.bf16.mxu0 0
  %2875 = vmatmul.mubr.bf16.gmra.mxu0 %v2757
  %v2876 = vpop.f32.mrf.mxu0
  %v2877 = vadd.f32 0.0, %v2876
  %v2878 = vpop.f32.mrf.mxu0
  %v2879 = vpop.f32.mrf.mxu0
  %v2880 = vadd.f32 0.0, %v2879
  %v2881 = vpop.f32.mrf.mxu0
  %2882 = vmatprep.mubr.bf16.mxu0 0
  %2883 = vmatmul.mubr.bf16.gmra.mxu0 %v2760
  %v2884 = vpop.f32.mrf.mxu0
  %v2885 = vadd.f32 0.0, %v2884
  %v2886 = vpop.f32.mrf.mxu0
  %v2887 = vpop.f32.mrf.mxu0
  %v2888 = vadd.f32 0.0, %v2887
  %v2889 = vpop.f32.mrf.mxu0
  %2890 = vdwg.mxu0
  %v2891 = vmul.f32 %v2797, %v641
  %v2892 = vmul.f32 %v2800, %v641
  %v2893 = vmul.f32 %v2805, %v641
  %v2894 = vmul.f32 %v2808, %v641
  %v2895 = vmul.f32 %v2813, %v641
  %v2896 = vmul.f32 %v2816, %v641
  %v2897 = vmul.f32 %v2821, %v651
  %v2898 = vmul.f32 %v2824, %v651
  %v2899 = vmul.f32 %v2829, %v651
  %v2900 = vmul.f32 %v2832, %v651
  %v2901 = vmul.f32 %v2837, %v651
  %v2902 = vmul.f32 %v2840, %v651
  %v2903 = vadd.f32 %v2891, %v2897
  %v2904 = vadd.f32 %v2892, %v2898
  %v2905 = vadd.f32 %v2893, %v2899
  %v2906 = vadd.f32 %v2894, %v2900
  %v2907 = vadd.f32 %v2895, %v2901
  %v2908 = vadd.f32 %v2896, %v2902
  %v2909 = vmul.f32 %v2845, %v661
  %v2910 = vmul.f32 %v2848, %v661
  %v2911 = vmul.f32 %v2853, %v661
  %v2912 = vmul.f32 %v2856, %v661
  %v2913 = vmul.f32 %v2861, %v661
  %v2914 = vmul.f32 %v2864, %v661
  %v2915 = vadd.f32 %v2903, %v2909
  %v2916 = vadd.f32 %v2904, %v2910
  %v2917 = vadd.f32 %v2905, %v2911
  %v2918 = vadd.f32 %v2906, %v2912
  %v2919 = vadd.f32 %v2907, %v2913
  %v2920 = vadd.f32 %v2908, %v2914
  %v2921 = vmul.f32 %v2869, %v671
  %v2922 = vmul.f32 %v2872, %v671
  %v2923 = vmul.f32 %v2877, %v671
  %v2924 = vmul.f32 %v2880, %v671
  %v2925 = vmul.f32 %v2885, %v671
  %v2926 = vmul.f32 %v2888, %v671
  %v2927 = vadd.f32 %v2915, %v2921
  %v2928 = vadd.f32 %v2916, %v2922
  %v2929 = vadd.f32 %v2917, %v2923
  %v2930 = vadd.f32 %v2918, %v2924
  %v2931 = vadd.f32 %v2919, %v2925
  %v2932 = vadd.f32 %v2920, %v2926
  %v2933 = vpack.c.bf16 %v2928, %v2927
  %v2934 = vpack.c.bf16 %v2930, %v2929
  %v2935 = vpack.c.bf16 %v2932, %v2931
  %s2936 = scalar_lea.vmem %s27, 16
  %v2937 = vld [vmem:[%s2936] sm:$0xf]
  %v2938 = vld [vmem:[%s2936 + $0x4] sm:$0xf]
  %v2939 = vld [vmem:[%s2936 + $0x8] sm:$0xf]
  %v2940 = vld [vmem:[%s2936 + $0xc] sm:$0xf]
  %s2941 = scalar_lea.vmem %s29, 1
  %v2942 = vld [vmem:[%s2941] sm:$0x1]
  %v2944 = vlaneseq
  %v2945 = vshrl.u32 %v2944, 7
  %v2946 = vsub.s32 0, %v2945
  %v2947 = vrot.slane %v2942, %v2946
  %v2953 = vunpack.c.l.b16 %v2937
  %v2954 = vunpack.c.l.b16 %v2938
  %v2955 = vunpack.c.l.b16 %v2939
  %v2956 = vunpack.c.l.b16 %v2940
  %v2957 = vpack.c.b16 %v2954, %v2953
  %v2958 = vpack.c.b16 %v2956, %v2955
  %v2962 = vsel %vm276, %v2933, 0
  %v2965 = vsel %vm276, %v2934, 0
  %v2968 = vsel %vm276, %v2935, 0
  %2970 = vmatprep.subr.bf16.mxu0 0
  %2971 = vmatpush1.bf16.msra.mxu0 0
  %2972 = vmatprep.subr.bf16.mxu0 0
  %2973 = vmatpush1.bf16.msra.mxu0 0
  %2974 = vmatprep.subr.bf16.mxu0 0
  %2975 = vmatpush1.bf16.msra.mxu0 0
  %2976 = vmatprep.subr.bf16.mxu0 0
  %2977 = vmatpush1.bf16.msra.mxu0 0
  %2978 = vmatprep.subr.bf16.mxu0 0
  %2979 = vmatpush1.bf16.msra.mxu0 0
  %2980 = vmatprep.subr.bf16.mxu0 0
  %2981 = vmatpush1.bf16.msra.mxu0 0
  %2982 = vmatprep.subr.bf16.mxu0 0
  %2983 = vmatpush1.bf16.msra.mxu0 %v2958
  %2984 = vmatprep.subr.bf16.mxu0 0
  %2985 = vmatpush1.bf16.msra.mxu0 %v2957
  %2986 = vmatprep.subr.bf16.mxu0 0
  %2987 = vmatpush2.bf16.msra.mxu0 0
  %2988 = vmatprep.subr.bf16.mxu0 0
  %2989 = vmatpush2.bf16.msra.mxu0 0
  %2990 = vmatprep.subr.bf16.mxu0 0
  %2991 = vmatpush2.bf16.msra.mxu0 0
  %2992 = vmatprep.subr.bf16.mxu0 0
  %2993 = vmatpush2.bf16.msra.mxu0 0
  %2994 = vmatprep.subr.bf16.mxu0 0
  %2995 = vmatpush2.bf16.msra.mxu0 0
  %2996 = vmatprep.subr.bf16.mxu0 0
  %2997 = vmatpush2.bf16.msra.mxu0 0
  %2998 = vmatprep.subr.bf16.mxu0 0
  %2999 = vmatpush2.bf16.msra.mxu0 0
  %3000 = vmatprep.subr.bf16.mxu0 0
  %3001 = vmatpush2.bf16.msra.mxu0 0
  %3002 = vmatprep.mubr.bf16.mxu0 0
  %3003 = vmatmul.mubr.bf16.gmra.mxu0 %v2962
  %v3004 = vpop.f32.mrf.mxu0
  %v3005 = vadd.f32 %v2947, %v3004
  %v3006 = vpop.f32.mrf.mxu0
  %v3007 = vpop.f32.mrf.mxu0
  %v3008 = vadd.f32 %v2947, %v3007
  %v3009 = vpop.f32.mrf.mxu0
  %3010 = vmatprep.mubr.bf16.mxu0 0
  %3011 = vmatmul.mubr.bf16.gmra.mxu0 %v2965
  %v3012 = vpop.f32.mrf.mxu0
  %v3013 = vadd.f32 %v2947, %v3012
  %v3014 = vpop.f32.mrf.mxu0
  %v3015 = vpop.f32.mrf.mxu0
  %v3016 = vadd.f32 %v2947, %v3015
  %v3017 = vpop.f32.mrf.mxu0
  %3018 = vmatprep.mubr.bf16.mxu0 0
  %3019 = vmatmul.mubr.bf16.gmra.mxu0 %v2968
  %v3020 = vpop.f32.mrf.mxu0
  %v3021 = vadd.f32 %v2947, %v3020
  %v3022 = vpop.f32.mrf.mxu0
  %v3023 = vpop.f32.mrf.mxu0
  %v3024 = vadd.f32 %v2947, %v3023
  %v3025 = vpop.f32.mrf.mxu0
  %3026 = vdwg.mxu0
  %s3027 = scalar_lea.vmem %s31, 1
  %v3028 = vld [vmem:[%s3027] sm:$0x1]
  %v3030 = vlaneseq
  %v3031 = vshrl.u32 %v3030, 7
  %v3032 = vsub.s32 0, %v3031
  %v3033 = vrot.slane %v3028, %v3032
  %v3035 = vmul.f32 %v3033, %v3005
  %v3036 = vmul.f32 %v3033, %v3008
  %v3037 = vmul.f32 %v3033, %v3013
  %v3038 = vmul.f32 %v3033, %v3016
  %v3039 = vmul.f32 %v3033, %v3021
  %v3040 = vmul.f32 %v3033, %v3024
  %v3041 = vadd.f32 %v1858, %v3035
  %v3042 = vadd.f32 %v1859, %v3036
  %v3043 = vadd.f32 %v1860, %v3037
  %v3044 = vadd.f32 %v1861, %v3038
  %v3045 = vadd.f32 %v1862, %v3039
  %v3046 = vadd.f32 %v1863, %v3040
  %s3047 = scalar_lea.vmem %s33, 1
  %v3048 = vld [vmem:[%s3047] sm:$0x1]
  %s3049 = scalar_lea.vmem %s35, 1
  %v3050 = vld [vmem:[%s3049] sm:$0x1]
  %v3051 = vsel %vm276, %v3041, 0.0
  %3052 = vadd.xlane.f32.xlu0 %v3051
  %v3053 = vpop.xlane.xlu0 %3052
  %v3054 = vsel %vm276, %v3042, 0.0
  %3055 = vadd.xlane.f32.xlu0 %v3054
  %v3056 = vpop.xlane.xlu0 %3055
  %v3057 = vsel %vm276, %v3043, 0.0
  %3058 = vadd.xlane.f32.xlu0 %v3057
  %v3059 = vpop.xlane.xlu0 %3058
  %v3060 = vsel %vm276, %v3044, 0.0
  %3061 = vadd.xlane.f32.xlu0 %v3060
  %v3062 = vpop.xlane.xlu0 %3061
  %v3063 = vsel %vm276, %v3045, 0.0
  %3064 = vadd.xlane.f32.xlu0 %v3063
  %v3065 = vpop.xlane.xlu0 %3064
  %v3066 = vsel %vm276, %v3046, 0.0
  %3067 = vadd.xlane.f32.xlu0 %v3066
  %v3068 = vpop.xlane.xlu0 %3067
  %v3069 = vmul.f32 %v3053, %v295
  %v3070 = vmul.f32 %v3056, %v295
  %v3071 = vmul.f32 %v3059, %v295
  %v3072 = vmul.f32 %v3062, %v295
  %v3073 = vmul.f32 %v3065, %v295
  %v3074 = vmul.f32 %v3068, %v295
  %v3075 = vsub.f32 %v3041, %v3069
  %v3076 = vsub.f32 %v3042, %v3070
  %v3077 = vsub.f32 %v3043, %v3071
  %v3078 = vsub.f32 %v3044, %v3072
  %v3079 = vsub.f32 %v3045, %v3073
  %v3080 = vsub.f32 %v3046, %v3074
  %v3081 = vmul.f32 %v3075, %v3075
  %v3082 = vmul.f32 %v3076, %v3076
  %v3083 = vmul.f32 %v3077, %v3077
  %v3084 = vmul.f32 %v3078, %v3078
  %v3085 = vmul.f32 %v3079, %v3079
  %v3086 = vmul.f32 %v3080, %v3080
  %v3087 = vsel %vm276, %v3081, 0.0
  %3088 = vadd.xlane.f32.xlu0 %v3087
  %v3089 = vpop.xlane.xlu0 %3088
  %v3090 = vsel %vm276, %v3082, 0.0
  %3091 = vadd.xlane.f32.xlu0 %v3090
  %v3092 = vpop.xlane.xlu0 %3091
  %v3093 = vsel %vm276, %v3083, 0.0
  %3094 = vadd.xlane.f32.xlu0 %v3093
  %v3095 = vpop.xlane.xlu0 %3094
  %v3096 = vsel %vm276, %v3084, 0.0
  %3097 = vadd.xlane.f32.xlu0 %v3096
  %v3098 = vpop.xlane.xlu0 %3097
  %v3099 = vsel %vm276, %v3085, 0.0
  %3100 = vadd.xlane.f32.xlu0 %v3099
  %v3101 = vpop.xlane.xlu0 %3100
  %v3102 = vsel %vm276, %v3086, 0.0
  %3103 = vadd.xlane.f32.xlu0 %v3102
  %v3104 = vpop.xlane.xlu0 %3103
  %v3105 = vmul.f32 %v3089, %v295
  %v3106 = vmul.f32 %v3092, %v295
  %v3107 = vmul.f32 %v3095, %v295
  %v3108 = vmul.f32 %v3098, %v295
  %v3109 = vmul.f32 %v3101, %v295
  %v3110 = vmul.f32 %v3104, %v295
  %v3111 = vadd.f32 %v3105, 1e-05
  %v3112 = vadd.f32 %v3106, 1e-05
  %v3113 = vadd.f32 %v3107, 1e-05
  %v3114 = vadd.f32 %v3108, 1e-05
  %v3115 = vadd.f32 %v3109, 1e-05
  %v3116 = vadd.f32 %v3110, 1e-05
  %v3117 = vrsqrt.pop %v3111
  %v3118 = vrsqrt.pop %v3112
  %v3119 = vrsqrt.pop %v3113
  %v3120 = vrsqrt.pop %v3114
  %v3121 = vrsqrt.pop %v3115
  %v3122 = vrsqrt.pop %v3116
  %v3123 = vmul.f32 %v3075, %v3117
  %v3124 = vmul.f32 %v3076, %v3118
  %v3125 = vmul.f32 %v3077, %v3119
  %v3126 = vmul.f32 %v3078, %v3120
  %v3127 = vmul.f32 %v3079, %v3121
  %v3128 = vmul.f32 %v3080, %v3122
  %v3130 = vlaneseq
  %v3131 = vshrl.u32 %v3130, 7
  %v3132 = vsub.s32 0, %v3131
  %v3133 = vrot.slane %v3048, %v3132
  %v3135 = vmul.f32 %v3123, %v3133
  %v3136 = vmul.f32 %v3124, %v3133
  %v3137 = vmul.f32 %v3125, %v3133
  %v3138 = vmul.f32 %v3126, %v3133
  %v3139 = vmul.f32 %v3127, %v3133
  %v3140 = vmul.f32 %v3128, %v3133
  %v3142 = vlaneseq
  %v3143 = vshrl.u32 %v3142, 7
  %v3144 = vsub.s32 0, %v3143
  %v3145 = vrot.slane %v3050, %v3144
  %v3147 = vadd.f32 %v3135, %v3145
  %v3148 = vadd.f32 %v3136, %v3145
  %v3149 = vadd.f32 %v3137, %v3145
  %v3150 = vadd.f32 %v3138, %v3145
  %v3151 = vadd.f32 %v3139, %v3145
  %v3152 = vadd.f32 %v3140, %v3145
  %v3153 = vpack.c.bf16 %v3148, %v3147
  %v3154 = vpack.c.bf16 %v3150, %v3149
  %v3155 = vpack.c.bf16 %v3152, %v3151
  %s3156 = scalar_lea.vmem %s37, 16
  %v3157 = vld [vmem:[%s3156] sm:$0xf]
  %v3158 = vld [vmem:[%s3156 + $0x4] sm:$0xf]
  %v3159 = vld [vmem:[%s3156 + $0x8] sm:$0xf]
  %v3160 = vld [vmem:[%s3156 + $0xc] sm:$0xf]
  %s3161 = scalar_lea.vmem %s39, 1
  %v3162 = vld [vmem:[%s3161] sm:$0x1]
  %v3164 = vlaneseq
  %v3165 = vshrl.u32 %v3164, 7
  %v3166 = vsub.s32 0, %v3165
  %v3167 = vrot.slane %v3162, %v3166
  %v3173 = vunpack.c.l.b16 %v3157
  %v3174 = vunpack.c.l.b16 %v3158
  %v3175 = vunpack.c.l.b16 %v3159
  %v3176 = vunpack.c.l.b16 %v3160
  %v3177 = vpack.c.b16 %v3174, %v3173
  %v3178 = vpack.c.b16 %v3176, %v3175
  %v3182 = vsel %vm276, %v3153, 0
  %v3185 = vsel %vm276, %v3154, 0
  %v3188 = vsel %vm276, %v3155, 0
  %3190 = vmatprep.subr.bf16.mxu0 0
  %3191 = vmatpush1.bf16.msra.mxu0 0
  %3192 = vmatprep.subr.bf16.mxu0 0
  %3193 = vmatpush1.bf16.msra.mxu0 0
  %3194 = vmatprep.subr.bf16.mxu0 0
  %3195 = vmatpush1.bf16.msra.mxu0 0
  %3196 = vmatprep.subr.bf16.mxu0 0
  %3197 = vmatpush1.bf16.msra.mxu0 0
  %3198 = vmatprep.subr.bf16.mxu0 0
  %3199 = vmatpush1.bf16.msra.mxu0 0
  %3200 = vmatprep.subr.bf16.mxu0 0
  %3201 = vmatpush1.bf16.msra.mxu0 0
  %3202 = vmatprep.subr.bf16.mxu0 0
  %3203 = vmatpush1.bf16.msra.mxu0 %v3178
  %3204 = vmatprep.subr.bf16.mxu0 0
  %3205 = vmatpush1.bf16.msra.mxu0 %v3177
  %3206 = vmatprep.subr.bf16.mxu0 0
  %3207 = vmatpush2.bf16.msra.mxu0 0
  %3208 = vmatprep.subr.bf16.mxu0 0
  %3209 = vmatpush2.bf16.msra.mxu0 0
  %3210 = vmatprep.subr.bf16.mxu0 0
  %3211 = vmatpush2.bf16.msra.mxu0 0
  %3212 = vmatprep.subr.bf16.mxu0 0
  %3213 = vmatpush2.bf16.msra.mxu0 0
  %3214 = vmatprep.subr.bf16.mxu0 0
  %3215 = vmatpush2.bf16.msra.mxu0 0
  %3216 = vmatprep.subr.bf16.mxu0 0
  %3217 = vmatpush2.bf16.msra.mxu0 0
  %3218 = vmatprep.subr.bf16.mxu0 0
  %3219 = vmatpush2.bf16.msra.mxu0 0
  %3220 = vmatprep.subr.bf16.mxu0 0
  %3221 = vmatpush2.bf16.msra.mxu0 0
  %3222 = vmatprep.mubr.bf16.mxu0 0
  %3223 = vmatmul.mubr.bf16.gmra.mxu0 %v3182
  %v3224 = vpop.f32.mrf.mxu0
  %v3225 = vadd.f32 %v3167, %v3224
  %v3226 = vpop.f32.mrf.mxu0
  %v3227 = vpop.f32.mrf.mxu0
  %v3228 = vadd.f32 %v3167, %v3227
  %v3229 = vpop.f32.mrf.mxu0
  %3230 = vmatprep.mubr.bf16.mxu0 0
  %3231 = vmatmul.mubr.bf16.gmra.mxu0 %v3185
  %v3232 = vpop.f32.mrf.mxu0
  %v3233 = vadd.f32 %v3167, %v3232
  %v3234 = vpop.f32.mrf.mxu0
  %v3235 = vpop.f32.mrf.mxu0
  %v3236 = vadd.f32 %v3167, %v3235
  %v3237 = vpop.f32.mrf.mxu0
  %3238 = vmatprep.mubr.bf16.mxu0 0
  %3239 = vmatmul.mubr.bf16.gmra.mxu0 %v3188
  %v3240 = vpop.f32.mrf.mxu0
  %v3241 = vadd.f32 %v3167, %v3240
  %v3242 = vpop.f32.mrf.mxu0
  %v3243 = vpop.f32.mrf.mxu0
  %v3244 = vadd.f32 %v3167, %v3243
  %v3245 = vpop.f32.mrf.mxu0
  %3246 = vdwg.mxu0
  %v3247 = vmul.f32 %v3225, %v3225
  %v3248 = vmul.f32 %v3228, %v3228
  %v3249 = vmul.f32 %v3233, %v3233
  %v3250 = vmul.f32 %v3236, %v3236
  %v3251 = vmul.f32 %v3241, %v3241
  %v3252 = vmul.f32 %v3244, %v3244
  %v3253 = vmul.f32 %v3225, %v3247
  %v3254 = vmul.f32 %v3228, %v3248
  %v3255 = vmul.f32 %v3233, %v3249
  %v3256 = vmul.f32 %v3236, %v3250
  %v3257 = vmul.f32 %v3241, %v3251
  %v3258 = vmul.f32 %v3244, %v3252
  %v3259 = vmul.f32 %v3253, 0.044715
  %v3260 = vmul.f32 %v3254, 0.044715
  %v3261 = vmul.f32 %v3255, 0.044715
  %v3262 = vmul.f32 %v3256, 0.044715
  %v3263 = vmul.f32 %v3257, 0.044715
  %v3264 = vmul.f32 %v3258, 0.044715
  %v3265 = vadd.f32 %v3225, %v3259
  %v3266 = vadd.f32 %v3228, %v3260
  %v3267 = vadd.f32 %v3233, %v3261
  %v3268 = vadd.f32 %v3236, %v3262
  %v3269 = vadd.f32 %v3241, %v3263
  %v3270 = vadd.f32 %v3244, %v3264
  %v3271 = vmul.f32 %v3265, 0.7978846
  %v3272 = vmul.f32 %v3266, 0.7978846
  %v3273 = vmul.f32 %v3267, 0.7978846
  %v3274 = vmul.f32 %v3268, 0.7978846
  %v3275 = vmul.f32 %v3269, 0.7978846
  %v3276 = vmul.f32 %v3270, 0.7978846
  %v3277 = vtanh.pop %v3271
  %v3278 = vtanh.pop %v3272
  %v3279 = vtanh.pop %v3273
  %v3280 = vtanh.pop %v3274
  %v3281 = vtanh.pop %v3275
  %v3282 = vtanh.pop %v3276
  %v3283 = vadd.f32 %v3277, 1.0
  %v3284 = vadd.f32 %v3278, 1.0
  %v3285 = vadd.f32 %v3279, 1.0
  %v3286 = vadd.f32 %v3280, 1.0
  %v3287 = vadd.f32 %v3281, 1.0
  %v3288 = vadd.f32 %v3282, 1.0
  %v3289 = vmul.f32 %v3283, 0.5
  %v3290 = vmul.f32 %v3284, 0.5
  %v3291 = vmul.f32 %v3285, 0.5
  %v3292 = vmul.f32 %v3286, 0.5
  %v3293 = vmul.f32 %v3287, 0.5
  %v3294 = vmul.f32 %v3288, 0.5
  %v3295 = vmul.f32 %v3225, %v3289
  %v3296 = vmul.f32 %v3228, %v3290
  %v3297 = vmul.f32 %v3233, %v3291
  %v3298 = vmul.f32 %v3236, %v3292
  %v3299 = vmul.f32 %v3241, %v3293
  %v3300 = vmul.f32 %v3244, %v3294
  %v3301 = vpack.c.bf16 %v3296, %v3295
  %v3302 = vpack.c.bf16 %v3298, %v3297
  %v3303 = vpack.c.bf16 %v3300, %v3299
  %s3304 = scalar_lea.vmem %s41, 64
  %v3305 = vld [vmem:[%s3304] sm:$0xf]
  %v3306 = vld [vmem:[%s3304 + $0x4] sm:$0xf]
  %v3307 = vld [vmem:[%s3304 + $0x8] sm:$0xf]
  %v3308 = vld [vmem:[%s3304 + $0xc] sm:$0xf]
  %v3309 = vld [vmem:[%s3304 + $0x10] sm:$0xf]
  %v3310 = vld [vmem:[%s3304 + $0x14] sm:$0xf]
  %v3311 = vld [vmem:[%s3304 + $0x18] sm:$0xf]
  %v3312 = vld [vmem:[%s3304 + $0x1c] sm:$0xf]
  %v3313 = vld [vmem:[%s3304 + $0x20] sm:$0xf]
  %v3314 = vld [vmem:[%s3304 + $0x24] sm:$0xf]
  %v3315 = vld [vmem:[%s3304 + $0x28] sm:$0xf]
  %v3316 = vld [vmem:[%s3304 + $0x2c] sm:$0xf]
  %v3317 = vld [vmem:[%s3304 + $0x30] sm:$0xf]
  %v3318 = vld [vmem:[%s3304 + $0x34] sm:$0xf]
  %v3319 = vld [vmem:[%s3304 + $0x38] sm:$0xf]
  %v3320 = vld [vmem:[%s3304 + $0x3c] sm:$0xf]
  %s3321 = scalar_lea.vmem %s43, 1
  %v3322 = vld [vmem:[%s3321] sm:$0x1]
  %v3324 = vlaneseq
  %v3325 = vshrl.u32 %v3324, 7
  %v3326 = vsub.s32 0, %v3325
  %v3327 = vrot.slane %v3322, %v3326
  %v3345 = vunpack.c.l.b16 %v3305
  %v3346 = vunpack.c.l.b16 %v3306
  %v3347 = vunpack.c.l.b16 %v3307
  %v3348 = vunpack.c.l.b16 %v3308
  %v3349 = vunpack.c.l.b16 %v3309
  %v3350 = vunpack.c.l.b16 %v3310
  %v3351 = vunpack.c.l.b16 %v3311
  %v3352 = vunpack.c.l.b16 %v3312
  %v3353 = vunpack.c.l.b16 %v3313
  %v3354 = vunpack.c.l.b16 %v3314
  %v3355 = vunpack.c.l.b16 %v3315
  %v3356 = vunpack.c.l.b16 %v3316
  %v3357 = vunpack.c.l.b16 %v3317
  %v3358 = vunpack.c.l.b16 %v3318
  %v3359 = vunpack.c.l.b16 %v3319
  %v3360 = vunpack.c.l.b16 %v3320
  %v3361 = vpack.c.b16 %v3346, %v3345
  %v3362 = vpack.c.b16 %v3348, %v3347
  %v3363 = vpack.c.b16 %v3350, %v3349
  %v3364 = vpack.c.b16 %v3352, %v3351
  %v3365 = vpack.c.b16 %v3354, %v3353
  %v3366 = vpack.c.b16 %v3356, %v3355
  %v3367 = vpack.c.b16 %v3358, %v3357
  %v3368 = vpack.c.b16 %v3360, %v3359
  %3377 = vmatprep.subr.bf16.mxu0 0
  %3378 = vmatpush1.bf16.msra.mxu0 %v3368
  %3379 = vmatprep.subr.bf16.mxu0 0
  %3380 = vmatpush1.bf16.msra.mxu0 %v3367
  %3381 = vmatprep.subr.bf16.mxu0 0
  %3382 = vmatpush1.bf16.msra.mxu0 %v3366
  %3383 = vmatprep.subr.bf16.mxu0 0
  %3384 = vmatpush1.bf16.msra.mxu0 %v3365
  %3385 = vmatprep.subr.bf16.mxu0 0
  %3386 = vmatpush1.bf16.msra.mxu0 %v3364
  %3387 = vmatprep.subr.bf16.mxu0 0
  %3388 = vmatpush1.bf16.msra.mxu0 %v3363
  %3389 = vmatprep.subr.bf16.mxu0 0
  %3390 = vmatpush1.bf16.msra.mxu0 %v3362
  %3391 = vmatprep.subr.bf16.mxu0 0
  %3392 = vmatpush1.bf16.msra.mxu0 %v3361
  %3393 = vmatprep.subr.bf16.mxu0 0
  %3394 = vmatpush2.bf16.msra.mxu0 0
  %3395 = vmatprep.subr.bf16.mxu0 0
  %3396 = vmatpush2.bf16.msra.mxu0 0
  %3397 = vmatprep.subr.bf16.mxu0 0
  %3398 = vmatpush2.bf16.msra.mxu0 0
  %3399 = vmatprep.subr.bf16.mxu0 0
  %3400 = vmatpush2.bf16.msra.mxu0 0
  %3401 = vmatprep.subr.bf16.mxu0 0
  %3402 = vmatpush2.bf16.msra.mxu0 0
  %3403 = vmatprep.subr.bf16.mxu0 0
  %3404 = vmatpush2.bf16.msra.mxu0 0
  %3405 = vmatprep.subr.bf16.mxu0 0
  %3406 = vmatpush2.bf16.msra.mxu0 0
  %3407 = vmatprep.subr.bf16.mxu0 0
  %3408 = vmatpush2.bf16.msra.mxu0 0
  %3409 = vmatprep.mubr.bf16.mxu0 0
  %3410 = vmatmul.mubr.bf16.gmra.mxu0 %v3301
  %v3411 = vpop.f32.mrf.mxu0
  %v3412 = vadd.f32 %v3327, %v3411
  %v3413 = vpop.f32.mrf.mxu0
  %v3414 = vpop.f32.mrf.mxu0
  %v3415 = vadd.f32 %v3327, %v3414
  %v3416 = vpop.f32.mrf.mxu0
  %3417 = vmatprep.mubr.bf16.mxu0 0
  %3418 = vmatmul.mubr.bf16.gmra.mxu0 %v3302
  %v3419 = vpop.f32.mrf.mxu0
  %v3420 = vadd.f32 %v3327, %v3419
  %v3421 = vpop.f32.mrf.mxu0
  %v3422 = vpop.f32.mrf.mxu0
  %v3423 = vadd.f32 %v3327, %v3422
  %v3424 = vpop.f32.mrf.mxu0
  %3425 = vmatprep.mubr.bf16.mxu0 0
  %3426 = vmatmul.mubr.bf16.gmra.mxu0 %v3303
  %v3427 = vpop.f32.mrf.mxu0
  %v3428 = vadd.f32 %v3327, %v3427
  %v3429 = vpop.f32.mrf.mxu0
  %v3430 = vpop.f32.mrf.mxu0
  %v3431 = vadd.f32 %v3327, %v3430
  %v3432 = vpop.f32.mrf.mxu0
  %3433 = vdwg.mxu0
  %s3434 = scalar_lea.vmem %s45, 1
  %v3435 = vld [vmem:[%s3434] sm:$0x1]
  %v3437 = vlaneseq
  %v3438 = vshrl.u32 %v3437, 7
  %v3439 = vsub.s32 0, %v3438
  %v3440 = vrot.slane %v3435, %v3439
  %v3442 = vmul.f32 %v3440, %v3412
  %v3443 = vmul.f32 %v3440, %v3415
  %v3444 = vmul.f32 %v3440, %v3420
  %v3445 = vmul.f32 %v3440, %v3423
  %v3446 = vmul.f32 %v3440, %v3428
  %v3447 = vmul.f32 %v3440, %v3431
  %v3448 = vadd.f32 %v3041, %v3442
  %v3449 = vadd.f32 %v3042, %v3443
  %v3450 = vadd.f32 %v3043, %v3444
  %v3451 = vadd.f32 %v3044, %v3445
  %v3452 = vadd.f32 %v3045, %v3446
  %v3453 = vadd.f32 %v3046, %v3447
  %v3454 = vld [vmem:[%s47] sm:$0x1]
  %v3455 = vld [vmem:[%s49] sm:$0x1]
  %v3456 = vsel %vm276, %v3448, 0.0
  %3457 = vadd.xlane.f32.xlu0 %v3456
  %v3458 = vpop.xlane.xlu0 %3457
  %v3459 = vsel %vm276, %v3449, 0.0
  %3460 = vadd.xlane.f32.xlu0 %v3459
  %v3461 = vpop.xlane.xlu0 %3460
  %v3462 = vsel %vm276, %v3450, 0.0
  %3463 = vadd.xlane.f32.xlu0 %v3462
  %v3464 = vpop.xlane.xlu0 %3463
  %v3465 = vsel %vm276, %v3451, 0.0
  %3466 = vadd.xlane.f32.xlu0 %v3465
  %v3467 = vpop.xlane.xlu0 %3466
  %v3468 = vsel %vm276, %v3452, 0.0
  %3469 = vadd.xlane.f32.xlu0 %v3468
  %v3470 = vpop.xlane.xlu0 %3469
  %v3471 = vsel %vm276, %v3453, 0.0
  %3472 = vadd.xlane.f32.xlu0 %v3471
  %v3473 = vpop.xlane.xlu0 %3472
  %v3474 = vmul.f32 %v3458, %v295
  %v3475 = vmul.f32 %v3461, %v295
  %v3476 = vmul.f32 %v3464, %v295
  %v3477 = vmul.f32 %v3467, %v295
  %v3478 = vmul.f32 %v3470, %v295
  %v3479 = vmul.f32 %v3473, %v295
  %v3480 = vsub.f32 %v3448, %v3474
  %v3481 = vsub.f32 %v3449, %v3475
  %v3482 = vsub.f32 %v3450, %v3476
  %v3483 = vsub.f32 %v3451, %v3477
  %v3484 = vsub.f32 %v3452, %v3478
  %v3485 = vsub.f32 %v3453, %v3479
  %v3486 = vmul.f32 %v3480, %v3480
  %v3487 = vmul.f32 %v3481, %v3481
  %v3488 = vmul.f32 %v3482, %v3482
  %v3489 = vmul.f32 %v3483, %v3483
  %v3490 = vmul.f32 %v3484, %v3484
  %v3491 = vmul.f32 %v3485, %v3485
  %v3492 = vsel %vm276, %v3486, 0.0
  %3493 = vadd.xlane.f32.xlu0 %v3492
  %v3494 = vpop.xlane.xlu0 %3493
  %v3495 = vsel %vm276, %v3487, 0.0
  %3496 = vadd.xlane.f32.xlu0 %v3495
  %v3497 = vpop.xlane.xlu0 %3496
  %v3498 = vsel %vm276, %v3488, 0.0
  %3499 = vadd.xlane.f32.xlu0 %v3498
  %v3500 = vpop.xlane.xlu0 %3499
  %v3501 = vsel %vm276, %v3489, 0.0
  %3502 = vadd.xlane.f32.xlu0 %v3501
  %v3503 = vpop.xlane.xlu0 %3502
  %v3504 = vsel %vm276, %v3490, 0.0
  %3505 = vadd.xlane.f32.xlu0 %v3504
  %v3506 = vpop.xlane.xlu0 %3505
  %v3507 = vsel %vm276, %v3491, 0.0
  %3508 = vadd.xlane.f32.xlu0 %v3507
  %v3509 = vpop.xlane.xlu0 %3508
  %v3510 = vmul.f32 %v3494, %v295
  %v3511 = vmul.f32 %v3497, %v295
  %v3512 = vmul.f32 %v3500, %v295
  %v3513 = vmul.f32 %v3503, %v295
  %v3514 = vmul.f32 %v3506, %v295
  %v3515 = vmul.f32 %v3509, %v295
  %v3516 = vadd.f32 %v3510, 1e-05
  %v3517 = vadd.f32 %v3511, 1e-05
  %v3518 = vadd.f32 %v3512, 1e-05
  %v3519 = vadd.f32 %v3513, 1e-05
  %v3520 = vadd.f32 %v3514, 1e-05
  %v3521 = vadd.f32 %v3515, 1e-05
  %v3522 = vrsqrt.pop %v3516
  %v3523 = vrsqrt.pop %v3517
  %v3524 = vrsqrt.pop %v3518
  %v3525 = vrsqrt.pop %v3519
  %v3526 = vrsqrt.pop %v3520
  %v3527 = vrsqrt.pop %v3521
  %v3528 = vmul.f32 %v3480, %v3522
  %v3529 = vmul.f32 %v3481, %v3523
  %v3530 = vmul.f32 %v3482, %v3524
  %v3531 = vmul.f32 %v3483, %v3525
  %v3532 = vmul.f32 %v3484, %v3526
  %v3533 = vmul.f32 %v3485, %v3527
  %v3535 = vlaneseq
  %v3536 = vshrl.u32 %v3535, 7
  %v3537 = vsub.s32 0, %v3536
  %v3538 = vrot.slane %v3454, %v3537
  %v3540 = vmul.f32 %v3528, %v3538
  %v3541 = vmul.f32 %v3529, %v3538
  %v3542 = vmul.f32 %v3530, %v3538
  %v3543 = vmul.f32 %v3531, %v3538
  %v3544 = vmul.f32 %v3532, %v3538
  %v3545 = vmul.f32 %v3533, %v3538
  %v3547 = vlaneseq
  %v3548 = vshrl.u32 %v3547, 7
  %v3549 = vsub.s32 0, %v3548
  %v3550 = vrot.slane %v3455, %v3549
  %v3552 = vadd.f32 %v3540, %v3550
  %v3553 = vadd.f32 %v3541, %v3550
  %v3554 = vadd.f32 %v3542, %v3550
  %v3555 = vadd.f32 %v3543, %v3550
  %v3556 = vadd.f32 %v3544, %v3550
  %v3557 = vadd.f32 %v3545, %v3550
  %v3558 = vpack.c.bf16 %v3553, %v3552
  %v3559 = vpack.c.bf16 %v3555, %v3554
  %v3560 = vpack.c.bf16 %v3557, %v3556
  %v3561 = vld [vmem:[%s51] sm:$0xf]
  %v3562 = vld [vmem:[%s51 + $0x4] sm:$0xf]
  %v3563 = vld [vmem:[%s51 + $0x8] sm:$0xf]
  %v3564 = vld [vmem:[%s51 + $0xc] sm:$0xf]
  %v3565 = vld [vmem:[%s53] sm:$0x1]
  %v3567 = vlaneseq
  %v3568 = vshrl.u32 %v3567, 7
  %v3569 = vsub.s32 0, %v3568
  %v3570 = vrot.slane %v3565, %v3569
  %v3576 = vunpack.c.l.b16 %v3561
  %v3577 = vunpack.c.l.b16 %v3562
  %v3578 = vunpack.c.l.b16 %v3563
  %v3579 = vunpack.c.l.b16 %v3564
  %v3580 = vpack.c.b16 %v3577, %v3576
  %v3581 = vpack.c.b16 %v3579, %v3578
  %v3585 = vsel %vm276, %v3558, 0
  %v3588 = vsel %vm276, %v3559, 0
  %v3591 = vsel %vm276, %v3560, 0
  %3593 = vmatprep.subr.bf16.mxu0 0
  %3594 = vmatpush1.bf16.msra.mxu0 0
  %3595 = vmatprep.subr.bf16.mxu0 0
  %3596 = vmatpush1.bf16.msra.mxu0 0
  %3597 = vmatprep.subr.bf16.mxu0 0
  %3598 = vmatpush1.bf16.msra.mxu0 0
  %3599 = vmatprep.subr.bf16.mxu0 0
  %3600 = vmatpush1.bf16.msra.mxu0 0
  %3601 = vmatprep.subr.bf16.mxu0 0
  %3602 = vmatpush1.bf16.msra.mxu0 0
  %3603 = vmatprep.subr.bf16.mxu0 0
  %3604 = vmatpush1.bf16.msra.mxu0 0
  %3605 = vmatprep.subr.bf16.mxu0 0
  %3606 = vmatpush1.bf16.msra.mxu0 %v3581
  %3607 = vmatprep.subr.bf16.mxu0 0
  %3608 = vmatpush1.bf16.msra.mxu0 %v3580
  %3609 = vmatprep.subr.bf16.mxu0 0
  %3610 = vmatpush2.bf16.msra.mxu0 0
  %3611 = vmatprep.subr.bf16.mxu0 0
  %3612 = vmatpush2.bf16.msra.mxu0 0
  %3613 = vmatprep.subr.bf16.mxu0 0
  %3614 = vmatpush2.bf16.msra.mxu0 0
  %3615 = vmatprep.subr.bf16.mxu0 0
  %3616 = vmatpush2.bf16.msra.mxu0 0
  %3617 = vmatprep.subr.bf16.mxu0 0
  %3618 = vmatpush2.bf16.msra.mxu0 0
  %3619 = vmatprep.subr.bf16.mxu0 0
  %3620 = vmatpush2.bf16.msra.mxu0 0
  %3621 = vmatprep.subr.bf16.mxu0 0
  %3622 = vmatpush2.bf16.msra.mxu0 0
  %3623 = vmatprep.subr.bf16.mxu0 0
  %3624 = vmatpush2.bf16.msra.mxu0 0
  %3625 = vmatprep.mubr.bf16.mxu0 0
  %3626 = vmatmul.mubr.bf16.gmra.mxu0 %v3585
  %v3627 = vpop.f32.mrf.mxu0
  %v3628 = vadd.f32 %v3570, %v3627
  %v3629 = vpop.f32.mrf.mxu0
  %v3630 = vpop.f32.mrf.mxu0
  %v3631 = vadd.f32 %v3570, %v3630
  %v3632 = vpop.f32.mrf.mxu0
  %3633 = vmatprep.mubr.bf16.mxu0 0
  %3634 = vmatmul.mubr.bf16.gmra.mxu0 %v3588
  %v3635 = vpop.f32.mrf.mxu0
  %v3636 = vadd.f32 %v3570, %v3635
  %v3637 = vpop.f32.mrf.mxu0
  %v3638 = vpop.f32.mrf.mxu0
  %v3639 = vadd.f32 %v3570, %v3638
  %v3640 = vpop.f32.mrf.mxu0
  %3641 = vmatprep.mubr.bf16.mxu0 0
  %3642 = vmatmul.mubr.bf16.gmra.mxu0 %v3591
  %v3643 = vpop.f32.mrf.mxu0
  %v3644 = vadd.f32 %v3570, %v3643
  %v3645 = vpop.f32.mrf.mxu0
  %v3646 = vpop.f32.mrf.mxu0
  %v3647 = vadd.f32 %v3570, %v3646
  %v3648 = vpop.f32.mrf.mxu0
  %3649 = vdwg.mxu0
  %v3650 = vmul.f32 %v3628, %v3628
  %v3651 = vmul.f32 %v3631, %v3631
  %v3652 = vmul.f32 %v3636, %v3636
  %v3653 = vmul.f32 %v3639, %v3639
  %v3654 = vmul.f32 %v3644, %v3644
  %v3655 = vmul.f32 %v3647, %v3647
  %v3656 = vmul.f32 %v3628, %v3650
  %v3657 = vmul.f32 %v3631, %v3651
  %v3658 = vmul.f32 %v3636, %v3652
  %v3659 = vmul.f32 %v3639, %v3653
  %v3660 = vmul.f32 %v3644, %v3654
  %v3661 = vmul.f32 %v3647, %v3655
  %v3662 = vmul.f32 %v3656, 0.044715
  %v3663 = vmul.f32 %v3657, 0.044715
  %v3664 = vmul.f32 %v3658, 0.044715
  %v3665 = vmul.f32 %v3659, 0.044715
  %v3666 = vmul.f32 %v3660, 0.044715
  %v3667 = vmul.f32 %v3661, 0.044715
  %v3668 = vadd.f32 %v3628, %v3662
  %v3669 = vadd.f32 %v3631, %v3663
  %v3670 = vadd.f32 %v3636, %v3664
  %v3671 = vadd.f32 %v3639, %v3665
  %v3672 = vadd.f32 %v3644, %v3666
  %v3673 = vadd.f32 %v3647, %v3667
  %v3674 = vmul.f32 %v3668, 0.7978846
  %v3675 = vmul.f32 %v3669, 0.7978846
  %v3676 = vmul.f32 %v3670, 0.7978846
  %v3677 = vmul.f32 %v3671, 0.7978846
  %v3678 = vmul.f32 %v3672, 0.7978846
  %v3679 = vmul.f32 %v3673, 0.7978846
  %v3680 = vtanh.pop %v3674
  %v3681 = vtanh.pop %v3675
  %v3682 = vtanh.pop %v3676
  %v3683 = vtanh.pop %v3677
  %v3684 = vtanh.pop %v3678
  %v3685 = vtanh.pop %v3679
  %v3686 = vadd.f32 %v3680, 1.0
  %v3687 = vadd.f32 %v3681, 1.0
  %v3688 = vadd.f32 %v3682, 1.0
  %v3689 = vadd.f32 %v3683, 1.0
  %v3690 = vadd.f32 %v3684, 1.0
  %v3691 = vadd.f32 %v3685, 1.0
  %v3692 = vmul.f32 %v3686, 0.5
  %v3693 = vmul.f32 %v3687, 0.5
  %v3694 = vmul.f32 %v3688, 0.5
  %v3695 = vmul.f32 %v3689, 0.5
  %v3696 = vmul.f32 %v3690, 0.5
  %v3697 = vmul.f32 %v3691, 0.5
  %v3698 = vmul.f32 %v3628, %v3692
  %v3699 = vmul.f32 %v3631, %v3693
  %v3700 = vmul.f32 %v3636, %v3694
  %v3701 = vmul.f32 %v3639, %v3695
  %v3702 = vmul.f32 %v3644, %v3696
  %v3703 = vmul.f32 %v3647, %v3697
  %v3704 = vpack.c.bf16 %v3699, %v3698
  %v3705 = vpack.c.bf16 %v3701, %v3700
  %v3706 = vpack.c.bf16 %v3703, %v3702
  %v3707 = vld [vmem:[%s55] sm:$0xf]
  %v3708 = vld [vmem:[%s55 + $0x4] sm:$0xf]
  %v3709 = vld [vmem:[%s55 + $0x8] sm:$0xf]
  %v3710 = vld [vmem:[%s55 + $0xc] sm:$0xf]
  %v3711 = vld [vmem:[%s55 + $0x10] sm:$0xf]
  %v3712 = vld [vmem:[%s55 + $0x14] sm:$0xf]
  %v3713 = vld [vmem:[%s55 + $0x18] sm:$0xf]
  %v3714 = vld [vmem:[%s55 + $0x1c] sm:$0xf]
  %v3715 = vld [vmem:[%s55 + $0x20] sm:$0xf]
  %v3716 = vld [vmem:[%s55 + $0x24] sm:$0xf]
  %v3717 = vld [vmem:[%s55 + $0x28] sm:$0xf]
  %v3718 = vld [vmem:[%s55 + $0x2c] sm:$0xf]
  %v3719 = vld [vmem:[%s55 + $0x30] sm:$0xf]
  %v3720 = vld [vmem:[%s55 + $0x34] sm:$0xf]
  %v3721 = vld [vmem:[%s55 + $0x38] sm:$0xf]
  %v3722 = vld [vmem:[%s55 + $0x3c] sm:$0xf]
  %v3723 = vld [vmem:[%s57] sm:$0x1]
  %v3725 = vlaneseq
  %v3726 = vshrl.u32 %v3725, 7
  %v3727 = vsub.s32 0, %v3726
  %v3728 = vrot.slane %v3723, %v3727
  %v3746 = vunpack.c.l.b16 %v3707
  %v3747 = vunpack.c.l.b16 %v3708
  %v3748 = vunpack.c.l.b16 %v3709
  %v3749 = vunpack.c.l.b16 %v3710
  %v3750 = vunpack.c.l.b16 %v3711
  %v3751 = vunpack.c.l.b16 %v3712
  %v3752 = vunpack.c.l.b16 %v3713
  %v3753 = vunpack.c.l.b16 %v3714
  %v3754 = vunpack.c.l.b16 %v3715
  %v3755 = vunpack.c.l.b16 %v3716
  %v3756 = vunpack.c.l.b16 %v3717
  %v3757 = vunpack.c.l.b16 %v3718
  %v3758 = vunpack.c.l.b16 %v3719
  %v3759 = vunpack.c.l.b16 %v3720
  %v3760 = vunpack.c.l.b16 %v3721
  %v3761 = vunpack.c.l.b16 %v3722
  %v3762 = vpack.c.b16 %v3747, %v3746
  %v3763 = vpack.c.b16 %v3749, %v3748
  %v3764 = vpack.c.b16 %v3751, %v3750
  %v3765 = vpack.c.b16 %v3753, %v3752
  %v3766 = vpack.c.b16 %v3755, %v3754
  %v3767 = vpack.c.b16 %v3757, %v3756
  %v3768 = vpack.c.b16 %v3759, %v3758
  %v3769 = vpack.c.b16 %v3761, %v3760
  %3778 = vmatprep.subr.bf16.mxu0 0
  %3779 = vmatpush1.bf16.msra.mxu0 %v3769
  %3780 = vmatprep.subr.bf16.mxu0 0
  %3781 = vmatpush1.bf16.msra.mxu0 %v3768
  %3782 = vmatprep.subr.bf16.mxu0 0
  %3783 = vmatpush1.bf16.msra.mxu0 %v3767
  %3784 = vmatprep.subr.bf16.mxu0 0
  %3785 = vmatpush1.bf16.msra.mxu0 %v3766
  %3786 = vmatprep.subr.bf16.mxu0 0
  %3787 = vmatpush1.bf16.msra.mxu0 %v3765
  %3788 = vmatprep.subr.bf16.mxu0 0
  %3789 = vmatpush1.bf16.msra.mxu0 %v3764
  %3790 = vmatprep.subr.bf16.mxu0 0
  %3791 = vmatpush1.bf16.msra.mxu0 %v3763
  %3792 = vmatprep.subr.bf16.mxu0 0
  %3793 = vmatpush1.bf16.msra.mxu0 %v3762
  %3794 = vmatprep.subr.bf16.mxu0 0
  %3795 = vmatpush2.bf16.msra.mxu0 0
  %3796 = vmatprep.subr.bf16.mxu0 0
  %3797 = vmatpush2.bf16.msra.mxu0 0
  %3798 = vmatprep.subr.bf16.mxu0 0
  %3799 = vmatpush2.bf16.msra.mxu0 0
  %3800 = vmatprep.subr.bf16.mxu0 0
  %3801 = vmatpush2.bf16.msra.mxu0 0
  %3802 = vmatprep.subr.bf16.mxu0 0
  %3803 = vmatpush2.bf16.msra.mxu0 0
  %3804 = vmatprep.subr.bf16.mxu0 0
  %3805 = vmatpush2.bf16.msra.mxu0 0
  %3806 = vmatprep.subr.bf16.mxu0 0
  %3807 = vmatpush2.bf16.msra.mxu0 0
  %3808 = vmatprep.subr.bf16.mxu0 0
  %3809 = vmatpush2.bf16.msra.mxu0 0
  %3810 = vmatprep.mubr.bf16.mxu0 0
  %3811 = vmatmul.mubr.bf16.gmra.mxu0 %v3704
  %v3812 = vpop.f32.mrf.mxu0
  %v3813 = vadd.f32 %v3728, %v3812
  %v3814 = vpop.f32.mrf.mxu0
  %v3815 = vpop.f32.mrf.mxu0
  %v3816 = vadd.f32 %v3728, %v3815
  %v3817 = vpop.f32.mrf.mxu0
  %3818 = vmatprep.mubr.bf16.mxu0 0
  %3819 = vmatmul.mubr.bf16.gmra.mxu0 %v3705
  %v3820 = vpop.f32.mrf.mxu0
  %v3821 = vadd.f32 %v3728, %v3820
  %v3822 = vpop.f32.mrf.mxu0
  %v3823 = vpop.f32.mrf.mxu0
  %v3824 = vadd.f32 %v3728, %v3823
  %v3825 = vpop.f32.mrf.mxu0
  %3826 = vmatprep.mubr.bf16.mxu0 0
  %3827 = vmatmul.mubr.bf16.gmra.mxu0 %v3706
  %v3828 = vpop.f32.mrf.mxu0
  %v3829 = vadd.f32 %v3728, %v3828
  %v3830 = vpop.f32.mrf.mxu0
  %v3831 = vpop.f32.mrf.mxu0
  %v3832 = vadd.f32 %v3728, %v3831
  %v3833 = vpop.f32.mrf.mxu0
  %3834 = vdwg.mxu0
  %v3835 = vpack.c.bf16 %v3816, %v3813
  %v3836 = vpack.c.bf16 %v3824, %v3821
  %v3837 = vpack.c.bf16 %v3832, %v3829
  %v3838 = vld [vmem:[%s59] sm:$0xf]
  %v3839 = vld [vmem:[%s59 + $0x4] sm:$0xf]
  %v3840 = vld [vmem:[%s59 + $0x8] sm:$0xf]
  %v3841 = vld [vmem:[%s59 + $0xc] sm:$0xf]
  %v3842 = vld [vmem:[%s61] sm:$0x1]
  %v3844 = vlaneseq
  %v3845 = vshrl.u32 %v3844, 7
  %v3846 = vsub.s32 0, %v3845
  %v3847 = vrot.slane %v3842, %v3846
  %v3853 = vunpack.c.l.b16 %v3838
  %v3854 = vunpack.c.l.b16 %v3839
  %v3855 = vunpack.c.l.b16 %v3840
  %v3856 = vunpack.c.l.b16 %v3841
  %v3857 = vpack.c.b16 %v3854, %v3853
  %v3858 = vpack.c.b16 %v3856, %v3855
  %v3862 = vsel %vm276, %v3835, 0
  %v3865 = vsel %vm276, %v3836, 0
  %v3868 = vsel %vm276, %v3837, 0
  %3870 = vmatprep.subr.bf16.mxu0 0
  %3871 = vmatpush1.bf16.msra.mxu0 0
  %3872 = vmatprep.subr.bf16.mxu0 0
  %3873 = vmatpush1.bf16.msra.mxu0 0
  %3874 = vmatprep.subr.bf16.mxu0 0
  %3875 = vmatpush1.bf16.msra.mxu0 0
  %3876 = vmatprep.subr.bf16.mxu0 0
  %3877 = vmatpush1.bf16.msra.mxu0 0
  %3878 = vmatprep.subr.bf16.mxu0 0
  %3879 = vmatpush1.bf16.msra.mxu0 0
  %3880 = vmatprep.subr.bf16.mxu0 0
  %3881 = vmatpush1.bf16.msra.mxu0 0
  %3882 = vmatprep.subr.bf16.mxu0 0
  %3883 = vmatpush1.bf16.msra.mxu0 %v3858
  %3884 = vmatprep.subr.bf16.mxu0 0
  %3885 = vmatpush1.bf16.msra.mxu0 %v3857
  %3886 = vmatprep.subr.bf16.mxu0 0
  %3887 = vmatpush2.bf16.msra.mxu0 0
  %3888 = vmatprep.subr.bf16.mxu0 0
  %3889 = vmatpush2.bf16.msra.mxu0 0
  %3890 = vmatprep.subr.bf16.mxu0 0
  %3891 = vmatpush2.bf16.msra.mxu0 0
  %3892 = vmatprep.subr.bf16.mxu0 0
  %3893 = vmatpush2.bf16.msra.mxu0 0
  %3894 = vmatprep.subr.bf16.mxu0 0
  %3895 = vmatpush2.bf16.msra.mxu0 0
  %3896 = vmatprep.subr.bf16.mxu0 0
  %3897 = vmatpush2.bf16.msra.mxu0 0
  %3898 = vmatprep.subr.bf16.mxu0 0
  %3899 = vmatpush2.bf16.msra.mxu0 0
  %3900 = vmatprep.subr.bf16.mxu0 0
  %3901 = vmatpush2.bf16.msra.mxu0 0
  %3902 = vmatprep.mubr.bf16.mxu0 0
  %3903 = vmatmul.mubr.bf16.gmra.mxu0 %v3862
  %v3904 = vpop.f32.mrf.mxu0
  %v3905 = vadd.f32 %v3847, %v3904
  %v3906 = vpop.f32.mrf.mxu0
  %v3907 = vpop.f32.mrf.mxu0
  %v3908 = vadd.f32 %v3847, %v3907
  %v3909 = vpop.f32.mrf.mxu0
  %3910 = vmatprep.mubr.bf16.mxu0 0
  %3911 = vmatmul.mubr.bf16.gmra.mxu0 %v3865
  %v3912 = vpop.f32.mrf.mxu0
  %v3913 = vadd.f32 %v3847, %v3912
  %v3914 = vpop.f32.mrf.mxu0
  %v3915 = vpop.f32.mrf.mxu0
  %v3916 = vadd.f32 %v3847, %v3915
  %v3917 = vpop.f32.mrf.mxu0
  %3918 = vmatprep.mubr.bf16.mxu0 0
  %3919 = vmatmul.mubr.bf16.gmra.mxu0 %v3868
  %v3920 = vpop.f32.mrf.mxu0
  %v3921 = vadd.f32 %v3847, %v3920
  %v3922 = vpop.f32.mrf.mxu0
  %v3923 = vpop.f32.mrf.mxu0
  %v3924 = vadd.f32 %v3847, %v3923
  %v3925 = vpop.f32.mrf.mxu0
  %3926 = vdwg.mxu0
  %3927 = vst [vmem:[%s63] sm:$0xff] %v3905
  %3928 = vst [vmem:[%s63 + $0x8] sm:$0xff] %v3908
  %3929 = vst [vmem:[%s63 + $0x10] sm:$0xff] %v3913
  %3930 = vst [vmem:[%s63 + $0x18] sm:$0xff] %v3916
  %3931 = vst [vmem:[%s63 + $0x20] sm:$0xff] %v3921
  %3932 = vst [vmem:[%s63 + $0x28] sm:$0xff] %v3924
  // Predicated region
  $region126: #{dpx_dense_forward.1} parent=0 // pred_check
    _
  $region127: #{dpx_dense_forward.1} parent=0 // pred_check_branch
    %3934 = sbr.rel (0) target = $region129
  $region128: #{dpx_dense_forward.1} parent=0 // pred_region
    _
  $region129: #{dpx_dense_forward.1} parent=0 // pred_fallthru
    _
  // Predicated region
  $region130: #{dpx_dense_forward.1} parent=0 // pred_check
    _
  $region131: #{dpx_dense_forward.1} parent=0 // pred_check_branch
    %3936 = sbr.rel (0) target = $region133
  $region132: #{dpx_dense_forward.1} parent=0 // pred_region
    _
  $region133: #{dpx_dense_forward.1} parent=0 // pred_fallthru
    _

</llo_original>
